<compile_context>
chip_gen: v7x
topology: tpu7x:2x2x1
jax: 0.10.0
libtpu: 0.0.40
codegen_flags: <defaults>
</compile_context>

<pallas_src>
import functools

import jax
import jax.numpy as jnp
from jax.experimental import pallas as pl
from jax.experimental.pallas import tpu as pltpu


# ----------------------------------------------------------------------------
# Helpers
# ----------------------------------------------------------------------------
def _pick_tile(dim, candidates):
    """Largest candidate that evenly divides `dim`, else the full dim."""
    for c in candidates:
        if c <= dim and dim % c == 0:
            return c
    return dim


_ROW_TILES = (512, 256, 128, 64, 32, 16, 8)   # sublane axis (multiples of 8)
_LANE_TILES = (1024, 512, 256, 128)           # lane axis (multiples of 128)


@functools.lru_cache(maxsize=None)
def _vmem_limit_bytes():
    """Generation-aware VMEM limit (scoped defaults are far below physical)."""
    try:
        info = pltpu.get_tpu_info()
        cap = getattr(info, "vmem_capacity_bytes", None)
        if cap:
            return min(int(cap) * 7 // 8, 100 * 1024 * 1024)
    except Exception:
        pass
    return 56 * 1024 * 1024   # safe on v5e / v6e / v7x


def _cparams(dim_sem):
    return pltpu.CompilerParams(dimension_semantics=dim_sem,
                                vmem_limit_bytes=_vmem_limit_bytes())


# ----------------------------------------------------------------------------
# Kernel 1: tiled GEMM (+ bias, optional ReLU), bf16 MXU operands, f32 acc
# ----------------------------------------------------------------------------
def _linear_kernel(x_ref, w_ref, b_ref, o_ref, acc_ref, *, activation):
    k = pl.program_id(2)

    @pl.when(k == 0)
    def _():
        acc_ref[...] = jnp.zeros_like(acc_ref)

    acc_ref[...] += jnp.dot(x_ref[...].astype(jnp.bfloat16), w_ref[...],
                            preferred_element_type=jnp.float32)

    @pl.when(k == pl.num_programs(2) - 1)
    def _():
        y = acc_ref[...] + b_ref[...]
        if activation == "relu":
            y = jnp.maximum(y, 0.0)
        o_ref[...] = y.astype(o_ref.dtype)


def linear(x, w, b, activation=None, out_dtype=None):
    """y = x @ w + b (optionally ReLU). x:(M,K) w:(K,N) bf16, b:(N,) f32."""
    M, K = x.shape
    N = w.shape[1]
    out_dtype = out_dtype or x.dtype
    tm = _pick_tile(M, _ROW_TILES)
    tn = _pick_tile(N, _LANE_TILES)
    tk = _pick_tile(K, _LANE_TILES)
    grid = (M // tm, N // tn, K // tk)
    return pl.pallas_call(
        functools.partial(_linear_kernel, activation=activation),
        out_shape=jax.ShapeDtypeStruct((M, N), out_dtype),
        grid=grid,
        in_specs=[
            pl.BlockSpec((tm, tk), lambda i, j, k: (i, k)),
            pl.BlockSpec((tk, tn), lambda i, j, k: (k, j)),
            pl.BlockSpec((1, tn), lambda i, j, k: (0, j)),
        ],
        out_specs=pl.BlockSpec((tm, tn), lambda i, j, k: (i, j)),
        scratch_shapes=[pltpu.VMEM((tm, tn), jnp.float32)],
        compiler_params=_cparams(("parallel", "parallel", "arbitrary")),
    )(x, w, b.reshape(1, N))


# ----------------------------------------------------------------------------
# Kernel 2: grouped GEMM -> stacked (G, M, N) output (fused QKV / KV proj)
# ----------------------------------------------------------------------------
def _group_linear_kernel(x_ref, w_ref, b_ref, o_ref, acc_ref):
    k = pl.program_id(2)

    @pl.when(k == 0)
    def _():
        acc_ref[...] = jnp.zeros_like(acc_ref)

    acc_ref[...] += jnp.dot(x_ref[...].astype(jnp.bfloat16), w_ref[0],
                            preferred_element_type=jnp.float32)

    @pl.when(k == pl.num_programs(2) - 1)
    def _():
        o_ref[0] = (acc_ref[...] + b_ref[0]).astype(o_ref.dtype)


def group_linear(x, w3, b3):
    """y[g] = x @ w3[g] + b3[g]. x:(M,K), w3:(G,K,N) bf16, b3:(G,1,N) f32
    -> (G, M, N) bf16. Output stays stacked so attention can pick q/k/v via
    BlockSpec leading indices (no HBM slice copies)."""
    M, K = x.shape
    G, _, N = w3.shape
    tm = _pick_tile(M, _ROW_TILES)
    tk = _pick_tile(K, _LANE_TILES)
    grid = (M // tm, G, K // tk)
    return pl.pallas_call(
        _group_linear_kernel,
        out_shape=jax.ShapeDtypeStruct((G, M, N), jnp.bfloat16),
        grid=grid,
        in_specs=[
            pl.BlockSpec((tm, tk), lambda i, g, k: (i, k)),
            pl.BlockSpec((1, tk, N), lambda i, g, k: (g, k, 0)),
            pl.BlockSpec((1, 1, N), lambda i, g, k: (g, 0, 0)),
        ],
        out_specs=pl.BlockSpec((1, tm, N), lambda i, g, k: (g, i, 0)),
        scratch_shapes=[pltpu.VMEM((tm, N), jnp.float32)],
        compiler_params=_cparams(("parallel", "parallel", "arbitrary")),
    )(x, w3, b3)


# ----------------------------------------------------------------------------
# Kernel 3: tiled GEMM + bias + residual add + LayerNorm fused epilogue
# ----------------------------------------------------------------------------
def _linear_add_ln_kernel(x_ref, w_ref, b_ref, res_ref, g_ref, be_ref,
                          o_ref, acc_ref, *, eps):
    k = pl.program_id(1)

    @pl.when(k == 0)
    def _():
        acc_ref[...] = jnp.zeros_like(acc_ref)

    acc_ref[...] += jnp.dot(x_ref[...].astype(jnp.bfloat16), w_ref[...],
                            preferred_element_type=jnp.float32)

    @pl.when(k == pl.num_programs(1) - 1)
    def _():
        # z = residual + (x @ w + b); out = LayerNorm(z) * gamma + beta
        z = acc_ref[...] + b_ref[...] + res_ref[...].astype(jnp.float32)
        mu = jnp.mean(z, axis=-1, keepdims=True)
        var = jnp.mean(z * z, axis=-1, keepdims=True) - mu * mu   # single pass
        zn = (z - mu) * jax.lax.rsqrt(var + eps)
        o_ref[...] = (zn * g_ref[...] + be_ref[...]).astype(o_ref.dtype)


def linear_add_ln(x, w, b, residual, gamma, beta, eps=1e-5):
    """LayerNorm(residual + x @ w + b), f32 output. D kept whole (row-wise LN),
    rows and K tiled."""
    M, K = x.shape
    D = w.shape[1]
    tm = _pick_tile(M, _ROW_TILES)
    tk = _pick_tile(K, _LANE_TILES)
    grid = (M // tm, K // tk)
    return pl.pallas_call(
        functools.partial(_linear_add_ln_kernel, eps=eps),
        out_shape=jax.ShapeDtypeStruct((M, D), jnp.float32),
        grid=grid,
        in_specs=[
            pl.BlockSpec((tm, tk), lambda i, k: (i, k)),
            pl.BlockSpec((tk, D), lambda i, k: (k, 0)),
            pl.BlockSpec((1, D), lambda i, k: (0, 0)),
            pl.BlockSpec((tm, D), lambda i, k: (i, 0)),
            pl.BlockSpec((1, D), lambda i, k: (0, 0)),
            pl.BlockSpec((1, D), lambda i, k: (0, 0)),
        ],
        out_specs=pl.BlockSpec((tm, D), lambda i, k: (i, 0)),
        scratch_shapes=[pltpu.VMEM((tm, D), jnp.float32)],
        compiler_params=_cparams(("parallel", "arbitrary")),
    )(x, w, b.reshape(1, D), residual, gamma.reshape(1, D), beta.reshape(1, D))


# ----------------------------------------------------------------------------
# Kernel 4: attention, one (batch, q-tile) per grid step, heads on lane axis
# ----------------------------------------------------------------------------
def _attn_kernel(q_ref, k_ref, v_ref, o_ref, acc_ref, *, n_heads, inv_scale):
    # q: (1,1,tq,D), k/v: (1,1,Sk,D); D = n_heads * Dh, heads on the lane axis.
    D = q_ref.shape[-1]
    Dh = D // n_heads
    q = q_ref[0, 0]
    k = k_ref[0, 0]
    v = v_ref[0, 0]
    for h in range(n_heads):              # short static unroll over heads
        lo = h * Dh
        qh = q[:, lo:lo + Dh] * inv_scale           # pre-scale q (tq*Dh mults)
        kh = k[:, lo:lo + Dh]
        vh = v[:, lo:lo + Dh]
        # contract on Dh of both operands (no explicit K transpose)
        s = jax.lax.dot_general(qh, kh, (((1,), (1,)), ((), ())),
                                preferred_element_type=jnp.float32)
        s = s - jnp.max(s, axis=-1, keepdims=True)
        p = jnp.exp(s)
        p = p * pl.reciprocal(jnp.sum(p, axis=-1, keepdims=True), approx=True)
        # per-head write into VMEM scratch -> bounded live range per head
        acc_ref[:, lo:lo + Dh] = jnp.dot(p.astype(vh.dtype), vh,
                                         preferred_element_type=jnp.float32)
    # single lane-dense (tq, D) store
    o_ref[0] = acc_ref[...].astype(o_ref.dtype)


def attention(q_arr, q_sel, kv_arr, k_sel, v_sel, n_heads):
    """q_arr:(Gq,B,Sq,D) kv_arr:(Gk,B,Sk,D) -> (B,Sq,D) bf16; q/k/v are picked
    out of the stacked projection slabs by the BlockSpec leading index."""
    _, B, Sq, D = q_arr.shape
    Sk = kv_arr.shape[2]
    Dh = D // n_heads
    inv_scale = 1.0 / (float(Dh) ** 0.5)
    tq = _pick_tile(Sq, (512, 256, 128))
    grid = (B, Sq // tq)
    # TODO(synk): flash/online-softmax Sk tiling for long Sk (K/V full-resident
    # here); keep Sq//tq >= 2 on v7x so both TensorCores get work at B=1.
    return pl.pallas_call(
        functools.partial(_attn_kernel, n_heads=n_heads, inv_scale=inv_scale),
        out_shape=jax.ShapeDtypeStruct((B, Sq, D), jnp.bfloat16),
        grid=grid,
        in_specs=[
            pl.BlockSpec((1, 1, tq, D), lambda b, i: (q_sel, b, i, 0)),
            pl.BlockSpec((1, 1, Sk, D), lambda b, i: (k_sel, b, 0, 0)),
            pl.BlockSpec((1, 1, Sk, D), lambda b, i: (v_sel, b, 0, 0)),
        ],
        out_specs=pl.BlockSpec((1, tq, D), lambda b, i: (b, i, 0)),
        scratch_shapes=[pltpu.VMEM((tq, D), jnp.float32)],
        compiler_params=_cparams(("parallel", "parallel")),
    )(q_arr, kv_arr, kv_arr)


# ----------------------------------------------------------------------------
# Module-level composition
# ----------------------------------------------------------------------------
def decoder_layer(fparams, trg, src, n_heads):
    """trg:(B,St,D) src:(B,Ss,D). Dropout is identity (eval)."""
    B, St, D = trg.shape
    Ss = src.shape[1]
    g, be = fparams["ln_g"], fparams["ln_b"]
    x = trg.reshape(B * St, D)        # f32 residual/LN trunk
    srcf = src.reshape(B * Ss, D)

    # ---- self-attention sublayer ----
    sa = fparams["sa"]
    qkv = group_linear(x, sa["w_qkv"], sa["b_qkv"])        # (3, B*St, D) bf16
    qkv = qkv.reshape(3, B, St, D)
    o = attention(qkv, 0, qkv, 1, 2, n_heads)              # (B, St, D) bf16
    x = linear_add_ln(o.reshape(B * St, D), sa["w_o"], sa["b_o"], x, g, be)

    # ---- encoder (cross) attention sublayer ----
    ea = fparams["ea"]
    q = linear(x, ea["w_q"], ea["b_q"], out_dtype=jnp.bfloat16)
    kv = group_linear(srcf, ea["w_kv"], ea["b_kv"])        # (2, B*Ss, D) bf16
    o = attention(q.reshape(1, B, St, D), 0,
                  kv.reshape(2, B, Ss, D), 0, 1, n_heads)
    x = linear_add_ln(o.reshape(B * St, D), ea["w_o"], ea["b_o"], x, g, be)

    # ---- position-wise feed-forward ----
    pf = fparams["pf"]
    h = linear(x, pf["w1"], pf["b1"], activation="relu",
               out_dtype=jnp.bfloat16)                     # (M, pf_dim) bf16
    x = linear_add_ln(h, pf["w2"], pf["b2"], x, g, be)

    return x.reshape(B, St, D)


def fuse_params(params):
    """Stack QKV / KV weights and pre-cast matmul weights to bf16 (once,
    off the hot path). Biases / LN params stay f32 for the f32 epilogues."""
    bf = jnp.bfloat16

    def self_attn(p):
        return dict(
            w_qkv=jnp.stack([p["w_q"], p["w_k"], p["w_v"]], 0).astype(bf),
            b_qkv=jnp.stack([p["b_q"].reshape(1, -1),
                             p["b_k"].reshape(1, -1),
                             p["b_v"].reshape(1, -1)], 0),
            w_o=p["w_o"].astype(bf), b_o=p["b_o"],
        )

    def cross_attn(p):
        return dict(
            w_q=p["w_q"].astype(bf), b_q=p["b_q"],
            w_kv=jnp.stack([p["w_k"], p["w_v"]], 0).astype(bf),
            b_kv=jnp.stack([p["b_k"].reshape(1, -1),
                            p["b_v"].reshape(1, -1)], 0),
            w_o=p["w_o"].astype(bf), b_o=p["b_o"],
        )

    return dict(
        ln_g=params["ln_g"], ln_b=params["ln_b"],
        sa=self_attn(params["sa"]), ea=cross_attn(params["ea"]),
        pf=dict(w1=params["pf"]["w1"].astype(bf), b1=params["pf"]["b1"],
                w2=params["pf"]["w2"].astype(bf), b2=params["pf"]["b2"]),
    )


# ----------------------------------------------------------------------------
# Pure-JAX f32 reference (correctness check)
# ----------------------------------------------------------------------------
def _ref_mha(p, q_in, k_in, v_in, n_heads):
    B, Sq, D = q_in.shape
    Sk = k_in.shape[1]
    Dh = D // n_heads
    q = q_in @ p["w_q"] + p["b_q"]
    k = k_in @ p["w_k"] + p["b_k"]
    v = v_in @ p["w_v"] + p["b_v"]
    q = q.reshape(B, Sq, n_heads, Dh).transpose(0, 2, 1, 3)
    k = k.reshape(B, Sk, n_heads, Dh).transpose(0, 2, 1, 3)
    v = v.reshape(B, Sk, n_heads, Dh).transpose(0, 2, 1, 3)
    s = jnp.einsum("bhqd,bhkd->bhqk", q, k) / (float(Dh) ** 0.5)
    p_attn = jax.nn.softmax(s, axis=-1)
    o = jnp.einsum("bhqk,bhkd->bhqd", p_attn, v)
    o = o.transpose(0, 2, 1, 3).reshape(B, Sq, D)
    return o @ p["w_o"] + p["b_o"]


def _ref_ln(x, g, b, eps=1e-5):
    mu = jnp.mean(x, axis=-1, keepdims=True)
    var = jnp.mean((x - mu) ** 2, axis=-1, keepdims=True)
    return (x - mu) * jax.lax.rsqrt(var + eps) * g + b


def _ref_decoder_layer(params, trg, src, n_heads):
    g, b = params["ln_g"], params["ln_b"]
    trg = _ref_ln(trg + _ref_mha(params["sa"], trg, trg, trg, n_heads), g, b)
    trg = _ref_ln(trg + _ref_mha(params["ea"], trg, src, src, n_heads), g, b)
    p = params["pf"]
    ff = jnp.maximum(trg @ p["w1"] + p["b1"], 0.0) @ p["w2"] + p["b2"]
    trg = _ref_ln(trg + ff, g, b)
    return trg


# ----------------------------------------------------------------------------
# Deterministic parameter init
# ----------------------------------------------------------------------------
def init_params(key, hid_dim, pf_dim):
    ks = jax.random.split(key, 16)

    def lin(kw, kb, din, dout):
        w = 0.05 * jax.random.normal(kw, (din, dout), jnp.float32)
        b = 0.01 * jax.random.normal(kb, (dout,), jnp.float32)
        return w, b

    def attn_params(k0):
        kk = jax.random.split(k0, 8)
        wq, bq = lin(kk[0], kk[1], hid_dim, hid_dim)
        wk, bk = lin(kk[2], kk[3], hid_dim, hid_dim)
        wv, bv = lin(kk[4], kk[5], hid_dim, hid_dim)
        wo, bo = lin(kk[6], kk[7], hid_dim, hid_dim)
        return dict(w_q=wq, b_q=bq, w_k=wk, b_k=bk,
                    w_v=wv, b_v=bv, w_o=wo, b_o=bo)

    w1, b1 = lin(ks[0], ks[1], hid_dim, pf_dim)
    w2, b2 = lin(ks[2], ks[3], pf_dim, hid_dim)
    return {
        "ln_g": jnp.ones((hid_dim,), jnp.float32),
        "ln_b": jnp.zeros((hid_dim,), jnp.float32),
        "sa": attn_params(ks[4]),
        "ea": attn_params(ks[5]),
        "pf": dict(w1=w1, b1=b1, w2=w2, b2=b2),
    }


# ----------------------------------------------------------------------------
if __name__ == "__main__":
    B, trg_len, src_len = 2, 8, 8
    hid_dim, n_heads, pf_dim = 32, 4, 64

    key = jax.random.PRNGKey(0)
    k_trg, k_src, k_params = jax.random.split(key, 3)

    trg = jax.random.normal(k_trg, (B, trg_len, hid_dim), jnp.float32)
    src = jax.random.normal(k_src, (B, src_len, hid_dim), jnp.float32)
    params = init_params(k_params, hid_dim, pf_dim)
    fparams = fuse_params(params)

    decoder_fn = jax.jit(functools.partial(decoder_layer, n_heads=n_heads))
    out = jax.block_until_ready(decoder_fn(fparams, trg, src))

    ref = jax.block_until_ready(_ref_decoder_layer(params, trg, src, n_heads))
    assert out.shape == (B, trg_len, hid_dim)
    # tolerance accounts for bf16 MXU operands / bf16 intermediates and the
    # approx-EUP reciprocal in the softmax denominator (accumulation is f32).
    assert jnp.allclose(out, ref, atol=2e-2, rtol=2e-2), \
        f"max abs err {jnp.max(jnp.abs(out - ref))}"

    print("KERNEL_OK")
</pallas_src>

<mosaic_0001>
module attributes {stable_mosaic.version = 11 : i64} {
  func.func @_attn_kernel(%arg0: i32, %arg1: i32, %arg2: memref<1x1x8x32xbf16, #tpu.memory_space<vmem>>, %arg3: memref<1x1x8x32xbf16, #tpu.memory_space<vmem>>, %arg4: memref<1x1x8x32xbf16, #tpu.memory_space<vmem>>, %arg5: memref<1x8x32xbf16, #tpu.memory_space<vmem>>, %arg6: memref<8x32xf32, #tpu.memory_space<vmem>>) attributes {dimension_semantics = [#tpu.dimension_semantics<parallel>, #tpu.dimension_semantics<parallel>], iteration_bounds = array<i64: 2, 1>, scalar_prefetch = 0 : i64, scratch_operands = 1 : i64, tpu.core_type = #tpu.core_type<tc>, window_params = [{transform_indices = @transform_0, window_bounds = array<i64: 1, 1, 8, 32>}, {transform_indices = @transform_1, window_bounds = array<i64: 1, 1, 8, 32>}, {transform_indices = @transform_2, window_bounds = array<i64: 1, 1, 8, 32>}, {transform_indices = @transform_3, window_bounds = array<i64: 1, 8, 32>}]} {
    %c0 = arith.constant 0 : index
    %c0_0 = arith.constant 0 : index
    %c0_1 = arith.constant 0 : index
    %c0_2 = arith.constant 0 : index
    %0 = vector.load %arg2[%c0, %c0_0, %c0_1, %c0_2] : memref<1x1x8x32xbf16, #tpu.memory_space<vmem>>, vector<1x1x8x32xbf16>
    %1 = vector.shape_cast %0 : vector<1x1x8x32xbf16> to vector<8x32xbf16>
    %c0_3 = arith.constant 0 : index
    %c0_4 = arith.constant 0 : index
    %c0_5 = arith.constant 0 : index
    %c0_6 = arith.constant 0 : index
    %2 = vector.load %arg3[%c0_3, %c0_4, %c0_5, %c0_6] : memref<1x1x8x32xbf16, #tpu.memory_space<vmem>>, vector<1x1x8x32xbf16>
    %3 = vector.shape_cast %2 : vector<1x1x8x32xbf16> to vector<8x32xbf16>
    %c0_7 = arith.constant 0 : index
    %c0_8 = arith.constant 0 : index
    %c0_9 = arith.constant 0 : index
    %c0_10 = arith.constant 0 : index
    %4 = vector.load %arg4[%c0_7, %c0_8, %c0_9, %c0_10] : memref<1x1x8x32xbf16, #tpu.memory_space<vmem>>, vector<1x1x8x32xbf16>
    %5 = vector.shape_cast %4 : vector<1x1x8x32xbf16> to vector<8x32xbf16>
    %6 = vector.extract_strided_slice %1 {offsets = [0, 0], sizes = [8, 8], strides = [1, 1]} : vector<8x32xbf16> to vector<8x8xbf16>
    %cst = arith.constant 3.535160e-01 : bf16
    %7 = vector.broadcast %cst : bf16 to vector<8x8xbf16>
    %8 = arith.mulf %6, %7 : vector<8x8xbf16>
    %9 = vector.extract_strided_slice %3 {offsets = [0, 0], sizes = [8, 8], strides = [1, 1]} : vector<8x32xbf16> to vector<8x8xbf16>
    %10 = vector.extract_strided_slice %5 {offsets = [0, 0], sizes = [8, 8], strides = [1, 1]} : vector<8x32xbf16> to vector<8x8xbf16>
    %cst_11 = arith.constant dense<0.000000e+00> : vector<8x8xf32>
    %11 = tpu.matmul %8, %9, %cst_11 {dimension_numbers = #tpu.dot_dimension_numbers<[1], [1], [0], [0], [0, 0, 1, 0], [], []>} : vector<8x8xbf16>, vector<8x8xbf16>, vector<8x8xf32> -> vector<8x8xf32>
    %cst_12 = arith.constant dense<0xFF800000> : vector<8xf32>
    %12 = vector.multi_reduction <maximumf>, %11, %cst_12 [1] : vector<8x8xf32> to vector<8xf32>
    %13 = vector.shape_cast %12 : vector<8xf32> to vector<8x1xf32>
    %14 = vector.broadcast %13 : vector<8x1xf32> to vector<8x8xf32>
    %15 = arith.subf %11, %14 : vector<8x8xf32>
    %16 = math.exp %15 : vector<8x8xf32>
    %cst_13 = arith.constant dense<0.000000e+00> : vector<8xf32>
    %17 = vector.multi_reduction <add>, %16, %cst_13 [1] : vector<8x8xf32> to vector<8xf32>
    %18 = vector.shape_cast %17 : vector<8xf32> to vector<8x1xf32>
    %19 = tpu.reciprocal %18 {approx = true} : vector<8x1xf32> -> vector<8x1xf32>
    %20 = vector.broadcast %19 : vector<8x1xf32> to vector<8x8xf32>
    %21 = arith.mulf %16, %20 : vector<8x8xf32>
    %22 = arith.truncf %21 : vector<8x8xf32> to vector<8x8xbf16>
    %cst_14 = arith.constant dense<0.000000e+00> : vector<8x8xf32>
    %23 = tpu.matmul %22, %10, %cst_14 {dimension_numbers = #tpu.dot_dimension_numbers<[1], [0], [0], [1], [0, 0, 1, 1], [], []>} : vector<8x8xbf16>, vector<8x8xbf16>, vector<8x8xf32> -> vector<8x8xf32>
    %c0_15 = arith.constant 0 : index
    %c0_16 = arith.constant 0 : index
    %24 = vector.load %arg6[%c0_15, %c0_16] : memref<8x32xf32, #tpu.memory_space<vmem>>, vector<8x8xf32>
    tpu.vector_store %arg6[%c0_15, %c0_16], %23 {strides = array<i32>} : memref<8x32xf32, #tpu.memory_space<vmem>>, vector<8x8xf32>,
    %25 = vector.extract_strided_slice %1 {offsets = [0, 8], sizes = [8, 8], strides = [1, 1]} : vector<8x32xbf16> to vector<8x8xbf16>
    %cst_17 = arith.constant 3.535160e-01 : bf16
    %26 = vector.broadcast %cst_17 : bf16 to vector<8x8xbf16>
    %27 = arith.mulf %25, %26 : vector<8x8xbf16>
    %28 = vector.extract_strided_slice %3 {offsets = [0, 8], sizes = [8, 8], strides = [1, 1]} : vector<8x32xbf16> to vector<8x8xbf16>
    %29 = vector.extract_strided_slice %5 {offsets = [0, 8], sizes = [8, 8], strides = [1, 1]} : vector<8x32xbf16> to vector<8x8xbf16>
    %cst_18 = arith.constant dense<0.000000e+00> : vector<8x8xf32>
    %30 = tpu.matmul %27, %28, %cst_18 {dimension_numbers = #tpu.dot_dimension_numbers<[1], [1], [0], [0], [0, 0, 1, 0], [], []>} : vector<8x8xbf16>, vector<8x8xbf16>, vector<8x8xf32> -> vector<8x8xf32>
    %cst_19 = arith.constant dense<0xFF800000> : vector<8xf32>
    %31 = vector.multi_reduction <maximumf>, %30, %cst_19 [1] : vector<8x8xf32> to vector<8xf32>
    %32 = vector.shape_cast %31 : vector<8xf32> to vector<8x1xf32>
    %33 = vector.broadcast %32 : vector<8x1xf32> to vector<8x8xf32>
    %34 = arith.subf %30, %33 : vector<8x8xf32>
    %35 = math.exp %34 : vector<8x8xf32>
    %cst_20 = arith.constant dense<0.000000e+00> : vector<8xf32>
    %36 = vector.multi_reduction <add>, %35, %cst_20 [1] : vector<8x8xf32> to vector<8xf32>
    %37 = vector.shape_cast %36 : vector<8xf32> to vector<8x1xf32>
    %38 = tpu.reciprocal %37 {approx = true} : vector<8x1xf32> -> vector<8x1xf32>
    %39 = vector.broadcast %38 : vector<8x1xf32> to vector<8x8xf32>
    %40 = arith.mulf %35, %39 : vector<8x8xf32>
    %41 = arith.truncf %40 : vector<8x8xf32> to vector<8x8xbf16>
    %cst_21 = arith.constant dense<0.000000e+00> : vector<8x8xf32>
    %42 = tpu.matmul %41, %29, %cst_21 {dimension_numbers = #tpu.dot_dimension_numbers<[1], [0], [0], [1], [0, 0, 1, 1], [], []>} : vector<8x8xbf16>, vector<8x8xbf16>, vector<8x8xf32> -> vector<8x8xf32>
    %c0_22 = arith.constant 0 : index
    %c8 = arith.constant 8 : index
    %43 = vector.load %arg6[%c0_22, %c8] : memref<8x32xf32, #tpu.memory_space<vmem>>, vector<8x8xf32>
    tpu.vector_store %arg6[%c0_22, %c8], %42 {strides = array<i32>} : memref<8x32xf32, #tpu.memory_space<vmem>>, vector<8x8xf32>,
    %44 = vector.extract_strided_slice %1 {offsets = [0, 16], sizes = [8, 8], strides = [1, 1]} : vector<8x32xbf16> to vector<8x8xbf16>
    %cst_23 = arith.constant 3.535160e-01 : bf16
    %45 = vector.broadcast %cst_23 : bf16 to vector<8x8xbf16>
    %46 = arith.mulf %44, %45 : vector<8x8xbf16>
    %47 = vector.extract_strided_slice %3 {offsets = [0, 16], sizes = [8, 8], strides = [1, 1]} : vector<8x32xbf16> to vector<8x8xbf16>
    %48 = vector.extract_strided_slice %5 {offsets = [0, 16], sizes = [8, 8], strides = [1, 1]} : vector<8x32xbf16> to vector<8x8xbf16>
    %cst_24 = arith.constant dense<0.000000e+00> : vector<8x8xf32>
    %49 = tpu.matmul %46, %47, %cst_24 {dimension_numbers = #tpu.dot_dimension_numbers<[1], [1], [0], [0], [0, 0, 1, 0], [], []>} : vector<8x8xbf16>, vector<8x8xbf16>, vector<8x8xf32> -> vector<8x8xf32>
    %cst_25 = arith.constant dense<0xFF800000> : vector<8xf32>
    %50 = vector.multi_reduction <maximumf>, %49, %cst_25 [1] : vector<8x8xf32> to vector<8xf32>
    %51 = vector.shape_cast %50 : vector<8xf32> to vector<8x1xf32>
    %52 = vector.broadcast %51 : vector<8x1xf32> to vector<8x8xf32>
    %53 = arith.subf %49, %52 : vector<8x8xf32>
    %54 = math.exp %53 : vector<8x8xf32>
    %cst_26 = arith.constant dense<0.000000e+00> : vector<8xf32>
    %55 = vector.multi_reduction <add>, %54, %cst_26 [1] : vector<8x8xf32> to vector<8xf32>
    %56 = vector.shape_cast %55 : vector<8xf32> to vector<8x1xf32>
    %57 = tpu.reciprocal %56 {approx = true} : vector<8x1xf32> -> vector<8x1xf32>
    %58 = vector.broadcast %57 : vector<8x1xf32> to vector<8x8xf32>
    %59 = arith.mulf %54, %58 : vector<8x8xf32>
    %60 = arith.truncf %59 : vector<8x8xf32> to vector<8x8xbf16>
    %cst_27 = arith.constant dense<0.000000e+00> : vector<8x8xf32>
    %61 = tpu.matmul %60, %48, %cst_27 {dimension_numbers = #tpu.dot_dimension_numbers<[1], [0], [0], [1], [0, 0, 1, 1], [], []>} : vector<8x8xbf16>, vector<8x8xbf16>, vector<8x8xf32> -> vector<8x8xf32>
    %c0_28 = arith.constant 0 : index
    %c16 = arith.constant 16 : index
    %62 = vector.load %arg6[%c0_28, %c16] : memref<8x32xf32, #tpu.memory_space<vmem>>, vector<8x8xf32>
    tpu.vector_store %arg6[%c0_28, %c16], %61 {strides = array<i32>} : memref<8x32xf32, #tpu.memory_space<vmem>>, vector<8x8xf32>,
    %63 = vector.extract_strided_slice %1 {offsets = [0, 24], sizes = [8, 8], strides = [1, 1]} : vector<8x32xbf16> to vector<8x8xbf16>
    %cst_29 = arith.constant 3.535160e-01 : bf16
    %64 = vector.broadcast %cst_29 : bf16 to vector<8x8xbf16>
    %65 = arith.mulf %63, %64 : vector<8x8xbf16>
    %66 = vector.extract_strided_slice %3 {offsets = [0, 24], sizes = [8, 8], strides = [1, 1]} : vector<8x32xbf16> to vector<8x8xbf16>
    %67 = vector.extract_strided_slice %5 {offsets = [0, 24], sizes = [8, 8], strides = [1, 1]} : vector<8x32xbf16> to vector<8x8xbf16>
    %cst_30 = arith.constant dense<0.000000e+00> : vector<8x8xf32>
    %68 = tpu.matmul %65, %66, %cst_30 {dimension_numbers = #tpu.dot_dimension_numbers<[1], [1], [0], [0], [0, 0, 1, 0], [], []>} : vector<8x8xbf16>, vector<8x8xbf16>, vector<8x8xf32> -> vector<8x8xf32>
    %cst_31 = arith.constant dense<0xFF800000> : vector<8xf32>
    %69 = vector.multi_reduction <maximumf>, %68, %cst_31 [1] : vector<8x8xf32> to vector<8xf32>
    %70 = vector.shape_cast %69 : vector<8xf32> to vector<8x1xf32>
    %71 = vector.broadcast %70 : vector<8x1xf32> to vector<8x8xf32>
    %72 = arith.subf %68, %71 : vector<8x8xf32>
    %73 = math.exp %72 : vector<8x8xf32>
    %cst_32 = arith.constant dense<0.000000e+00> : vector<8xf32>
    %74 = vector.multi_reduction <add>, %73, %cst_32 [1] : vector<8x8xf32> to vector<8xf32>
    %75 = vector.shape_cast %74 : vector<8xf32> to vector<8x1xf32>
    %76 = tpu.reciprocal %75 {approx = true} : vector<8x1xf32> -> vector<8x1xf32>
    %77 = vector.broadcast %76 : vector<8x1xf32> to vector<8x8xf32>
    %78 = arith.mulf %73, %77 : vector<8x8xf32>
    %79 = arith.truncf %78 : vector<8x8xf32> to vector<8x8xbf16>
    %cst_33 = arith.constant dense<0.000000e+00> : vector<8x8xf32>
    %80 = tpu.matmul %79, %67, %cst_33 {dimension_numbers = #tpu.dot_dimension_numbers<[1], [0], [0], [1], [0, 0, 1, 1], [], []>} : vector<8x8xbf16>, vector<8x8xbf16>, vector<8x8xf32> -> vector<8x8xf32>
    %c0_34 = arith.constant 0 : index
    %c24 = arith.constant 24 : index
    %81 = vector.load %arg6[%c0_34, %c24] : memref<8x32xf32, #tpu.memory_space<vmem>>, vector<8x8xf32>
    tpu.vector_store %arg6[%c0_34, %c24], %80 {strides = array<i32>} : memref<8x32xf32, #tpu.memory_space<vmem>>, vector<8x8xf32>,
    %c0_35 = arith.constant 0 : index
    %c0_36 = arith.constant 0 : index
    %82 = vector.load %arg6[%c0_35, %c0_36] : memref<8x32xf32, #tpu.memory_space<vmem>>, vector<8x32xf32>
    %83 = arith.truncf %82 : vector<8x32xf32> to vector<8x32xbf16>
    %c0_37 = arith.constant 0 : index
    %c0_38 = arith.constant 0 : index
    %c0_39 = arith.constant 0 : index
    %84 = vector.load %arg5[%c0_37, %c0_38, %c0_39] : memref<1x8x32xbf16, #tpu.memory_space<vmem>>, vector<1x8x32xbf16>
    %85 = vector.shape_cast %84 : vector<1x8x32xbf16> to vector<8x32xbf16>
    %86 = vector.shape_cast %83 : vector<8x32xbf16> to vector<1x8x32xbf16>
    tpu.vector_store %arg5[%c0_37, %c0_38, %c0_39], %86 {strides = array<i32>} : memref<1x8x32xbf16, #tpu.memory_space<vmem>>, vector<1x8x32xbf16>,
    return
  }
  func.func @transform_0(%arg0: i32, %arg1: i32) -> (i32, i32, i32, i32) {
    %c0_i32 = arith.constant 0 : i32
    %c0_i32_0 = arith.constant 0 : i32
    %c0_i32_1 = arith.constant 0 : i32
    return %c0_i32, %arg0, %arg1, %c0_i32_0 : i32, i32, i32, i32
  }
  func.func @transform_1(%arg0: i32, %arg1: i32) -> (i32, i32, i32, i32) {
    %c1_i32 = arith.constant 1 : i32
    %c0_i32 = arith.constant 0 : i32
    %c0_i32_0 = arith.constant 0 : i32
    %c0_i32_1 = arith.constant 0 : i32
    return %c1_i32, %arg0, %c0_i32, %c0_i32_0 : i32, i32, i32, i32
  }
  func.func @transform_2(%arg0: i32, %arg1: i32) -> (i32, i32, i32, i32) {
    %c2_i32 = arith.constant 2 : i32
    %c0_i32 = arith.constant 0 : i32
    %c0_i32_0 = arith.constant 0 : i32
    %c0_i32_1 = arith.constant 0 : i32
    return %c2_i32, %arg0, %c0_i32, %c0_i32_0 : i32, i32, i32, i32
  }
  func.func @transform_3(%arg0: i32, %arg1: i32) -> (i32, i32, i32) {
    %c0_i32 = arith.constant 0 : i32
    %c0_i32_0 = arith.constant 0 : i32
    return %arg0, %arg1, %c0_i32 : i32, i32, i32
  }
}

module attributes {stable_mosaic.version = 11 : i64} {
  func.func @_group_linear_kernel(%arg0: i32, %arg1: i32, %arg2: i32, %arg3: memref<16x32xf32, #tpu.memory_space<vmem>>, %arg4: memref<1x32x32xbf16, #tpu.memory_space<vmem>>, %arg5: memref<1x1x32xf32, #tpu.memory_space<vmem>>, %arg6: memref<1x16x32xbf16, #tpu.memory_space<vmem>>, %arg7: memref<16x32xf32, #tpu.memory_space<vmem>>) attributes {dimension_semantics = [#tpu.dimension_semantics<parallel>, #tpu.dimension_semantics<parallel>, #tpu.dimension_semantics<arbitrary>], iteration_bounds = array<i64: 1, 3, 1>, scalar_prefetch = 0 : i64, scratch_operands = 1 : i64, tpu.core_type = #tpu.core_type<tc>, window_params = [{transform_indices = @transform_0, window_bounds = array<i64: 16, 32>}, {transform_indices = @transform_1, window_bounds = array<i64: 1, 32, 32>}, {transform_indices = @transform_2, window_bounds = array<i64: 1, 1, 32>}, {transform_indices = @transform_3, window_bounds = array<i64: 1, 16, 32>}]} {
    %c0_i32 = arith.constant 0 : i32
    %0 = arith.cmpi eq, %arg2, %c0_i32 : i32
    %1 = arith.extui %0 : i1 to i32
    %c0_i32_0 = arith.constant 0 : i32
    %2 = arith.cmpi ne, %1, %c0_i32_0 : i32
    scf.if %2 {
      %cst_11 = arith.constant 0.000000e+00 : f32
      %14 = vector.broadcast %cst_11 : f32 to vector<16x32xf32>
      %c0_12 = arith.constant 0 : index
      %c0_13 = arith.constant 0 : index
      %15 = vector.load %arg7[%c0_12, %c0_13] : memref<16x32xf32, #tpu.memory_space<vmem>>, vector<16x32xf32>
      tpu.vector_store %arg7[%c0_12, %c0_13], %14 {strides = array<i32>} : memref<16x32xf32, #tpu.memory_space<vmem>>, vector<16x32xf32>,
    } else {
    }
    %c0 = arith.constant 0 : index
    %c0_1 = arith.constant 0 : index
    %3 = vector.load %arg7[%c0, %c0_1] : memref<16x32xf32, #tpu.memory_space<vmem>>, vector<16x32xf32>
    %c0_2 = arith.constant 0 : index
    %c0_3 = arith.constant 0 : index
    %4 = vector.load %arg3[%c0_2, %c0_3] : memref<16x32xf32, #tpu.memory_space<vmem>>, vector<16x32xf32>
    %5 = arith.truncf %4 : vector<16x32xf32> to vector<16x32xbf16>
    %c0_4 = arith.constant 0 : index
    %c0_5 = arith.constant 0 : index
    %c0_6 = arith.constant 0 : index
    %6 = vector.load %arg4[%c0_4, %c0_5, %c0_6] : memref<1x32x32xbf16, #tpu.memory_space<vmem>>, vector<1x32x32xbf16>
    %7 = vector.shape_cast %6 : vector<1x32x32xbf16> to vector<32x32xbf16>
    %cst = arith.constant dense<0.000000e+00> : vector<16x32xf32>
    %8 = tpu.matmul %5, %7, %cst {dimension_numbers = #tpu.dot_dimension_numbers<[1], [0], [0], [1], [0, 0, 1, 1], [], []>} : vector<16x32xbf16>, vector<32x32xbf16>, vector<16x32xf32> -> vector<16x32xf32>
    %9 = arith.addf %3, %8 : vector<16x32xf32>
    %c0_7 = arith.constant 0 : index
    %c0_8 = arith.constant 0 : index
    %10 = vector.load %arg7[%c0_7, %c0_8] : memref<16x32xf32, #tpu.memory_space<vmem>>, vector<16x32xf32>
    tpu.vector_store %arg7[%c0_7, %c0_8], %9 {strides = array<i32>} : memref<16x32xf32, #tpu.memory_space<vmem>>, vector<16x32xf32>,
    %c0_i32_9 = arith.constant 0 : i32
    %11 = arith.cmpi eq, %arg2, %c0_i32_9 : i32
    %12 = arith.extui %11 : i1 to i32
    %c0_i32_10 = arith.constant 0 : i32
    %13 = arith.cmpi ne, %12, %c0_i32_10 : i32
    scf.if %13 {
      %c0_11 = arith.constant 0 : index
      %c0_12 = arith.constant 0 : index
      %14 = vector.load %arg7[%c0_11, %c0_12] : memref<16x32xf32, #tpu.memory_space<vmem>>, vector<16x32xf32>
      %c0_13 = arith.constant 0 : index
      %c0_14 = arith.constant 0 : index
      %c0_15 = arith.constant 0 : index
      %15 = vector.load %arg5[%c0_13, %c0_14, %c0_15] : memref<1x1x32xf32, #tpu.memory_space<vmem>>, vector<1x1x32xf32>
      %16 = vector.shape_cast %15 : vector<1x1x32xf32> to vector<1x32xf32>
      %17 = vector.broadcast %16 : vector<1x32xf32> to vector<16x32xf32>
      %18 = arith.addf %14, %17 : vector<16x32xf32>
      %19 = arith.truncf %18 : vector<16x32xf32> to vector<16x32xbf16>
      %c0_16 = arith.constant 0 : index
      %c0_17 = arith.constant 0 : index
      %c0_18 = arith.constant 0 : index
      %20 = vector.load %arg6[%c0_16, %c0_17, %c0_18] : memref<1x16x32xbf16, #tpu.memory_space<vmem>>, vector<1x16x32xbf16>
      %21 = vector.shape_cast %20 : vector<1x16x32xbf16> to vector<16x32xbf16>
      %22 = vector.shape_cast %19 : vector<16x32xbf16> to vector<1x16x32xbf16>
      tpu.vector_store %arg6[%c0_16, %c0_17, %c0_18], %22 {strides = array<i32>} : memref<1x16x32xbf16, #tpu.memory_space<vmem>>, vector<1x16x32xbf16>,
    } else {
    }
    return
  }
  func.func @transform_0(%arg0: i32, %arg1: i32, %arg2: i32) -> (i32, i32) {
    %c0_i32 = arith.constant 0 : i32
    return %arg0, %arg2 : i32, i32
  }
  func.func @transform_1(%arg0: i32, %arg1: i32, %arg2: i32) -> (i32, i32, i32) {
    %c0_i32 = arith.constant 0 : i32
    %c0_i32_0 = arith.constant 0 : i32
    return %arg1, %arg2, %c0_i32 : i32, i32, i32
  }
  func.func @transform_2(%arg0: i32, %arg1: i32, %arg2: i32) -> (i32, i32, i32) {
    %c0_i32 = arith.constant 0 : i32
    %c0_i32_0 = arith.constant 0 : i32
    %c0_i32_1 = arith.constant 0 : i32
    return %arg1, %c0_i32, %c0_i32_0 : i32, i32, i32
  }
  func.func @transform_3(%arg0: i32, %arg1: i32, %arg2: i32) -> (i32, i32, i32) {
    %c0_i32 = arith.constant 0 : i32
    %c0_i32_0 = arith.constant 0 : i32
    return %arg1, %arg0, %c0_i32 : i32, i32, i32
  }
}

module attributes {stable_mosaic.version = 11 : i64} {
  func.func @_linear_add_ln_kernel(%arg0: i32, %arg1: i32, %arg2: memref<16x32xbf16, #tpu.memory_space<vmem>>, %arg3: memref<32x32xbf16, #tpu.memory_space<vmem>>, %arg4: memref<1x32xf32, #tpu.memory_space<vmem>>, %arg5: memref<16x32xf32, #tpu.memory_space<vmem>>, %arg6: memref<1x32xf32, #tpu.memory_space<vmem>>, %arg7: memref<1x32xf32, #tpu.memory_space<vmem>>, %arg8: memref<16x32xf32, #tpu.memory_space<vmem>>, %arg9: memref<16x32xf32, #tpu.memory_space<vmem>>) attributes {dimension_semantics = [#tpu.dimension_semantics<parallel>, #tpu.dimension_semantics<arbitrary>], iteration_bounds = array<i64: 1, 1>, scalar_prefetch = 0 : i64, scratch_operands = 1 : i64, tpu.core_type = #tpu.core_type<tc>, window_params = [{transform_indices = @transform_0, window_bounds = array<i64: 16, 32>}, {transform_indices = @transform_1, window_bounds = array<i64: 32, 32>}, {pipeline_mode = #tpu.pipeline_mode<synchronous>, transform_indices = @transform_2, window_bounds = array<i64: 1, 32>}, {transform_indices = @transform_3, window_bounds = array<i64: 16, 32>}, {pipeline_mode = #tpu.pipeline_mode<synchronous>, transform_indices = @transform_4, window_bounds = array<i64: 1, 32>}, {pipeline_mode = #tpu.pipeline_mode<synchronous>, transform_indices = @transform_5, window_bounds = array<i64: 1, 32>}, {transform_indices = @transform_6, window_bounds = array<i64: 16, 32>}]} {
    %c0_i32 = arith.constant 0 : i32
    %0 = arith.cmpi eq, %arg1, %c0_i32 : i32
    %1 = arith.extui %0 : i1 to i32
    %c0_i32_0 = arith.constant 0 : i32
    %2 = arith.cmpi ne, %1, %c0_i32_0 : i32
    scf.if %2 {
      %cst_10 = arith.constant 0.000000e+00 : f32
      %12 = vector.broadcast %cst_10 : f32 to vector<16x32xf32>
      %c0_11 = arith.constant 0 : index
      %c0_12 = arith.constant 0 : index
      %13 = vector.load %arg9[%c0_11, %c0_12] : memref<16x32xf32, #tpu.memory_space<vmem>>, vector<16x32xf32>
      tpu.vector_store %arg9[%c0_11, %c0_12], %12 {strides = array<i32>} : memref<16x32xf32, #tpu.memory_space<vmem>>, vector<16x32xf32>,
    } else {
    }
    %c0 = arith.constant 0 : index
    %c0_1 = arith.constant 0 : index
    %3 = vector.load %arg9[%c0, %c0_1] : memref<16x32xf32, #tpu.memory_space<vmem>>, vector<16x32xf32>
    %c0_2 = arith.constant 0 : index
    %c0_3 = arith.constant 0 : index
    %4 = vector.load %arg2[%c0_2, %c0_3] : memref<16x32xbf16, #tpu.memory_space<vmem>>, vector<16x32xbf16>
    %c0_4 = arith.constant 0 : index
    %c0_5 = arith.constant 0 : index
    %5 = vector.load %arg3[%c0_4, %c0_5] : memref<32x32xbf16, #tpu.memory_space<vmem>>, vector<32x32xbf16>
    %cst = arith.constant dense<0.000000e+00> : vector<16x32xf32>
    %6 = tpu.matmul %4, %5, %cst {dimension_numbers = #tpu.dot_dimension_numbers<[1], [0], [0], [1], [0, 0, 1, 1], [], []>} : vector<16x32xbf16>, vector<32x32xbf16>, vector<16x32xf32> -> vector<16x32xf32>
    %7 = arith.addf %3, %6 : vector<16x32xf32>
    %c0_6 = arith.constant 0 : index
    %c0_7 = arith.constant 0 : index
    %8 = vector.load %arg9[%c0_6, %c0_7] : memref<16x32xf32, #tpu.memory_space<vmem>>, vector<16x32xf32>
    tpu.vector_store %arg9[%c0_6, %c0_7], %7 {strides = array<i32>} : memref<16x32xf32, #tpu.memory_space<vmem>>, vector<16x32xf32>,
    %c0_i32_8 = arith.constant 0 : i32
    %9 = arith.cmpi eq, %arg1, %c0_i32_8 : i32
    %10 = arith.extui %9 : i1 to i32
    %c0_i32_9 = arith.constant 0 : i32
    %11 = arith.cmpi ne, %10, %c0_i32_9 : i32
    scf.if %11 {
      %c0_10 = arith.constant 0 : index
      %c0_11 = arith.constant 0 : index
      %12 = vector.load %arg9[%c0_10, %c0_11] : memref<16x32xf32, #tpu.memory_space<vmem>>, vector<16x32xf32>
      %c0_12 = arith.constant 0 : index
      %c0_13 = arith.constant 0 : index
      %13 = vector.load %arg4[%c0_12, %c0_13] : memref<1x32xf32, #tpu.memory_space<vmem>>, vector<1x32xf32>
      %14 = vector.broadcast %13 : vector<1x32xf32> to vector<16x32xf32>
      %15 = arith.addf %12, %14 : vector<16x32xf32>
      %c0_14 = arith.constant 0 : index
      %c0_15 = arith.constant 0 : index
      %16 = vector.load %arg5[%c0_14, %c0_15] : memref<16x32xf32, #tpu.memory_space<vmem>>, vector<16x32xf32>
      %17 = arith.addf %15, %16 : vector<16x32xf32>
      %cst_16 = arith.constant dense<0.000000e+00> : vector<16xf32>
      %18 = vector.multi_reduction <add>, %17, %cst_16 [1] : vector<16x32xf32> to vector<16xf32>
      %19 = vector.shape_cast %18 : vector<16xf32> to vector<16x1xf32>
      %cst_17 = arith.constant 3.200000e+01 : f32
      %20 = vector.broadcast %cst_17 : f32 to vector<16x1xf32>
      %21 = arith.divf %19, %20 : vector<16x1xf32>
      %22 = arith.mulf %17, %17 : vector<16x32xf32>
      %cst_18 = arith.constant dense<0.000000e+00> : vector<16xf32>
      %23 = vector.multi_reduction <add>, %22, %cst_18 [1] : vector<16x32xf32> to vector<16xf32>
      %24 = vector.shape_cast %23 : vector<16xf32> to vector<16x1xf32>
      %cst_19 = arith.constant 3.200000e+01 : f32
      %25 = vector.broadcast %cst_19 : f32 to vector<16x1xf32>
      %26 = arith.divf %24, %25 : vector<16x1xf32>
      %27 = arith.mulf %21, %21 : vector<16x1xf32>
      %28 = arith.subf %26, %27 : vector<16x1xf32>
      %29 = vector.broadcast %21 : vector<16x1xf32> to vector<16x32xf32>
      %30 = arith.subf %17, %29 : vector<16x32xf32>
      %cst_20 = arith.constant 9.99999974E-6 : f32
      %31 = vector.broadcast %cst_20 : f32 to vector<16x1xf32>
      %32 = arith.addf %28, %31 : vector<16x1xf32>
      %33 = math.rsqrt %32 : vector<16x1xf32>
      %34 = vector.broadcast %33 : vector<16x1xf32> to vector<16x32xf32>
      %35 = arith.mulf %30, %34 : vector<16x32xf32>
      %c0_21 = arith.constant 0 : index
      %c0_22 = arith.constant 0 : index
      %36 = vector.load %arg6[%c0_21, %c0_22] : memref<1x32xf32, #tpu.memory_space<vmem>>, vector<1x32xf32>
      %37 = vector.broadcast %36 : vector<1x32xf32> to vector<16x32xf32>
      %38 = arith.mulf %35, %37 : vector<16x32xf32>
      %c0_23 = arith.constant 0 : index
      %c0_24 = arith.constant 0 : index
      %39 = vector.load %arg7[%c0_23, %c0_24] : memref<1x32xf32, #tpu.memory_space<vmem>>, vector<1x32xf32>
      %40 = vector.broadcast %39 : vector<1x32xf32> to vector<16x32xf32>
      %41 = arith.addf %38, %40 : vector<16x32xf32>
      %c0_25 = arith.constant 0 : index
      %c0_26 = arith.constant 0 : index
      %42 = vector.load %arg8[%c0_25, %c0_26] : memref<16x32xf32, #tpu.memory_space<vmem>>, vector<16x32xf32>
      tpu.vector_store %arg8[%c0_25, %c0_26], %41 {strides = array<i32>} : memref<16x32xf32, #tpu.memory_space<vmem>>, vector<16x32xf32>,
    } else {
    }
    return
  }
  func.func @transform_0(%arg0: i32, %arg1: i32) -> (i32, i32) {
    %c0_i32 = arith.constant 0 : i32
    return %arg0, %arg1 : i32, i32
  }
  func.func @transform_1(%arg0: i32, %arg1: i32) -> (i32, i32) {
    %c0_i32 = arith.constant 0 : i32
    %c0_i32_0 = arith.constant 0 : i32
    return %arg1, %c0_i32 : i32, i32
  }
  func.func @transform_2(%arg0: i32, %arg1: i32) -> (i32, i32) {
    %c0_i32 = arith.constant 0 : i32
    %c0_i32_0 = arith.constant 0 : i32
    %c0_i32_1 = arith.constant 0 : i32
    return %c0_i32, %c0_i32_0 : i32, i32
  }
  func.func @transform_3(%arg0: i32, %arg1: i32) -> (i32, i32) {
    %c0_i32 = arith.constant 0 : i32
    %c0_i32_0 = arith.constant 0 : i32
    return %arg0, %c0_i32 : i32, i32
  }
  func.func @transform_4(%arg0: i32, %arg1: i32) -> (i32, i32) {
    %c0_i32 = arith.constant 0 : i32
    %c0_i32_0 = arith.constant 0 : i32
    %c0_i32_1 = arith.constant 0 : i32
    return %c0_i32, %c0_i32_0 : i32, i32
  }
  func.func @transform_5(%arg0: i32, %arg1: i32) -> (i32, i32) {
    %c0_i32 = arith.constant 0 : i32
    %c0_i32_0 = arith.constant 0 : i32
    %c0_i32_1 = arith.constant 0 : i32
    return %c0_i32, %c0_i32_0 : i32, i32
  }
  func.func @transform_6(%arg0: i32, %arg1: i32) -> (i32, i32) {
    %c0_i32 = arith.constant 0 : i32
    %c0_i32_0 = arith.constant 0 : i32
    return %arg0, %c0_i32 : i32, i32
  }
}

module attributes {stable_mosaic.version = 11 : i64} {
  func.func @_group_linear_kernel(%arg0: i32, %arg1: i32, %arg2: i32, %arg3: memref<16x32xf32, #tpu.memory_space<vmem>>, %arg4: memref<1x32x32xbf16, #tpu.memory_space<vmem>>, %arg5: memref<1x1x32xf32, #tpu.memory_space<vmem>>, %arg6: memref<1x16x32xbf16, #tpu.memory_space<vmem>>, %arg7: memref<16x32xf32, #tpu.memory_space<vmem>>) attributes {dimension_semantics = [#tpu.dimension_semantics<parallel>, #tpu.dimension_semantics<parallel>, #tpu.dimension_semantics<arbitrary>], iteration_bounds = array<i64: 1, 2, 1>, scalar_prefetch = 0 : i64, scratch_operands = 1 : i64, tpu.core_type = #tpu.core_type<tc>, window_params = [{transform_indices = @transform_0, window_bounds = array<i64: 16, 32>}, {transform_indices = @transform_1, window_bounds = array<i64: 1, 32, 32>}, {transform_indices = @transform_2, window_bounds = array<i64: 1, 1, 32>}, {transform_indices = @transform_3, window_bounds = array<i64: 1, 16, 32>}]} {
    %c0_i32 = arith.constant 0 : i32
    %0 = arith.cmpi eq, %arg2, %c0_i32 : i32
    %1 = arith.extui %0 : i1 to i32
    %c0_i32_0 = arith.constant 0 : i32
    %2 = arith.cmpi ne, %1, %c0_i32_0 : i32
    scf.if %2 {
      %cst_11 = arith.constant 0.000000e+00 : f32
      %14 = vector.broadcast %cst_11 : f32 to vector<16x32xf32>
      %c0_12 = arith.constant 0 : index
      %c0_13 = arith.constant 0 : index
      %15 = vector.load %arg7[%c0_12, %c0_13] : memref<16x32xf32, #tpu.memory_space<vmem>>, vector<16x32xf32>
      tpu.vector_store %arg7[%c0_12, %c0_13], %14 {strides = array<i32>} : memref<16x32xf32, #tpu.memory_space<vmem>>, vector<16x32xf32>,
    } else {
    }
    %c0 = arith.constant 0 : index
    %c0_1 = arith.constant 0 : index
    %3 = vector.load %arg7[%c0, %c0_1] : memref<16x32xf32, #tpu.memory_space<vmem>>, vector<16x32xf32>
    %c0_2 = arith.constant 0 : index
    %c0_3 = arith.constant 0 : index
    %4 = vector.load %arg3[%c0_2, %c0_3] : memref<16x32xf32, #tpu.memory_space<vmem>>, vector<16x32xf32>
    %5 = arith.truncf %4 : vector<16x32xf32> to vector<16x32xbf16>
    %c0_4 = arith.constant 0 : index
    %c0_5 = arith.constant 0 : index
    %c0_6 = arith.constant 0 : index
    %6 = vector.load %arg4[%c0_4, %c0_5, %c0_6] : memref<1x32x32xbf16, #tpu.memory_space<vmem>>, vector<1x32x32xbf16>
    %7 = vector.shape_cast %6 : vector<1x32x32xbf16> to vector<32x32xbf16>
    %cst = arith.constant dense<0.000000e+00> : vector<16x32xf32>
    %8 = tpu.matmul %5, %7, %cst {dimension_numbers = #tpu.dot_dimension_numbers<[1], [0], [0], [1], [0, 0, 1, 1], [], []>} : vector<16x32xbf16>, vector<32x32xbf16>, vector<16x32xf32> -> vector<16x32xf32>
    %9 = arith.addf %3, %8 : vector<16x32xf32>
    %c0_7 = arith.constant 0 : index
    %c0_8 = arith.constant 0 : index
    %10 = vector.load %arg7[%c0_7, %c0_8] : memref<16x32xf32, #tpu.memory_space<vmem>>, vector<16x32xf32>
    tpu.vector_store %arg7[%c0_7, %c0_8], %9 {strides = array<i32>} : memref<16x32xf32, #tpu.memory_space<vmem>>, vector<16x32xf32>,
    %c0_i32_9 = arith.constant 0 : i32
    %11 = arith.cmpi eq, %arg2, %c0_i32_9 : i32
    %12 = arith.extui %11 : i1 to i32
    %c0_i32_10 = arith.constant 0 : i32
    %13 = arith.cmpi ne, %12, %c0_i32_10 : i32
    scf.if %13 {
      %c0_11 = arith.constant 0 : index
      %c0_12 = arith.constant 0 : index
      %14 = vector.load %arg7[%c0_11, %c0_12] : memref<16x32xf32, #tpu.memory_space<vmem>>, vector<16x32xf32>
      %c0_13 = arith.constant 0 : index
      %c0_14 = arith.constant 0 : index
      %c0_15 = arith.constant 0 : index
      %15 = vector.load %arg5[%c0_13, %c0_14, %c0_15] : memref<1x1x32xf32, #tpu.memory_space<vmem>>, vector<1x1x32xf32>
      %16 = vector.shape_cast %15 : vector<1x1x32xf32> to vector<1x32xf32>
      %17 = vector.broadcast %16 : vector<1x32xf32> to vector<16x32xf32>
      %18 = arith.addf %14, %17 : vector<16x32xf32>
      %19 = arith.truncf %18 : vector<16x32xf32> to vector<16x32xbf16>
      %c0_16 = arith.constant 0 : index
      %c0_17 = arith.constant 0 : index
      %c0_18 = arith.constant 0 : index
      %20 = vector.load %arg6[%c0_16, %c0_17, %c0_18] : memref<1x16x32xbf16, #tpu.memory_space<vmem>>, vector<1x16x32xbf16>
      %21 = vector.shape_cast %20 : vector<1x16x32xbf16> to vector<16x32xbf16>
      %22 = vector.shape_cast %19 : vector<16x32xbf16> to vector<1x16x32xbf16>
      tpu.vector_store %arg6[%c0_16, %c0_17, %c0_18], %22 {strides = array<i32>} : memref<1x16x32xbf16, #tpu.memory_space<vmem>>, vector<1x16x32xbf16>,
    } else {
    }
    return
  }
  func.func @transform_0(%arg0: i32, %arg1: i32, %arg2: i32) -> (i32, i32) {
    %c0_i32 = arith.constant 0 : i32
    return %arg0, %arg2 : i32, i32
  }
  func.func @transform_1(%arg0: i32, %arg1: i32, %arg2: i32) -> (i32, i32, i32) {
    %c0_i32 = arith.constant 0 : i32
    %c0_i32_0 = arith.constant 0 : i32
    return %arg1, %arg2, %c0_i32 : i32, i32, i32
  }
  func.func @transform_2(%arg0: i32, %arg1: i32, %arg2: i32) -> (i32, i32, i32) {
    %c0_i32 = arith.constant 0 : i32
    %c0_i32_0 = arith.constant 0 : i32
    %c0_i32_1 = arith.constant 0 : i32
    return %arg1, %c0_i32, %c0_i32_0 : i32, i32, i32
  }
  func.func @transform_3(%arg0: i32, %arg1: i32, %arg2: i32) -> (i32, i32, i32) {
    %c0_i32 = arith.constant 0 : i32
    %c0_i32_0 = arith.constant 0 : i32
    return %arg1, %arg0, %c0_i32 : i32, i32, i32
  }
}

module attributes {stable_mosaic.version = 11 : i64} {
  func.func @_linear_kernel(%arg0: i32, %arg1: i32, %arg2: i32, %arg3: memref<16x32xf32, #tpu.memory_space<vmem>>, %arg4: memref<32x64xbf16, #tpu.memory_space<vmem>>, %arg5: memref<1x64xf32, #tpu.memory_space<vmem>>, %arg6: memref<16x64xbf16, #tpu.memory_space<vmem>>, %arg7: memref<16x64xf32, #tpu.memory_space<vmem>>) attributes {dimension_semantics = [#tpu.dimension_semantics<parallel>, #tpu.dimension_semantics<parallel>, #tpu.dimension_semantics<arbitrary>], iteration_bounds = array<i64: 1, 1, 1>, scalar_prefetch = 0 : i64, scratch_operands = 1 : i64, tpu.core_type = #tpu.core_type<tc>, window_params = [{transform_indices = @transform_0, window_bounds = array<i64: 16, 32>}, {transform_indices = @transform_1, window_bounds = array<i64: 32, 64>}, {transform_indices = @transform_2, window_bounds = array<i64: 1, 64>}, {transform_indices = @transform_3, window_bounds = array<i64: 16, 64>}]} {
    %c0_i32 = arith.constant 0 : i32
    %0 = arith.cmpi eq, %arg2, %c0_i32 : i32
    %1 = arith.extui %0 : i1 to i32
    %c0_i32_0 = arith.constant 0 : i32
    %2 = arith.cmpi ne, %1, %c0_i32_0 : i32
    scf.if %2 {
      %cst_10 = arith.constant 0.000000e+00 : f32
      %13 = vector.broadcast %cst_10 : f32 to vector<16x64xf32>
      %c0_11 = arith.constant 0 : index
      %c0_12 = arith.constant 0 : index
      %14 = vector.load %arg7[%c0_11, %c0_12] : memref<16x64xf32, #tpu.memory_space<vmem>>, vector<16x64xf32>
      tpu.vector_store %arg7[%c0_11, %c0_12], %13 {strides = array<i32>} : memref<16x64xf32, #tpu.memory_space<vmem>>, vector<16x64xf32>,
    } else {
    }
    %c0 = arith.constant 0 : index
    %c0_1 = arith.constant 0 : index
    %3 = vector.load %arg7[%c0, %c0_1] : memref<16x64xf32, #tpu.memory_space<vmem>>, vector<16x64xf32>
    %c0_2 = arith.constant 0 : index
    %c0_3 = arith.constant 0 : index
    %4 = vector.load %arg3[%c0_2, %c0_3] : memref<16x32xf32, #tpu.memory_space<vmem>>, vector<16x32xf32>
    %5 = arith.truncf %4 : vector<16x32xf32> to vector<16x32xbf16>
    %c0_4 = arith.constant 0 : index
    %c0_5 = arith.constant 0 : index
    %6 = vector.load %arg4[%c0_4, %c0_5] : memref<32x64xbf16, #tpu.memory_space<vmem>>, vector<32x64xbf16>
    %cst = arith.constant dense<0.000000e+00> : vector<16x64xf32>
    %7 = tpu.matmul %5, %6, %cst {dimension_numbers = #tpu.dot_dimension_numbers<[1], [0], [0], [1], [0, 0, 1, 1], [], []>} : vector<16x32xbf16>, vector<32x64xbf16>, vector<16x64xf32> -> vector<16x64xf32>
    %8 = arith.addf %3, %7 : vector<16x64xf32>
    %c0_6 = arith.constant 0 : index
    %c0_7 = arith.constant 0 : index
    %9 = vector.load %arg7[%c0_6, %c0_7] : memref<16x64xf32, #tpu.memory_space<vmem>>, vector<16x64xf32>
    tpu.vector_store %arg7[%c0_6, %c0_7], %8 {strides = array<i32>} : memref<16x64xf32, #tpu.memory_space<vmem>>, vector<16x64xf32>,
    %c0_i32_8 = arith.constant 0 : i32
    %10 = arith.cmpi eq, %arg2, %c0_i32_8 : i32
    %11 = arith.extui %10 : i1 to i32
    %c0_i32_9 = arith.constant 0 : i32
    %12 = arith.cmpi ne, %11, %c0_i32_9 : i32
    scf.if %12 {
      %c0_10 = arith.constant 0 : index
      %c0_11 = arith.constant 0 : index
      %13 = vector.load %arg7[%c0_10, %c0_11] : memref<16x64xf32, #tpu.memory_space<vmem>>, vector<16x64xf32>
      %c0_12 = arith.constant 0 : index
      %c0_13 = arith.constant 0 : index
      %14 = vector.load %arg5[%c0_12, %c0_13] : memref<1x64xf32, #tpu.memory_space<vmem>>, vector<1x64xf32>
      %15 = vector.broadcast %14 : vector<1x64xf32> to vector<16x64xf32>
      %16 = arith.addf %13, %15 : vector<16x64xf32>
      %cst_14 = arith.constant 0.000000e+00 : f32
      %17 = vector.broadcast %cst_14 : f32 to vector<16x64xf32>
      %18 = arith.maximumf %16, %17 : vector<16x64xf32>
      %19 = arith.truncf %18 : vector<16x64xf32> to vector<16x64xbf16>
      %c0_15 = arith.constant 0 : index
      %c0_16 = arith.constant 0 : index
      %20 = vector.load %arg6[%c0_15, %c0_16] : memref<16x64xbf16, #tpu.memory_space<vmem>>, vector<16x64xbf16>
      tpu.vector_store %arg6[%c0_15, %c0_16], %19 {strides = array<i32>} : memref<16x64xbf16, #tpu.memory_space<vmem>>, vector<16x64xbf16>,
    } else {
    }
    return
  }
  func.func @transform_0(%arg0: i32, %arg1: i32, %arg2: i32) -> (i32, i32) {
    %c0_i32 = arith.constant 0 : i32
    return %arg0, %arg2 : i32, i32
  }
  func.func @transform_1(%arg0: i32, %arg1: i32, %arg2: i32) -> (i32, i32) {
    %c0_i32 = arith.constant 0 : i32
    return %arg2, %arg1 : i32, i32
  }
  func.func @transform_2(%arg0: i32, %arg1: i32, %arg2: i32) -> (i32, i32) {
    %c0_i32 = arith.constant 0 : i32
    %c0_i32_0 = arith.constant 0 : i32
    return %c0_i32, %arg1 : i32, i32
  }
  func.func @transform_3(%arg0: i32, %arg1: i32, %arg2: i32) -> (i32, i32) {
    %c0_i32 = arith.constant 0 : i32
    return %arg0, %arg1 : i32, i32
  }
}

module attributes {stable_mosaic.version = 11 : i64} {
  func.func @_linear_kernel(%arg0: i32, %arg1: i32, %arg2: i32, %arg3: memref<16x32xf32, #tpu.memory_space<vmem>>, %arg4: memref<32x32xbf16, #tpu.memory_space<vmem>>, %arg5: memref<1x32xf32, #tpu.memory_space<vmem>>, %arg6: memref<16x32xbf16, #tpu.memory_space<vmem>>, %arg7: memref<16x32xf32, #tpu.memory_space<vmem>>) attributes {dimension_semantics = [#tpu.dimension_semantics<parallel>, #tpu.dimension_semantics<parallel>, #tpu.dimension_semantics<arbitrary>], iteration_bounds = array<i64: 1, 1, 1>, scalar_prefetch = 0 : i64, scratch_operands = 1 : i64, tpu.core_type = #tpu.core_type<tc>, window_params = [{transform_indices = @transform_0, window_bounds = array<i64: 16, 32>}, {transform_indices = @transform_1, window_bounds = array<i64: 32, 32>}, {transform_indices = @transform_2, window_bounds = array<i64: 1, 32>}, {transform_indices = @transform_3, window_bounds = array<i64: 16, 32>}]} {
    %c0_i32 = arith.constant 0 : i32
    %0 = arith.cmpi eq, %arg2, %c0_i32 : i32
    %1 = arith.extui %0 : i1 to i32
    %c0_i32_0 = arith.constant 0 : i32
    %2 = arith.cmpi ne, %1, %c0_i32_0 : i32
    scf.if %2 {
      %cst_10 = arith.constant 0.000000e+00 : f32
      %13 = vector.broadcast %cst_10 : f32 to vector<16x32xf32>
      %c0_11 = arith.constant 0 : index
      %c0_12 = arith.constant 0 : index
      %14 = vector.load %arg7[%c0_11, %c0_12] : memref<16x32xf32, #tpu.memory_space<vmem>>, vector<16x32xf32>
      tpu.vector_store %arg7[%c0_11, %c0_12], %13 {strides = array<i32>} : memref<16x32xf32, #tpu.memory_space<vmem>>, vector<16x32xf32>,
    } else {
    }
    %c0 = arith.constant 0 : index
    %c0_1 = arith.constant 0 : index
    %3 = vector.load %arg7[%c0, %c0_1] : memref<16x32xf32, #tpu.memory_space<vmem>>, vector<16x32xf32>
    %c0_2 = arith.constant 0 : index
    %c0_3 = arith.constant 0 : index
    %4 = vector.load %arg3[%c0_2, %c0_3] : memref<16x32xf32, #tpu.memory_space<vmem>>, vector<16x32xf32>
    %5 = arith.truncf %4 : vector<16x32xf32> to vector<16x32xbf16>
    %c0_4 = arith.constant 0 : index
    %c0_5 = arith.constant 0 : index
    %6 = vector.load %arg4[%c0_4, %c0_5] : memref<32x32xbf16, #tpu.memory_space<vmem>>, vector<32x32xbf16>
    %cst = arith.constant dense<0.000000e+00> : vector<16x32xf32>
    %7 = tpu.matmul %5, %6, %cst {dimension_numbers = #tpu.dot_dimension_numbers<[1], [0], [0], [1], [0, 0, 1, 1], [], []>} : vector<16x32xbf16>, vector<32x32xbf16>, vector<16x32xf32> -> vector<16x32xf32>
    %8 = arith.addf %3, %7 : vector<16x32xf32>
    %c0_6 = arith.constant 0 : index
    %c0_7 = arith.constant 0 : index
    %9 = vector.load %arg7[%c0_6, %c0_7] : memref<16x32xf32, #tpu.memory_space<vmem>>, vector<16x32xf32>
    tpu.vector_store %arg7[%c0_6, %c0_7], %8 {strides = array<i32>} : memref<16x32xf32, #tpu.memory_space<vmem>>, vector<16x32xf32>,
    %c0_i32_8 = arith.constant 0 : i32
    %10 = arith.cmpi eq, %arg2, %c0_i32_8 : i32
    %11 = arith.extui %10 : i1 to i32
    %c0_i32_9 = arith.constant 0 : i32
    %12 = arith.cmpi ne, %11, %c0_i32_9 : i32
    scf.if %12 {
      %c0_10 = arith.constant 0 : index
      %c0_11 = arith.constant 0 : index
      %13 = vector.load %arg7[%c0_10, %c0_11] : memref<16x32xf32, #tpu.memory_space<vmem>>, vector<16x32xf32>
      %c0_12 = arith.constant 0 : index
      %c0_13 = arith.constant 0 : index
      %14 = vector.load %arg5[%c0_12, %c0_13] : memref<1x32xf32, #tpu.memory_space<vmem>>, vector<1x32xf32>
      %15 = vector.broadcast %14 : vector<1x32xf32> to vector<16x32xf32>
      %16 = arith.addf %13, %15 : vector<16x32xf32>
      %17 = arith.truncf %16 : vector<16x32xf32> to vector<16x32xbf16>
      %c0_14 = arith.constant 0 : index
      %c0_15 = arith.constant 0 : index
      %18 = vector.load %arg6[%c0_14, %c0_15] : memref<16x32xbf16, #tpu.memory_space<vmem>>, vector<16x32xbf16>
      tpu.vector_store %arg6[%c0_14, %c0_15], %17 {strides = array<i32>} : memref<16x32xbf16, #tpu.memory_space<vmem>>, vector<16x32xbf16>,
    } else {
    }
    return
  }
  func.func @transform_0(%arg0: i32, %arg1: i32, %arg2: i32) -> (i32, i32) {
    %c0_i32 = arith.constant 0 : i32
    return %arg0, %arg2 : i32, i32
  }
  func.func @transform_1(%arg0: i32, %arg1: i32, %arg2: i32) -> (i32, i32) {
    %c0_i32 = arith.constant 0 : i32
    return %arg2, %arg1 : i32, i32
  }
  func.func @transform_2(%arg0: i32, %arg1: i32, %arg2: i32) -> (i32, i32) {
    %c0_i32 = arith.constant 0 : i32
    %c0_i32_0 = arith.constant 0 : i32
    return %c0_i32, %arg1 : i32, i32
  }
  func.func @transform_3(%arg0: i32, %arg1: i32, %arg2: i32) -> (i32, i32) {
    %c0_i32 = arith.constant 0 : i32
    return %arg0, %arg1 : i32, i32
  }
}

module attributes {stable_mosaic.version = 11 : i64} {
  func.func @_attn_kernel(%arg0: i32, %arg1: i32, %arg2: memref<1x1x8x32xbf16, #tpu.memory_space<vmem>>, %arg3: memref<1x1x8x32xbf16, #tpu.memory_space<vmem>>, %arg4: memref<1x1x8x32xbf16, #tpu.memory_space<vmem>>, %arg5: memref<1x8x32xbf16, #tpu.memory_space<vmem>>, %arg6: memref<8x32xf32, #tpu.memory_space<vmem>>) attributes {dimension_semantics = [#tpu.dimension_semantics<parallel>, #tpu.dimension_semantics<parallel>], iteration_bounds = array<i64: 2, 1>, scalar_prefetch = 0 : i64, scratch_operands = 1 : i64, tpu.core_type = #tpu.core_type<tc>, window_params = [{transform_indices = @transform_0, window_bounds = array<i64: 1, 1, 8, 32>}, {transform_indices = @transform_1, window_bounds = array<i64: 1, 1, 8, 32>}, {transform_indices = @transform_2, window_bounds = array<i64: 1, 1, 8, 32>}, {transform_indices = @transform_3, window_bounds = array<i64: 1, 8, 32>}]} {
    %c0 = arith.constant 0 : index
    %c0_0 = arith.constant 0 : index
    %c0_1 = arith.constant 0 : index
    %c0_2 = arith.constant 0 : index
    %0 = vector.load %arg2[%c0, %c0_0, %c0_1, %c0_2] : memref<1x1x8x32xbf16, #tpu.memory_space<vmem>>, vector<1x1x8x32xbf16>
    %1 = vector.shape_cast %0 : vector<1x1x8x32xbf16> to vector<8x32xbf16>
    %c0_3 = arith.constant 0 : index
    %c0_4 = arith.constant 0 : index
    %c0_5 = arith.constant 0 : index
    %c0_6 = arith.constant 0 : index
    %2 = vector.load %arg3[%c0_3, %c0_4, %c0_5, %c0_6] : memref<1x1x8x32xbf16, #tpu.memory_space<vmem>>, vector<1x1x8x32xbf16>
    %3 = vector.shape_cast %2 : vector<1x1x8x32xbf16> to vector<8x32xbf16>
    %c0_7 = arith.constant 0 : index
    %c0_8 = arith.constant 0 : index
    %c0_9 = arith.constant 0 : index
    %c0_10 = arith.constant 0 : index
    %4 = vector.load %arg4[%c0_7, %c0_8, %c0_9, %c0_10] : memref<1x1x8x32xbf16, #tpu.memory_space<vmem>>, vector<1x1x8x32xbf16>
    %5 = vector.shape_cast %4 : vector<1x1x8x32xbf16> to vector<8x32xbf16>
    %6 = vector.extract_strided_slice %1 {offsets = [0, 0], sizes = [8, 8], strides = [1, 1]} : vector<8x32xbf16> to vector<8x8xbf16>
    %cst = arith.constant 3.535160e-01 : bf16
    %7 = vector.broadcast %cst : bf16 to vector<8x8xbf16>
    %8 = arith.mulf %6, %7 : vector<8x8xbf16>
    %9 = vector.extract_strided_slice %3 {offsets = [0, 0], sizes = [8, 8], strides = [1, 1]} : vector<8x32xbf16> to vector<8x8xbf16>
    %10 = vector.extract_strided_slice %5 {offsets = [0, 0], sizes = [8, 8], strides = [1, 1]} : vector<8x32xbf16> to vector<8x8xbf16>
    %cst_11 = arith.constant dense<0.000000e+00> : vector<8x8xf32>
    %11 = tpu.matmul %8, %9, %cst_11 {dimension_numbers = #tpu.dot_dimension_numbers<[1], [1], [0], [0], [0, 0, 1, 0], [], []>} : vector<8x8xbf16>, vector<8x8xbf16>, vector<8x8xf32> -> vector<8x8xf32>
    %cst_12 = arith.constant dense<0xFF800000> : vector<8xf32>
    %12 = vector.multi_reduction <maximumf>, %11, %cst_12 [1] : vector<8x8xf32> to vector<8xf32>
    %13 = vector.shape_cast %12 : vector<8xf32> to vector<8x1xf32>
    %14 = vector.broadcast %13 : vector<8x1xf32> to vector<8x8xf32>
    %15 = arith.subf %11, %14 : vector<8x8xf32>
    %16 = math.exp %15 : vector<8x8xf32>
    %cst_13 = arith.constant dense<0.000000e+00> : vector<8xf32>
    %17 = vector.multi_reduction <add>, %16, %cst_13 [1] : vector<8x8xf32> to vector<8xf32>
    %18 = vector.shape_cast %17 : vector<8xf32> to vector<8x1xf32>
    %19 = tpu.reciprocal %18 {approx = true} : vector<8x1xf32> -> vector<8x1xf32>
    %20 = vector.broadcast %19 : vector<8x1xf32> to vector<8x8xf32>
    %21 = arith.mulf %16, %20 : vector<8x8xf32>
    %22 = arith.truncf %21 : vector<8x8xf32> to vector<8x8xbf16>
    %cst_14 = arith.constant dense<0.000000e+00> : vector<8x8xf32>
    %23 = tpu.matmul %22, %10, %cst_14 {dimension_numbers = #tpu.dot_dimension_numbers<[1], [0], [0], [1], [0, 0, 1, 1], [], []>} : vector<8x8xbf16>, vector<8x8xbf16>, vector<8x8xf32> -> vector<8x8xf32>
    %c0_15 = arith.constant 0 : index
    %c0_16 = arith.constant 0 : index
    %24 = vector.load %arg6[%c0_15, %c0_16] : memref<8x32xf32, #tpu.memory_space<vmem>>, vector<8x8xf32>
    tpu.vector_store %arg6[%c0_15, %c0_16], %23 {strides = array<i32>} : memref<8x32xf32, #tpu.memory_space<vmem>>, vector<8x8xf32>,
    %25 = vector.extract_strided_slice %1 {offsets = [0, 8], sizes = [8, 8], strides = [1, 1]} : vector<8x32xbf16> to vector<8x8xbf16>
    %cst_17 = arith.constant 3.535160e-01 : bf16
    %26 = vector.broadcast %cst_17 : bf16 to vector<8x8xbf16>
    %27 = arith.mulf %25, %26 : vector<8x8xbf16>
    %28 = vector.extract_strided_slice %3 {offsets = [0, 8], sizes = [8, 8], strides = [1, 1]} : vector<8x32xbf16> to vector<8x8xbf16>
    %29 = vector.extract_strided_slice %5 {offsets = [0, 8], sizes = [8, 8], strides = [1, 1]} : vector<8x32xbf16> to vector<8x8xbf16>
    %cst_18 = arith.constant dense<0.000000e+00> : vector<8x8xf32>
    %30 = tpu.matmul %27, %28, %cst_18 {dimension_numbers = #tpu.dot_dimension_numbers<[1], [1], [0], [0], [0, 0, 1, 0], [], []>} : vector<8x8xbf16>, vector<8x8xbf16>, vector<8x8xf32> -> vector<8x8xf32>
    %cst_19 = arith.constant dense<0xFF800000> : vector<8xf32>
    %31 = vector.multi_reduction <maximumf>, %30, %cst_19 [1] : vector<8x8xf32> to vector<8xf32>
    %32 = vector.shape_cast %31 : vector<8xf32> to vector<8x1xf32>
    %33 = vector.broadcast %32 : vector<8x1xf32> to vector<8x8xf32>
    %34 = arith.subf %30, %33 : vector<8x8xf32>
    %35 = math.exp %34 : vector<8x8xf32>
    %cst_20 = arith.constant dense<0.000000e+00> : vector<8xf32>
    %36 = vector.multi_reduction <add>, %35, %cst_20 [1] : vector<8x8xf32> to vector<8xf32>
    %37 = vector.shape_cast %36 : vector<8xf32> to vector<8x1xf32>
    %38 = tpu.reciprocal %37 {approx = true} : vector<8x1xf32> -> vector<8x1xf32>
    %39 = vector.broadcast %38 : vector<8x1xf32> to vector<8x8xf32>
    %40 = arith.mulf %35, %39 : vector<8x8xf32>
    %41 = arith.truncf %40 : vector<8x8xf32> to vector<8x8xbf16>
    %cst_21 = arith.constant dense<0.000000e+00> : vector<8x8xf32>
    %42 = tpu.matmul %41, %29, %cst_21 {dimension_numbers = #tpu.dot_dimension_numbers<[1], [0], [0], [1], [0, 0, 1, 1], [], []>} : vector<8x8xbf16>, vector<8x8xbf16>, vector<8x8xf32> -> vector<8x8xf32>
    %c0_22 = arith.constant 0 : index
    %c8 = arith.constant 8 : index
    %43 = vector.load %arg6[%c0_22, %c8] : memref<8x32xf32, #tpu.memory_space<vmem>>, vector<8x8xf32>
    tpu.vector_store %arg6[%c0_22, %c8], %42 {strides = array<i32>} : memref<8x32xf32, #tpu.memory_space<vmem>>, vector<8x8xf32>,
    %44 = vector.extract_strided_slice %1 {offsets = [0, 16], sizes = [8, 8], strides = [1, 1]} : vector<8x32xbf16> to vector<8x8xbf16>
    %cst_23 = arith.constant 3.535160e-01 : bf16
    %45 = vector.broadcast %cst_23 : bf16 to vector<8x8xbf16>
    %46 = arith.mulf %44, %45 : vector<8x8xbf16>
    %47 = vector.extract_strided_slice %3 {offsets = [0, 16], sizes = [8, 8], strides = [1, 1]} : vector<8x32xbf16> to vector<8x8xbf16>
    %48 = vector.extract_strided_slice %5 {offsets = [0, 16], sizes = [8, 8], strides = [1, 1]} : vector<8x32xbf16> to vector<8x8xbf16>
    %cst_24 = arith.constant dense<0.000000e+00> : vector<8x8xf32>
    %49 = tpu.matmul %46, %47, %cst_24 {dimension_numbers = #tpu.dot_dimension_numbers<[1], [1], [0], [0], [0, 0, 1, 0], [], []>} : vector<8x8xbf16>, vector<8x8xbf16>, vector<8x8xf32> -> vector<8x8xf32>
    %cst_25 = arith.constant dense<0xFF800000> : vector<8xf32>
    %50 = vector.multi_reduction <maximumf>, %49, %cst_25 [1] : vector<8x8xf32> to vector<8xf32>
    %51 = vector.shape_cast %50 : vector<8xf32> to vector<8x1xf32>
    %52 = vector.broadcast %51 : vector<8x1xf32> to vector<8x8xf32>
    %53 = arith.subf %49, %52 : vector<8x8xf32>
    %54 = math.exp %53 : vector<8x8xf32>
    %cst_26 = arith.constant dense<0.000000e+00> : vector<8xf32>
    %55 = vector.multi_reduction <add>, %54, %cst_26 [1] : vector<8x8xf32> to vector<8xf32>
    %56 = vector.shape_cast %55 : vector<8xf32> to vector<8x1xf32>
    %57 = tpu.reciprocal %56 {approx = true} : vector<8x1xf32> -> vector<8x1xf32>
    %58 = vector.broadcast %57 : vector<8x1xf32> to vector<8x8xf32>
    %59 = arith.mulf %54, %58 : vector<8x8xf32>
    %60 = arith.truncf %59 : vector<8x8xf32> to vector<8x8xbf16>
    %cst_27 = arith.constant dense<0.000000e+00> : vector<8x8xf32>
    %61 = tpu.matmul %60, %48, %cst_27 {dimension_numbers = #tpu.dot_dimension_numbers<[1], [0], [0], [1], [0, 0, 1, 1], [], []>} : vector<8x8xbf16>, vector<8x8xbf16>, vector<8x8xf32> -> vector<8x8xf32>
    %c0_28 = arith.constant 0 : index
    %c16 = arith.constant 16 : index
    %62 = vector.load %arg6[%c0_28, %c16] : memref<8x32xf32, #tpu.memory_space<vmem>>, vector<8x8xf32>
    tpu.vector_store %arg6[%c0_28, %c16], %61 {strides = array<i32>} : memref<8x32xf32, #tpu.memory_space<vmem>>, vector<8x8xf32>,
    %63 = vector.extract_strided_slice %1 {offsets = [0, 24], sizes = [8, 8], strides = [1, 1]} : vector<8x32xbf16> to vector<8x8xbf16>
    %cst_29 = arith.constant 3.535160e-01 : bf16
    %64 = vector.broadcast %cst_29 : bf16 to vector<8x8xbf16>
    %65 = arith.mulf %63, %64 : vector<8x8xbf16>
    %66 = vector.extract_strided_slice %3 {offsets = [0, 24], sizes = [8, 8], strides = [1, 1]} : vector<8x32xbf16> to vector<8x8xbf16>
    %67 = vector.extract_strided_slice %5 {offsets = [0, 24], sizes = [8, 8], strides = [1, 1]} : vector<8x32xbf16> to vector<8x8xbf16>
    %cst_30 = arith.constant dense<0.000000e+00> : vector<8x8xf32>
    %68 = tpu.matmul %65, %66, %cst_30 {dimension_numbers = #tpu.dot_dimension_numbers<[1], [1], [0], [0], [0, 0, 1, 0], [], []>} : vector<8x8xbf16>, vector<8x8xbf16>, vector<8x8xf32> -> vector<8x8xf32>
    %cst_31 = arith.constant dense<0xFF800000> : vector<8xf32>
    %69 = vector.multi_reduction <maximumf>, %68, %cst_31 [1] : vector<8x8xf32> to vector<8xf32>
    %70 = vector.shape_cast %69 : vector<8xf32> to vector<8x1xf32>
    %71 = vector.broadcast %70 : vector<8x1xf32> to vector<8x8xf32>
    %72 = arith.subf %68, %71 : vector<8x8xf32>
    %73 = math.exp %72 : vector<8x8xf32>
    %cst_32 = arith.constant dense<0.000000e+00> : vector<8xf32>
    %74 = vector.multi_reduction <add>, %73, %cst_32 [1] : vector<8x8xf32> to vector<8xf32>
    %75 = vector.shape_cast %74 : vector<8xf32> to vector<8x1xf32>
    %76 = tpu.reciprocal %75 {approx = true} : vector<8x1xf32> -> vector<8x1xf32>
    %77 = vector.broadcast %76 : vector<8x1xf32> to vector<8x8xf32>
    %78 = arith.mulf %73, %77 : vector<8x8xf32>
    %79 = arith.truncf %78 : vector<8x8xf32> to vector<8x8xbf16>
    %cst_33 = arith.constant dense<0.000000e+00> : vector<8x8xf32>
    %80 = tpu.matmul %79, %67, %cst_33 {dimension_numbers = #tpu.dot_dimension_numbers<[1], [0], [0], [1], [0, 0, 1, 1], [], []>} : vector<8x8xbf16>, vector<8x8xbf16>, vector<8x8xf32> -> vector<8x8xf32>
    %c0_34 = arith.constant 0 : index
    %c24 = arith.constant 24 : index
    %81 = vector.load %arg6[%c0_34, %c24] : memref<8x32xf32, #tpu.memory_space<vmem>>, vector<8x8xf32>
    tpu.vector_store %arg6[%c0_34, %c24], %80 {strides = array<i32>} : memref<8x32xf32, #tpu.memory_space<vmem>>, vector<8x8xf32>,
    %c0_35 = arith.constant 0 : index
    %c0_36 = arith.constant 0 : index
    %82 = vector.load %arg6[%c0_35, %c0_36] : memref<8x32xf32, #tpu.memory_space<vmem>>, vector<8x32xf32>
    %83 = arith.truncf %82 : vector<8x32xf32> to vector<8x32xbf16>
    %c0_37 = arith.constant 0 : index
    %c0_38 = arith.constant 0 : index
    %c0_39 = arith.constant 0 : index
    %84 = vector.load %arg5[%c0_37, %c0_38, %c0_39] : memref<1x8x32xbf16, #tpu.memory_space<vmem>>, vector<1x8x32xbf16>
    %85 = vector.shape_cast %84 : vector<1x8x32xbf16> to vector<8x32xbf16>
    %86 = vector.shape_cast %83 : vector<8x32xbf16> to vector<1x8x32xbf16>
    tpu.vector_store %arg5[%c0_37, %c0_38, %c0_39], %86 {strides = array<i32>} : memref<1x8x32xbf16, #tpu.memory_space<vmem>>, vector<1x8x32xbf16>,
    return
  }
  func.func @transform_0(%arg0: i32, %arg1: i32) -> (i32, i32, i32, i32) {
    %c0_i32 = arith.constant 0 : i32
    %c0_i32_0 = arith.constant 0 : i32
    %c0_i32_1 = arith.constant 0 : i32
    return %c0_i32, %arg0, %arg1, %c0_i32_0 : i32, i32, i32, i32
  }
  func.func @transform_1(%arg0: i32, %arg1: i32) -> (i32, i32, i32, i32) {
    %c0_i32 = arith.constant 0 : i32
    %c0_i32_0 = arith.constant 0 : i32
    %c0_i32_1 = arith.constant 0 : i32
    %c0_i32_2 = arith.constant 0 : i32
    return %c0_i32, %arg0, %c0_i32_0, %c0_i32_1 : i32, i32, i32, i32
  }
  func.func @transform_2(%arg0: i32, %arg1: i32) -> (i32, i32, i32, i32) {
    %c1_i32 = arith.constant 1 : i32
    %c0_i32 = arith.constant 0 : i32
    %c0_i32_0 = arith.constant 0 : i32
    %c0_i32_1 = arith.constant 0 : i32
    return %c1_i32, %arg0, %c0_i32, %c0_i32_0 : i32, i32, i32, i32
  }
  func.func @transform_3(%arg0: i32, %arg1: i32) -> (i32, i32, i32) {
    %c0_i32 = arith.constant 0 : i32
    %c0_i32_0 = arith.constant 0 : i32
    return %arg0, %arg1, %c0_i32 : i32, i32, i32
  }
}

module attributes {stable_mosaic.version = 11 : i64} {
  func.func @_linear_add_ln_kernel(%arg0: i32, %arg1: i32, %arg2: memref<16x64xbf16, #tpu.memory_space<vmem>>, %arg3: memref<64x32xbf16, #tpu.memory_space<vmem>>, %arg4: memref<1x32xf32, #tpu.memory_space<vmem>>, %arg5: memref<16x32xf32, #tpu.memory_space<vmem>>, %arg6: memref<1x32xf32, #tpu.memory_space<vmem>>, %arg7: memref<1x32xf32, #tpu.memory_space<vmem>>, %arg8: memref<16x32xf32, #tpu.memory_space<vmem>>, %arg9: memref<16x32xf32, #tpu.memory_space<vmem>>) attributes {dimension_semantics = [#tpu.dimension_semantics<parallel>, #tpu.dimension_semantics<arbitrary>], iteration_bounds = array<i64: 1, 1>, scalar_prefetch = 0 : i64, scratch_operands = 1 : i64, tpu.core_type = #tpu.core_type<tc>, window_params = [{transform_indices = @transform_0, window_bounds = array<i64: 16, 64>}, {transform_indices = @transform_1, window_bounds = array<i64: 64, 32>}, {pipeline_mode = #tpu.pipeline_mode<synchronous>, transform_indices = @transform_2, window_bounds = array<i64: 1, 32>}, {transform_indices = @transform_3, window_bounds = array<i64: 16, 32>}, {pipeline_mode = #tpu.pipeline_mode<synchronous>, transform_indices = @transform_4, window_bounds = array<i64: 1, 32>}, {pipeline_mode = #tpu.pipeline_mode<synchronous>, transform_indices = @transform_5, window_bounds = array<i64: 1, 32>}, {transform_indices = @transform_6, window_bounds = array<i64: 16, 32>}]} {
    %c0_i32 = arith.constant 0 : i32
    %0 = arith.cmpi eq, %arg1, %c0_i32 : i32
    %1 = arith.extui %0 : i1 to i32
    %c0_i32_0 = arith.constant 0 : i32
    %2 = arith.cmpi ne, %1, %c0_i32_0 : i32
    scf.if %2 {
      %cst_10 = arith.constant 0.000000e+00 : f32
      %12 = vector.broadcast %cst_10 : f32 to vector<16x32xf32>
      %c0_11 = arith.constant 0 : index
      %c0_12 = arith.constant 0 : index
      %13 = vector.load %arg9[%c0_11, %c0_12] : memref<16x32xf32, #tpu.memory_space<vmem>>, vector<16x32xf32>
      tpu.vector_store %arg9[%c0_11, %c0_12], %12 {strides = array<i32>} : memref<16x32xf32, #tpu.memory_space<vmem>>, vector<16x32xf32>,
    } else {
    }
    %c0 = arith.constant 0 : index
    %c0_1 = arith.constant 0 : index
    %3 = vector.load %arg9[%c0, %c0_1] : memref<16x32xf32, #tpu.memory_space<vmem>>, vector<16x32xf32>
    %c0_2 = arith.constant 0 : index
    %c0_3 = arith.constant 0 : index
    %4 = vector.load %arg2[%c0_2, %c0_3] : memref<16x64xbf16, #tpu.memory_space<vmem>>, vector<16x64xbf16>
    %c0_4 = arith.constant 0 : index
    %c0_5 = arith.constant 0 : index
    %5 = vector.load %arg3[%c0_4, %c0_5] : memref<64x32xbf16, #tpu.memory_space<vmem>>, vector<64x32xbf16>
    %cst = arith.constant dense<0.000000e+00> : vector<16x32xf32>
    %6 = tpu.matmul %4, %5, %cst {dimension_numbers = #tpu.dot_dimension_numbers<[1], [0], [0], [1], [0, 0, 1, 1], [], []>} : vector<16x64xbf16>, vector<64x32xbf16>, vector<16x32xf32> -> vector<16x32xf32>
    %7 = arith.addf %3, %6 : vector<16x32xf32>
    %c0_6 = arith.constant 0 : index
    %c0_7 = arith.constant 0 : index
    %8 = vector.load %arg9[%c0_6, %c0_7] : memref<16x32xf32, #tpu.memory_space<vmem>>, vector<16x32xf32>
    tpu.vector_store %arg9[%c0_6, %c0_7], %7 {strides = array<i32>} : memref<16x32xf32, #tpu.memory_space<vmem>>, vector<16x32xf32>,
    %c0_i32_8 = arith.constant 0 : i32
    %9 = arith.cmpi eq, %arg1, %c0_i32_8 : i32
    %10 = arith.extui %9 : i1 to i32
    %c0_i32_9 = arith.constant 0 : i32
    %11 = arith.cmpi ne, %10, %c0_i32_9 : i32
    scf.if %11 {
      %c0_10 = arith.constant 0 : index
      %c0_11 = arith.constant 0 : index
      %12 = vector.load %arg9[%c0_10, %c0_11] : memref<16x32xf32, #tpu.memory_space<vmem>>, vector<16x32xf32>
      %c0_12 = arith.constant 0 : index
      %c0_13 = arith.constant 0 : index
      %13 = vector.load %arg4[%c0_12, %c0_13] : memref<1x32xf32, #tpu.memory_space<vmem>>, vector<1x32xf32>
      %14 = vector.broadcast %13 : vector<1x32xf32> to vector<16x32xf32>
      %15 = arith.addf %12, %14 : vector<16x32xf32>
      %c0_14 = arith.constant 0 : index
      %c0_15 = arith.constant 0 : index
      %16 = vector.load %arg5[%c0_14, %c0_15] : memref<16x32xf32, #tpu.memory_space<vmem>>, vector<16x32xf32>
      %17 = arith.addf %15, %16 : vector<16x32xf32>
      %cst_16 = arith.constant dense<0.000000e+00> : vector<16xf32>
      %18 = vector.multi_reduction <add>, %17, %cst_16 [1] : vector<16x32xf32> to vector<16xf32>
      %19 = vector.shape_cast %18 : vector<16xf32> to vector<16x1xf32>
      %cst_17 = arith.constant 3.200000e+01 : f32
      %20 = vector.broadcast %cst_17 : f32 to vector<16x1xf32>
      %21 = arith.divf %19, %20 : vector<16x1xf32>
      %22 = arith.mulf %17, %17 : vector<16x32xf32>
      %cst_18 = arith.constant dense<0.000000e+00> : vector<16xf32>
      %23 = vector.multi_reduction <add>, %22, %cst_18 [1] : vector<16x32xf32> to vector<16xf32>
      %24 = vector.shape_cast %23 : vector<16xf32> to vector<16x1xf32>
      %cst_19 = arith.constant 3.200000e+01 : f32
      %25 = vector.broadcast %cst_19 : f32 to vector<16x1xf32>
      %26 = arith.divf %24, %25 : vector<16x1xf32>
      %27 = arith.mulf %21, %21 : vector<16x1xf32>
      %28 = arith.subf %26, %27 : vector<16x1xf32>
      %29 = vector.broadcast %21 : vector<16x1xf32> to vector<16x32xf32>
      %30 = arith.subf %17, %29 : vector<16x32xf32>
      %cst_20 = arith.constant 9.99999974E-6 : f32
      %31 = vector.broadcast %cst_20 : f32 to vector<16x1xf32>
      %32 = arith.addf %28, %31 : vector<16x1xf32>
      %33 = math.rsqrt %32 : vector<16x1xf32>
      %34 = vector.broadcast %33 : vector<16x1xf32> to vector<16x32xf32>
      %35 = arith.mulf %30, %34 : vector<16x32xf32>
      %c0_21 = arith.constant 0 : index
      %c0_22 = arith.constant 0 : index
      %36 = vector.load %arg6[%c0_21, %c0_22] : memref<1x32xf32, #tpu.memory_space<vmem>>, vector<1x32xf32>
      %37 = vector.broadcast %36 : vector<1x32xf32> to vector<16x32xf32>
      %38 = arith.mulf %35, %37 : vector<16x32xf32>
      %c0_23 = arith.constant 0 : index
      %c0_24 = arith.constant 0 : index
      %39 = vector.load %arg7[%c0_23, %c0_24] : memref<1x32xf32, #tpu.memory_space<vmem>>, vector<1x32xf32>
      %40 = vector.broadcast %39 : vector<1x32xf32> to vector<16x32xf32>
      %41 = arith.addf %38, %40 : vector<16x32xf32>
      %c0_25 = arith.constant 0 : index
      %c0_26 = arith.constant 0 : index
      %42 = vector.load %arg8[%c0_25, %c0_26] : memref<16x32xf32, #tpu.memory_space<vmem>>, vector<16x32xf32>
      tpu.vector_store %arg8[%c0_25, %c0_26], %41 {strides = array<i32>} : memref<16x32xf32, #tpu.memory_space<vmem>>, vector<16x32xf32>,
    } else {
    }
    return
  }
  func.func @transform_0(%arg0: i32, %arg1: i32) -> (i32, i32) {
    %c0_i32 = arith.constant 0 : i32
    return %arg0, %arg1 : i32, i32
  }
  func.func @transform_1(%arg0: i32, %arg1: i32) -> (i32, i32) {
    %c0_i32 = arith.constant 0 : i32
    %c0_i32_0 = arith.constant 0 : i32
    return %arg1, %c0_i32 : i32, i32
  }
  func.func @transform_2(%arg0: i32, %arg1: i32) -> (i32, i32) {
    %c0_i32 = arith.constant 0 : i32
    %c0_i32_0 = arith.constant 0 : i32
    %c0_i32_1 = arith.constant 0 : i32
    return %c0_i32, %c0_i32_0 : i32, i32
  }
  func.func @transform_3(%arg0: i32, %arg1: i32) -> (i32, i32) {
    %c0_i32 = arith.constant 0 : i32
    %c0_i32_0 = arith.constant 0 : i32
    return %arg0, %c0_i32 : i32, i32
  }
  func.func @transform_4(%arg0: i32, %arg1: i32) -> (i32, i32) {
    %c0_i32 = arith.constant 0 : i32
    %c0_i32_0 = arith.constant 0 : i32
    %c0_i32_1 = arith.constant 0 : i32
    return %c0_i32, %c0_i32_0 : i32, i32
  }
  func.func @transform_5(%arg0: i32, %arg1: i32) -> (i32, i32) {
    %c0_i32 = arith.constant 0 : i32
    %c0_i32_0 = arith.constant 0 : i32
    %c0_i32_1 = arith.constant 0 : i32
    return %c0_i32, %c0_i32_0 : i32, i32
  }
  func.func @transform_6(%arg0: i32, %arg1: i32) -> (i32, i32) {
    %c0_i32 = arith.constant 0 : i32
    %c0_i32_0 = arith.constant 0 : i32
    return %arg0, %c0_i32 : i32, i32
  }
}

</mosaic_0001>

<llo_original>
// kernel: decoder_layer.9
$region0: #{decoder_layer.9}
  #allocation0 [shape = 'u32[]', space=smem, size = 0x4, offset = 0x4, fixed_abs, tag = 'smem constant byte address 0x4 - core index']
  #allocation1 [shape = 'u32[144,128]{1,0:T(1,128)}', space=vmem, size = 0x12000, scoped, tag = 'internal scratch']
  #allocation2 [shape = 'f32[16,32]{1,0:T(8,128)}', space=vmem, size = 0x2000, scoped, tag = 'scratch operand']
  %s0 = inlined_call_operand.vmem [shape: f32[16,32], index: 0, kind: input, shape index: {}]
  %s1 = inlined_call_operand.vmem [shape: bf16[3,32,32], index: 1, kind: input, shape index: {}]
  %s2 = inlined_call_operand.vmem [shape: f32[3,1,32], index: 2, kind: input, shape index: {}]
  %s3 = inlined_call_operand.vmem [shape: bf16[3,16,32], index: 3, kind: output, shape index: {}]
  %s4 = sld [smem:[#allocation0]]
  $region53: #{decoder_layer.9} parent=0
    _
  %s6 = ssub.s32 1, %s4
  %s7 = scalar_select 0, %s6, %s4
  loop: start=0, step=1, limit=5
  $region2: #{decoder_layer.9} parent=0 // loop_pre_header
    _
  $region3: #{decoder_layer.9} parent=0 // loop_header
    %s9 = sphi 0, %s13
    %p10 = scmp.ge.s32.totalorder %s9, 5
    %s16 = sphi 0, %s35
    %s17 = sphi 0, %s31
    %s18 = sphi 0, %s27
    %s19 = sphi 0, %s16
    %s20 = sphi 0, %s17
    %s21 = sphi 0, %s18
    %s22 = sphi 0, %s19
    %s23 = sphi 0, %s20
    %s24 = sphi 0, %s21
    %s40 = sphi 0, %s42
    %s43 = sphi 0, %s40
    %s44 = sphi 0, %s43
    %s60 = sphi 0, %s44
    %s68 = sphi 0, %s70
    %s71 = sphi 0, %s68
    %s72 = sphi 0, %s71
    %s88 = sphi 0, %s72
    %s94 = sphi 0, %s96
    %s97 = sphi 0, %s94
    %s98 = sphi 0, %s97
    %s114 = sphi 0, %s98
    %s122 = sphi 0, %s124
    %s125 = sphi 0, %s122
    %s126 = sphi 0, %s125
    %s142 = sphi 0, %s126
  $region4: #{decoder_layer.9} parent=0 // loop_header_branch
    %12 = sbr.rel (%p10) target = $region8
  $region5: #{decoder_layer.9} parent=0 // loop_body
    %s14 = ssub.s32 %s9, 1
    %s15 = ssub.s32 %s9, 2
    %s25 = sadd.s32 1, %s18
    %p26 = scmp.ge.s32.totalorder %s25, 1
    %s27 = scalar_select %p26, 0, %s25
    %s28 = sadd.s32 1, %s17
    %s29 = scalar_select %p26, %s28, %s17
    %p30 = scmp.ge.s32.totalorder %s29, 3
    %s31 = scalar_select %p30, 0, %s29
    %s32 = sadd.s32 1, %s16
    %s33 = scalar_select %p30, %s32, %s16
    %p34 = scmp.ge.s32.totalorder %s33, 1
    %s35 = scalar_select %p34, 0, %s33
    %s36 = ssub.s32 %s16, %s35
    %s37 = ssub.s32 %s18, %s27
    %s38 = sor.u32 %s36, %s37
    %p39 = scmp.eq.s32.totalorder %s38, 0
    %s41 = sadd.s32 %s40, 1
    %s42 = scalar_select %p39, %s40, %s41
    %p45 = pneg %p39
    %p46 = scmp.eq.s32.totalorder %s9, 2
    %p47 = por %p45, %p46
    %p48 = scmp.ne.s32.totalorder %s40, %s43
    %p49 = scmp.eq.s32.totalorder %s9, 0
    %p50 = por %p48, %p49
    %p51 = scmp.ne.s32.totalorder %s40, %s43
    %p52 = scmp.eq.s32.totalorder %s14, 2
    %p53 = por %p51, %p52
    %p54 = scmp.ne.s32.totalorder %s43, %s44
    %p55 = scmp.eq.s32.totalorder %s14, 0
    %p56 = por %p54, %p55
    %p57 = scmp.ne.s32.totalorder %s43, %s44
    %p58 = scmp.eq.s32.totalorder %s15, 2
    %p59 = por %p57, %p58
    %p61 = scmp.ne.s32.totalorder %s44, %s60
    %p62 = scmp.eq.s32.totalorder %s15, 0
    %p63 = por %p61, %p62
    %s64 = ssub.s32 %s17, %s31
    %s65 = ssub.s32 %s18, %s27
    %s66 = sor.u32 %s64, %s65
    %p67 = scmp.eq.s32.totalorder %s66, 0
    %s69 = sadd.s32 %s68, 1
    %s70 = scalar_select %p67, %s68, %s69
    %p73 = pneg %p67
    %p74 = scmp.eq.s32.totalorder %s9, 2
    %p75 = por %p73, %p74
    %p76 = scmp.ne.s32.totalorder %s68, %s71
    %p77 = scmp.eq.s32.totalorder %s9, 0
    %p78 = por %p76, %p77
    %p79 = scmp.ne.s32.totalorder %s68, %s71
    %p80 = scmp.eq.s32.totalorder %s14, 2
    %p81 = por %p79, %p80
    %p82 = scmp.ne.s32.totalorder %s71, %s72
    %p83 = scmp.eq.s32.totalorder %s14, 0
    %p84 = por %p82, %p83
    %p85 = scmp.ne.s32.totalorder %s71, %s72
    %p86 = scmp.eq.s32.totalorder %s15, 2
    %p87 = por %p85, %p86
    %p89 = scmp.ne.s32.totalorder %s72, %s88
    %p90 = scmp.eq.s32.totalorder %s15, 0
    %p91 = por %p89, %p90
    %s92 = ssub.s32 %s17, %s31
    %p93 = scmp.eq.s32.totalorder %s92, 0
    %s95 = sadd.s32 %s94, 1
    %s96 = scalar_select %p93, %s94, %s95
    %p99 = pneg %p93
    %p100 = scmp.eq.s32.totalorder %s9, 2
    %p101 = por %p99, %p100
    %p102 = scmp.ne.s32.totalorder %s94, %s97
    %p103 = scmp.eq.s32.totalorder %s9, 0
    %p104 = por %p102, %p103
    %p105 = scmp.ne.s32.totalorder %s94, %s97
    %p106 = scmp.eq.s32.totalorder %s14, 2
    %p107 = por %p105, %p106
    %p108 = scmp.ne.s32.totalorder %s97, %s98
    %p109 = scmp.eq.s32.totalorder %s14, 0
    %p110 = por %p108, %p109
    %p111 = scmp.ne.s32.totalorder %s97, %s98
    %p112 = scmp.eq.s32.totalorder %s15, 2
    %p113 = por %p111, %p112
    %p115 = scmp.ne.s32.totalorder %s98, %s114
    %p116 = scmp.eq.s32.totalorder %s15, 0
    %p117 = por %p115, %p116
    %s118 = ssub.s32 %s17, %s31
    %s119 = ssub.s32 %s16, %s35
    %s120 = sor.u32 %s118, %s119
    %p121 = scmp.eq.s32.totalorder %s120, 0
    %s123 = sadd.s32 %s122, 1
    %s124 = scalar_select %p121, %s122, %s123
    %p127 = pneg %p121
    %p128 = scmp.eq.s32.totalorder %s9, 2
    %p129 = por %p127, %p128
    %p130 = scmp.ne.s32.totalorder %s122, %s125
    %p131 = scmp.eq.s32.totalorder %s9, 0
    %p132 = por %p130, %p131
    %p133 = scmp.ne.s32.totalorder %s122, %s125
    %p134 = scmp.eq.s32.totalorder %s14, 2
    %p135 = por %p133, %p134
    %p136 = scmp.ne.s32.totalorder %s125, %s126
    %p137 = scmp.eq.s32.totalorder %s14, 0
    %p138 = por %p136, %p137
    %p139 = scmp.ne.s32.totalorder %s125, %s126
    %p140 = scmp.eq.s32.totalorder %s15, 2
    %p141 = por %p139, %p140
    %p143 = scmp.ne.s32.totalorder %s126, %s142
    %p144 = scmp.eq.s32.totalorder %s15, 0
    %p145 = por %p143, %p144
    %p146 = scmp.le.s32.totalorder 1, %s9
    %p147 = scmp.lt.s32.totalorder %s9, 4
    %p148 = pnand %p146, %p147
    %p149 = pneg %p148
    // Predicated region
    $region9: #{decoder_layer.9} parent=5 // pred_check
      _
    $region10: #{decoder_layer.9} parent=5 // pred_check_branch
      %151 = sbr.rel (%p148) target = $region12
    $region11: #{decoder_layer.9} parent=5 // pred_region
      %s152 = ssub.s32 %s9, 1
      // Predicated region
      $region13: #{decoder_layer.9} parent=11 // pred_check
        %p153 = pneg %p56
      $region14: #{decoder_layer.9} parent=11 // pred_check_branch
        %155 = sbr.rel (%p153) target = $region16
      $region15: #{decoder_layer.9} parent=11 // pred_region
        %s156 = smul.u32 2, %s19
        %p157 = scmp.lt.s32.totalorder %s156, 1
        %s158 = scalar_select %p157, %s156, 1
        %p159 = scmp.lt.s32.totalorder %s21, 0
        %s160 = scalar_select %p159, %s21, 0
        %s161 = sadd.s32 %s160, %s158
        %s162 = smul.addr %s161, 8
        %s163 = scalar_lea.vmem %s0, %s162
        %s164 = smul.u32 2, %s19
      $region16: #{decoder_layer.9} parent=11 // pred_fallthru
        _
    $region12: #{decoder_layer.9} parent=5 // pred_fallthru
      _
    %p165 = scmp.lt.s32.totalorder %s9, 3
    // Predicated region
    $region17: #{decoder_layer.9} parent=5 // pred_check
      %p166 = pneg %p165
    $region18: #{decoder_layer.9} parent=5 // pred_check_branch
      %168 = sbr.rel (%p166) target = $region20
    $region19: #{decoder_layer.9} parent=5 // pred_region
      // Predicated region
      $region21: #{decoder_layer.9} parent=19 // pred_check
        %p169 = pneg %p78
      $region22: #{decoder_layer.9} parent=19 // pred_check_branch
        %171 = sbr.rel (%p169) target = $region24
      $region23: #{decoder_layer.9} parent=19 // pred_region
        %s172 = smul.u32 4, %s18
        %p173 = scmp.lt.s32.totalorder %s17, 2
        %s174 = scalar_select %p173, %s17, 2
        %p175 = scmp.lt.s32.totalorder %s172, 3
        %s176 = scalar_select %p175, %s172, 3
        %s177 = smul.addr %s174, 4
        %s178 = sadd.s32 %s176, %s177
        %s179 = smul.addr %s178, 4
        %s180 = scalar_lea.vmem %s1, %s179
        %s181 = smul.u32 4, %s18
      $region24: #{decoder_layer.9} parent=19 // pred_fallthru
        _
      // Predicated region
      $region25: #{decoder_layer.9} parent=19 // pred_check
        %p182 = pneg %p104
      $region26: #{decoder_layer.9} parent=19 // pred_check_branch
        %184 = sbr.rel (%p182) target = $region28
      $region27: #{decoder_layer.9} parent=19 // pred_region
        %p185 = scmp.lt.s32.totalorder %s17, 2
        %s186 = scalar_select %p185, %s17, 2
        %s187 = scalar_lea.vmem %s2, %s186
      $region28: #{decoder_layer.9} parent=19 // pred_fallthru
        _
    $region20: #{decoder_layer.9} parent=5 // pred_fallthru
      _
    %p188 = scmp.le.s32.totalorder 1, %s9
    %p189 = scmp.lt.s32.totalorder %s9, 4
    %p190 = pnand %p188, %p189
    %p191 = pneg %p190
    // Predicated region
    $region29: #{decoder_layer.9} parent=5 // pred_check
      _
    $region30: #{decoder_layer.9} parent=5 // pred_check_branch
      %193 = sbr.rel (%p190) target = $region32
    $region31: #{decoder_layer.9} parent=5 // pred_region
      %s194 = ssub.s32 %s9, 1
      %s195 = smul.u32 2, %s19
      %p196 = scmp.lt.s32.totalorder %s195, 1
      %s197 = scalar_select %p196, %s195, 1
      %p198 = scmp.lt.s32.totalorder %s21, 0
      %s199 = scalar_select %p198, %s21, 0
      %s200 = sadd.s32 %s199, %s197
      %s201 = smul.addr %s200, 8
      %s202 = scalar_lea.vmem %s0, %s201
      %p203 = pneg %p56
      %p204 = pneg %p53
      %s205 = smul.u32 4, %s21
      %p206 = scmp.lt.s32.totalorder %s20, 2
      %s207 = scalar_select %p206, %s20, 2
      %p208 = scmp.lt.s32.totalorder %s205, 3
      %s209 = scalar_select %p208, %s205, 3
      %s210 = smul.addr %s207, 4
      %s211 = sadd.s32 %s209, %s210
      %s212 = smul.addr %s211, 4
      %s213 = scalar_lea.vmem %s1, %s212
      %p214 = pneg %p84
      %p215 = pneg %p81
      %p216 = scmp.lt.s32.totalorder %s20, 2
      %s217 = scalar_select %p216, %s20, 2
      %s218 = scalar_lea.vmem %s2, %s217
      %p219 = pneg %p110
      %p220 = pneg %p107
      %p221 = pneg %p138
      %p222 = pneg %p135
      %s223 = smul.u32 2, %s19
      %p224 = scmp.lt.s32.totalorder %s20, 2
      %s225 = scalar_select %p224, %s20, 2
      %p226 = scmp.lt.s32.totalorder %s223, 1
      %s227 = scalar_select %p226, %s223, 1
      %s228 = smul.addr %s225, 2
      %s229 = sadd.s32 %s227, %s228
      %s230 = smul.addr %s229, 4
      %s231 = scalar_lea.vmem %s3, %s230
      %s232 = smul.u32 2, %s19
      %p233 = scmp.lt.s32.totalorder %s232, 1
      %s234 = scalar_select %p233, %s232, 1
      %p235 = scmp.lt.s32.totalorder %s21, 0
      %s236 = scalar_select %p235, %s21, 0
      %s237 = sadd.s32 %s236, %s234
      %s238 = smul.addr %s237, 8
      %s239 = scalar_lea.vmem %s0, %s238
      %s240 = smul.u32 2, %s19
      %s241 = smul.u32 4, %s21
      %p242 = scmp.lt.s32.totalorder %s20, 2
      %s243 = scalar_select %p242, %s20, 2
      %p244 = scmp.lt.s32.totalorder %s241, 3
      %s245 = scalar_select %p244, %s241, 3
      %s246 = smul.addr %s243, 4
      %s247 = sadd.s32 %s245, %s246
      %s248 = smul.addr %s247, 4
      %s249 = scalar_lea.vmem %s1, %s248
      %s250 = smul.u32 4, %s21
      %p251 = scmp.lt.s32.totalorder %s20, 2
      %s252 = scalar_select %p251, %s20, 2
      %s253 = scalar_lea.vmem %s2, %s252
      %s254 = smul.u32 2, %s19
      %p255 = scmp.lt.s32.totalorder %s20, 2
      %s256 = scalar_select %p255, %s20, 2
      %p257 = scmp.lt.s32.totalorder %s254, 1
      %s258 = scalar_select %p257, %s254, 1
      %s259 = smul.addr %s256, 2
      %s260 = sadd.s32 %s258, %s259
      %s261 = smul.addr %s260, 4
      %s262 = scalar_lea.vmem %s3, %s261
      %s263 = smul.u32 2, %s19
      %p265 = scmp.eq.s32.totalorder %s21, 0
      // Predicated region
      $region33: #{decoder_layer.9} parent=31 // pred_check
        %p266 = pneg %p265
      $region34: #{decoder_layer.9} parent=31 // pred_check_branch
        %268 = sbr.rel (%p266) target = $region36
      $region35: #{decoder_layer.9} parent=31 // pred_region
        %vm269 = vcmask 261120
        %270 = vst.msk [vmem:[#allocation2] sm:$0xff] %vm269, 0.0
        %271 = vst.msk [vmem:[#allocation2 + $0x8] sm:$0xff] %vm269, 0.0
      $region36: #{decoder_layer.9} parent=31 // pred_fallthru
        _
      %v272 = vld [vmem:[#allocation2] sm:$0xff]
      %v273 = vld [vmem:[#allocation2 + $0x8] sm:$0xff]
      %v274 = vld [vmem:[%s239] sm:$0xff]
      %v275 = vld [vmem:[%s239 + $0x8] sm:$0xff]
      %v276 = vpack.c.bf16 %v275, %v274
      %v277 = vld [vmem:[%s249] sm:$0xf]
      %v278 = vld [vmem:[%s249 + $0x4] sm:$0xf]
      %v279 = vld [vmem:[%s249 + $0x8] sm:$0xf]
      %v280 = vld [vmem:[%s249 + $0xc] sm:$0xf]
      %v285 = vunpack.c.l.b16 %v277
      %v286 = vunpack.c.l.b16 %v278
      %v287 = vunpack.c.l.b16 %v279
      %v288 = vunpack.c.l.b16 %v280
      %v289 = vpack.c.b16 %v286, %v285
      %v290 = vpack.c.b16 %v288, %v287
      %vm293 = vcmask 261120
      %v295 = vsel %vm293, %v276, 0
      %297 = vmatprep.subr.bf16.mxu0 0
      %298 = vmatpush1.bf16.msra.mxu0 %v289
      %299 = vmatprep.subr.bf16.mxu0 0
      %300 = vmatpush1.bf16.msra.mxu0 %v290
      %301 = vmatprep.subr.bf16.mxu0 0
      %302 = vmatpush1.bf16.msra.mxu0 0
      %303 = vmatprep.subr.bf16.mxu0 0
      %304 = vmatpush1.bf16.msra.mxu0 0
      %305 = vmatprep.subr.bf16.mxu0 0
      %306 = vmatpush1.bf16.msra.mxu0 0
      %307 = vmatprep.subr.bf16.mxu0 0
      %308 = vmatpush1.bf16.msra.mxu0 0
      %309 = vmatprep.subr.bf16.mxu0 0
      %310 = vmatpush1.bf16.msra.mxu0 0
      %311 = vmatprep.subr.bf16.mxu0 0
      %312 = vmatpush1.bf16.msra.mxu0 0
      %313 = vmatprep.subr.bf16.mxu0 0
      %314 = vmatpush1.bf16.msra.mxu0 0
      %315 = vmatprep.subr.bf16.mxu0 0
      %316 = vmatpush1.bf16.msra.mxu0 0
      %317 = vmatprep.subr.bf16.mxu0 0
      %318 = vmatpush1.bf16.msra.mxu0 0
      %319 = vmatprep.subr.bf16.mxu0 0
      %320 = vmatpush1.bf16.msra.mxu0 0
      %321 = vmatprep.subr.bf16.mxu0 0
      %322 = vmatpush1.bf16.msra.mxu0 0
      %323 = vmatprep.subr.bf16.mxu0 0
      %324 = vmatpush1.bf16.msra.mxu0 0
      %325 = vmatprep.subr.bf16.mxu0 0
      %326 = vmatpush1.bf16.msra.mxu0 0
      %327 = vmatprep.subr.bf16.mxu0 0
      %328 = vmatpush1.bf16.msra.mxu0 0
      %329 = vmatprep.mubr.bf16.mxu0 0
      %330 = vmatmul.mubr.bf16.gmra.mrb[0].mxu0 %v295
      %v331 = vpop.f32.mrb[0].mxu0
      %v332 = vadd.f32 0.0, %v331
      %v333 = vpop.f32.mrb[0].mxu0
      %v334 = vpop.f32.mrb[0].mxu0
      %v335 = vadd.f32 0.0, %v334
      %v336 = vpop.f32.mrb[0].mxu0
      %337 = vdwg.mxu0
      %v338 = vadd.f32 %v272, %v332
      %v339 = vadd.f32 %v273, %v335
      %340 = vst.msk [vmem:[#allocation2] sm:$0xff] %vm293, %v338
      %341 = vst.msk [vmem:[#allocation2 + $0x8] sm:$0xff] %vm293, %v339
      // Predicated region
      $region37: #{decoder_layer.9} parent=31 // pred_check
        %p342 = pneg %p265
      $region38: #{decoder_layer.9} parent=31 // pred_check_branch
        %344 = sbr.rel (%p342) target = $region40
      $region39: #{decoder_layer.9} parent=31 // pred_region
        %v345 = vld [vmem:[#allocation2] sm:$0xff]
        %v346 = vld [vmem:[#allocation2 + $0x8] sm:$0xff]
        %v347 = vld [vmem:[%s253] sm:$0x1]
        %v349 = vlaneseq
        %v350 = vshrl.u32 %v349, 7
        %v351 = vsub.s32 0, %v350
        %v352 = vrot.slane %v347, %v351
        %v354 = vadd.f32 %v345, %v352
        %v355 = vadd.f32 %v346, %v352
        %v356 = vpack.c.bf16 %v355, %v354
        %v358 = vunpack.c.l.b16 %v356
        %v359 = vunpack.c.h.b16 %v356
        %v360 = vpack.c.b16 %v358, %v358
        %v361 = vpack.c.b16 %v359, %v359
        %vm364 = vcmask 257024
        %365 = vst.msk [vmem:[%s262] sm:$0xf] %vm364, %v360
        %366 = vst.msk [vmem:[%s262 + $0x4] sm:$0xf] %vm364, %v361
      $region40: #{decoder_layer.9} parent=31 // pred_fallthru
        _
      %s367 = smul.u32 2, %s19
      %p368 = scmp.lt.s32.totalorder %s20, 2
      %s369 = scalar_select %p368, %s20, 2
      %p370 = scmp.lt.s32.totalorder %s367, 1
      %s371 = scalar_select %p370, %s367, 1
      %s372 = smul.addr %s369, 2
      %s373 = sadd.s32 %s371, %s372
      %s374 = smul.addr %s373, 4
      %s375 = scalar_lea.vmem %s3, %s374
      // Predicated region
      $region41: #{decoder_layer.9} parent=31 // pred_check
        %p376 = pneg %p135
      $region42: #{decoder_layer.9} parent=31 // pred_check_branch
        %378 = sbr.rel (%p376) target = $region44
      $region43: #{decoder_layer.9} parent=31 // pred_region
        %s379 = smul.u32 2, %s19
      $region44: #{decoder_layer.9} parent=31 // pred_fallthru
        _
    $region32: #{decoder_layer.9} parent=5 // pred_fallthru
      _
    %p380 = scmp.le.s32.totalorder 2, %s9
    // Predicated region
    $region45: #{decoder_layer.9} parent=5 // pred_check
      %p381 = pneg %p380
    $region46: #{decoder_layer.9} parent=5 // pred_check_branch
      %383 = sbr.rel (%p381) target = $region48
    $region47: #{decoder_layer.9} parent=5 // pred_region
      %s384 = ssub.s32 %s9, 2
      // Predicated region
      $region49: #{decoder_layer.9} parent=47 // pred_check
        %p385 = pneg %p141
      $region50: #{decoder_layer.9} parent=47 // pred_check_branch
        %387 = sbr.rel (%p385) target = $region52
      $region51: #{decoder_layer.9} parent=47 // pred_region
        %s388 = smul.u32 2, %s22
        %p389 = scmp.lt.s32.totalorder %s23, 2
        %s390 = scalar_select %p389, %s23, 2
        %p391 = scmp.lt.s32.totalorder %s388, 1
        %s392 = scalar_select %p391, %s388, 1
        %s393 = smul.addr %s390, 2
        %s394 = sadd.s32 %s392, %s393
        %s395 = smul.addr %s394, 4
        %s396 = scalar_lea.vmem %s3, %s395
      $region52: #{decoder_layer.9} parent=47 // pred_fallthru
        _
    $region48: #{decoder_layer.9} parent=5 // pred_fallthru
      _
  $region6: #{decoder_layer.9} parent=0 // loop_footer
    %s13 = sadd.s32 1, %s9
  $region7: #{decoder_layer.9} parent=0 // loop_footer_branch
    %8 = sbr.rel target = $region3
  $region8: #{decoder_layer.9} parent=0 // loop_exit
    _

// kernel: decoder_layer.13
$region0: #{decoder_layer.13}
  #allocation0 [shape = 'u32[]', space=smem, size = 0x4, offset = 0x4, fixed_abs, tag = 'smem constant byte address 0x4 - core index']
  #allocation1 [shape = 'u32[144,128]{1,0:T(1,128)}', space=vmem, size = 0x12000, scoped, tag = 'internal scratch']
  #allocation2 [shape = 'f32[16,32]{1,0:T(8,128)}', space=vmem, size = 0x2000, scoped, tag = 'scratch operand']
  %s0 = inlined_call_operand.vmem [shape: f32[16,32], index: 0, kind: input, shape index: {}]
  %s1 = inlined_call_operand.vmem [shape: bf16[2,32,32], index: 1, kind: input, shape index: {}]
  %s2 = inlined_call_operand.hbm [shape: f32[2,1,32], index: 2, kind: input, shape index: {}]
  %s3 = inlined_call_operand.vmem [shape: bf16[2,16,32], index: 3, kind: output, shape index: {}]
  %s4 = sld [smem:[#allocation0]]
  $region57: #{decoder_layer.13} parent=0
    _
  %s6 = ssub.s32 1, %s4
  %s7 = scalar_select 0, %s6, %s4
  $region1: #{decoder_layer.13} parent=0
    #allocation3 [shape = 'u8[1024]{0}', space=vmem, size = 0x400, scoped, tag = 'input window, operand 2']
    #allocation4 [shape = 's32[2]{0}', space=sflag, size = 0x8, scoped, tag = 'scoped memory for decoder_layer.13']
    %8 = vsyncpa [#allocation4], 0
    %s9 = scalar_lea.sflag [#allocation4], 1
    %10 = vsyncpa %s9, 0
    loop: start=0, step=1, limit=4
    $region2: #{decoder_layer.13} parent=1 // loop_pre_header
      _
    $region3: #{decoder_layer.13} parent=1 // loop_header
      %s12 = sphi 0, %s16
      %p13 = scmp.ge.s32.totalorder %s12, 4
      %s19 = sphi 0, %s38
      %s20 = sphi 0, %s34
      %s21 = sphi 0, %s30
      %s22 = sphi 0, %s19
      %s23 = sphi 0, %s20
      %s24 = sphi 0, %s21
      %s25 = sphi 0, %s22
      %s26 = sphi 0, %s23
      %s27 = sphi 0, %s24
      %s43 = sphi 0, %s45
      %s46 = sphi 0, %s43
      %s47 = sphi 0, %s46
      %s63 = sphi 0, %s47
      %s71 = sphi 0, %s73
      %s74 = sphi 0, %s71
      %s75 = sphi 0, %s74
      %s91 = sphi 0, %s75
      %s97 = sphi 0, %s99
      %s100 = sphi 0, %s97
      %s101 = sphi 0, %s100
      %s117 = sphi 0, %s101
      %s125 = sphi 0, %s127
      %s128 = sphi 0, %s125
      %s129 = sphi 0, %s128
      %s145 = sphi 0, %s129
    $region4: #{decoder_layer.13} parent=1 // loop_header_branch
      %15 = sbr.rel (%p13) target = $region8
    $region5: #{decoder_layer.13} parent=1 // loop_body
      %s17 = ssub.s32 %s12, 1
      %s18 = ssub.s32 %s12, 2
      %s28 = sadd.s32 1, %s21
      %p29 = scmp.ge.s32.totalorder %s28, 1
      %s30 = scalar_select %p29, 0, %s28
      %s31 = sadd.s32 1, %s20
      %s32 = scalar_select %p29, %s31, %s20
      %p33 = scmp.ge.s32.totalorder %s32, 2
      %s34 = scalar_select %p33, 0, %s32
      %s35 = sadd.s32 1, %s19
      %s36 = scalar_select %p33, %s35, %s19
      %p37 = scmp.ge.s32.totalorder %s36, 1
      %s38 = scalar_select %p37, 0, %s36
      %s39 = ssub.s32 %s19, %s38
      %s40 = ssub.s32 %s21, %s30
      %s41 = sor.u32 %s39, %s40
      %p42 = scmp.eq.s32.totalorder %s41, 0
      %s44 = sadd.s32 %s43, 1
      %s45 = scalar_select %p42, %s43, %s44
      %p48 = pneg %p42
      %p49 = scmp.eq.s32.totalorder %s12, 1
      %p50 = por %p48, %p49
      %p51 = scmp.ne.s32.totalorder %s43, %s46
      %p52 = scmp.eq.s32.totalorder %s12, 0
      %p53 = por %p51, %p52
      %p54 = scmp.ne.s32.totalorder %s43, %s46
      %p55 = scmp.eq.s32.totalorder %s17, 1
      %p56 = por %p54, %p55
      %p57 = scmp.ne.s32.totalorder %s46, %s47
      %p58 = scmp.eq.s32.totalorder %s17, 0
      %p59 = por %p57, %p58
      %p60 = scmp.ne.s32.totalorder %s46, %s47
      %p61 = scmp.eq.s32.totalorder %s18, 1
      %p62 = por %p60, %p61
      %p64 = scmp.ne.s32.totalorder %s47, %s63
      %p65 = scmp.eq.s32.totalorder %s18, 0
      %p66 = por %p64, %p65
      %s67 = ssub.s32 %s20, %s34
      %s68 = ssub.s32 %s21, %s30
      %s69 = sor.u32 %s67, %s68
      %p70 = scmp.eq.s32.totalorder %s69, 0
      %s72 = sadd.s32 %s71, 1
      %s73 = scalar_select %p70, %s71, %s72
      %p76 = pneg %p70
      %p77 = scmp.eq.s32.totalorder %s12, 1
      %p78 = por %p76, %p77
      %p79 = scmp.ne.s32.totalorder %s71, %s74
      %p80 = scmp.eq.s32.totalorder %s12, 0
      %p81 = por %p79, %p80
      %p82 = scmp.ne.s32.totalorder %s71, %s74
      %p83 = scmp.eq.s32.totalorder %s17, 1
      %p84 = por %p82, %p83
      %p85 = scmp.ne.s32.totalorder %s74, %s75
      %p86 = scmp.eq.s32.totalorder %s17, 0
      %p87 = por %p85, %p86
      %p88 = scmp.ne.s32.totalorder %s74, %s75
      %p89 = scmp.eq.s32.totalorder %s18, 1
      %p90 = por %p88, %p89
      %p92 = scmp.ne.s32.totalorder %s75, %s91
      %p93 = scmp.eq.s32.totalorder %s18, 0
      %p94 = por %p92, %p93
      %s95 = ssub.s32 %s20, %s34
      %p96 = scmp.eq.s32.totalorder %s95, 0
      %s98 = sadd.s32 %s97, 1
      %s99 = scalar_select %p96, %s97, %s98
      %p102 = pneg %p96
      %p103 = scmp.eq.s32.totalorder %s12, 1
      %p104 = por %p102, %p103
      %p105 = scmp.ne.s32.totalorder %s97, %s100
      %p106 = scmp.eq.s32.totalorder %s12, 0
      %p107 = por %p105, %p106
      %p108 = scmp.ne.s32.totalorder %s97, %s100
      %p109 = scmp.eq.s32.totalorder %s17, 1
      %p110 = por %p108, %p109
      %p111 = scmp.ne.s32.totalorder %s100, %s101
      %p112 = scmp.eq.s32.totalorder %s17, 0
      %p113 = por %p111, %p112
      %p114 = scmp.ne.s32.totalorder %s100, %s101
      %p115 = scmp.eq.s32.totalorder %s18, 1
      %p116 = por %p114, %p115
      %p118 = scmp.ne.s32.totalorder %s101, %s117
      %p119 = scmp.eq.s32.totalorder %s18, 0
      %p120 = por %p118, %p119
      %s121 = ssub.s32 %s20, %s34
      %s122 = ssub.s32 %s19, %s38
      %s123 = sor.u32 %s121, %s122
      %p124 = scmp.eq.s32.totalorder %s123, 0
      %s126 = sadd.s32 %s125, 1
      %s127 = scalar_select %p124, %s125, %s126
      %p130 = pneg %p124
      %p131 = scmp.eq.s32.totalorder %s12, 1
      %p132 = por %p130, %p131
      %p133 = scmp.ne.s32.totalorder %s125, %s128
      %p134 = scmp.eq.s32.totalorder %s12, 0
      %p135 = por %p133, %p134
      %p136 = scmp.ne.s32.totalorder %s125, %s128
      %p137 = scmp.eq.s32.totalorder %s17, 1
      %p138 = por %p136, %p137
      %p139 = scmp.ne.s32.totalorder %s128, %s129
      %p140 = scmp.eq.s32.totalorder %s17, 0
      %p141 = por %p139, %p140
      %p142 = scmp.ne.s32.totalorder %s128, %s129
      %p143 = scmp.eq.s32.totalorder %s18, 1
      %p144 = por %p142, %p143
      %p146 = scmp.ne.s32.totalorder %s129, %s145
      %p147 = scmp.eq.s32.totalorder %s18, 0
      %p148 = por %p146, %p147
      %p149 = scmp.le.s32.totalorder 1, %s12
      %p150 = scmp.lt.s32.totalorder %s12, 3
      %p151 = pnand %p149, %p150
      %p152 = pneg %p151
      // Predicated region
      $region9: #{decoder_layer.13} parent=5 // pred_check
        _
      $region10: #{decoder_layer.13} parent=5 // pred_check_branch
        %154 = sbr.rel (%p151) target = $region12
      $region11: #{decoder_layer.13} parent=5 // pred_region
        %s155 = ssub.s32 %s12, 1
        // Predicated region
        $region13: #{decoder_layer.13} parent=11 // pred_check
          %p156 = pneg %p59
        $region14: #{decoder_layer.13} parent=11 // pred_check_branch
          %158 = sbr.rel (%p156) target = $region16
        $region15: #{decoder_layer.13} parent=11 // pred_region
          %s159 = smul.u32 2, %s22
          %p160 = scmp.lt.s32.totalorder %s159, 1
          %s161 = scalar_select %p160, %s159, 1
          %p162 = scmp.lt.s32.totalorder %s24, 0
          %s163 = scalar_select %p162, %s24, 0
          %s164 = sadd.s32 %s163, %s161
          %s165 = smul.addr %s164, 8
          %s166 = scalar_lea.vmem %s0, %s165
          %s167 = smul.u32 2, %s22
        $region16: #{decoder_layer.13} parent=11 // pred_fallthru
          _
      $region12: #{decoder_layer.13} parent=5 // pred_fallthru
        _
      %p168 = scmp.lt.s32.totalorder %s12, 2
      // Predicated region
      $region17: #{decoder_layer.13} parent=5 // pred_check
        %p169 = pneg %p168
      $region18: #{decoder_layer.13} parent=5 // pred_check_branch
        %171 = sbr.rel (%p169) target = $region20
      $region19: #{decoder_layer.13} parent=5 // pred_region
        // Predicated region
        $region21: #{decoder_layer.13} parent=19 // pred_check
          %p172 = pneg %p81
        $region22: #{decoder_layer.13} parent=19 // pred_check_branch
          %174 = sbr.rel (%p172) target = $region24
        $region23: #{decoder_layer.13} parent=19 // pred_region
          %s175 = smul.u32 4, %s21
          %p176 = scmp.lt.s32.totalorder %s20, 1
          %s177 = scalar_select %p176, %s20, 1
          %p178 = scmp.lt.s32.totalorder %s175, 3
          %s179 = scalar_select %p178, %s175, 3
          %s180 = smul.addr %s177, 4
          %s181 = sadd.s32 %s179, %s180
          %s182 = smul.addr %s181, 4
          %s183 = scalar_lea.vmem %s1, %s182
          %s184 = smul.u32 4, %s21
        $region24: #{decoder_layer.13} parent=19 // pred_fallthru
          _
        // Predicated region
        $region25: #{decoder_layer.13} parent=19 // pred_check
          %p185 = pneg %p107
        $region26: #{decoder_layer.13} parent=19 // pred_check_branch
          %187 = sbr.rel (%p185) target = $region28
        $region27: #{decoder_layer.13} parent=19 // pred_region
          %s188 = sand.u32 %s97, 1
          %s189 = scalar_lea.sflag [#allocation4], %s188
          %s190 = sand.u32 %s97, 1
          %s191 = scalar_lea.vmem [#allocation3], %s190
          %s193 = ssub.s32 16, 16
          %194 = vsyncadd %s189, %s193
          %s195 = smul.addr %s20, 16
          %s196 = scalar_lea.hbm %s2, %s195
          %s198 = sshll.u32 %s191, 4
          %s199 = int_to_ptr.vmem [resolvable:$true] %s198
          %201 = dma.hbm_to_vmem [thread:$0]  %s196, 16, %s199, %s189
        $region28: #{decoder_layer.13} parent=19 // pred_fallthru
          _
      $region20: #{decoder_layer.13} parent=5 // pred_fallthru
        _
      %p202 = scmp.le.s32.totalorder 1, %s12
      %p203 = scmp.lt.s32.totalorder %s12, 3
      %p204 = pnand %p202, %p203
      %p205 = pneg %p204
      // Predicated region
      $region29: #{decoder_layer.13} parent=5 // pred_check
        _
      $region30: #{decoder_layer.13} parent=5 // pred_check_branch
        %207 = sbr.rel (%p204) target = $region32
      $region31: #{decoder_layer.13} parent=5 // pred_region
        %s208 = ssub.s32 %s12, 1
        %s209 = sand.u32 %s100, 1
        %s210 = scalar_lea.sflag [#allocation4], %s209
        %s211 = sand.u32 %s100, 1
        %s212 = scalar_lea.vmem [#allocation3], %s211
        // Predicated region
        $region33: #{decoder_layer.13} parent=31 // pred_check
          %p213 = pneg %p113
        $region34: #{decoder_layer.13} parent=31 // pred_check_branch
          %215 = sbr.rel (%p213) target = $region36
        $region35: #{decoder_layer.13} parent=31 // pred_region
          %216 = dma.done %s210, 16
        $region36: #{decoder_layer.13} parent=31 // pred_fallthru
          _
        %s217 = smul.u32 2, %s22
        %p218 = scmp.lt.s32.totalorder %s217, 1
        %s219 = scalar_select %p218, %s217, 1
        %p220 = scmp.lt.s32.totalorder %s24, 0
        %s221 = scalar_select %p220, %s24, 0
        %s222 = sadd.s32 %s221, %s219
        %s223 = smul.addr %s222, 8
        %s224 = scalar_lea.vmem %s0, %s223
        %p225 = pneg %p59
        %p226 = pneg %p56
        %s227 = smul.u32 4, %s24
        %p228 = scmp.lt.s32.totalorder %s23, 1
        %s229 = scalar_select %p228, %s23, 1
        %p230 = scmp.lt.s32.totalorder %s227, 3
        %s231 = scalar_select %p230, %s227, 3
        %s232 = smul.addr %s229, 4
        %s233 = sadd.s32 %s231, %s232
        %s234 = smul.addr %s233, 4
        %s235 = scalar_lea.vmem %s1, %s234
        %p236 = pneg %p87
        %p237 = pneg %p84
        %s238 = sand.u32 %s100, 1
        %s239 = scalar_lea.sflag [#allocation4], %s238
        %s240 = sand.u32 %s100, 1
        %s241 = scalar_lea.vmem [#allocation3], %s240
        %p242 = pneg %p113
        %p243 = pneg %p110
        %p244 = pneg %p141
        %p245 = pneg %p138
        %s246 = smul.u32 2, %s22
        %p247 = scmp.lt.s32.totalorder %s23, 1
        %s248 = scalar_select %p247, %s23, 1
        %p249 = scmp.lt.s32.totalorder %s246, 1
        %s250 = scalar_select %p249, %s246, 1
        %s251 = smul.addr %s248, 2
        %s252 = sadd.s32 %s250, %s251
        %s253 = smul.addr %s252, 4
        %s254 = scalar_lea.vmem %s3, %s253
        %s255 = smul.u32 2, %s22
        %p256 = scmp.lt.s32.totalorder %s255, 1
        %s257 = scalar_select %p256, %s255, 1
        %p258 = scmp.lt.s32.totalorder %s24, 0
        %s259 = scalar_select %p258, %s24, 0
        %s260 = sadd.s32 %s259, %s257
        %s261 = smul.addr %s260, 8
        %s262 = scalar_lea.vmem %s0, %s261
        %s263 = smul.u32 2, %s22
        %s264 = smul.u32 4, %s24
        %p265 = scmp.lt.s32.totalorder %s23, 1
        %s266 = scalar_select %p265, %s23, 1
        %p267 = scmp.lt.s32.totalorder %s264, 3
        %s268 = scalar_select %p267, %s264, 3
        %s269 = smul.addr %s266, 4
        %s270 = sadd.s32 %s268, %s269
        %s271 = smul.addr %s270, 4
        %s272 = scalar_lea.vmem %s1, %s271
        %s273 = smul.u32 4, %s24
        %s274 = smul.u32 2, %s22
        %p275 = scmp.lt.s32.totalorder %s23, 1
        %s276 = scalar_select %p275, %s23, 1
        %p277 = scmp.lt.s32.totalorder %s274, 1
        %s278 = scalar_select %p277, %s274, 1
        %s279 = smul.addr %s276, 2
        %s280 = sadd.s32 %s278, %s279
        %s281 = smul.addr %s280, 4
        %s282 = scalar_lea.vmem %s3, %s281
        %s283 = smul.u32 2, %s22
        %p285 = scmp.eq.s32.totalorder %s24, 0
        // Predicated region
        $region37: #{decoder_layer.13} parent=31 // pred_check
          %p286 = pneg %p285
        $region38: #{decoder_layer.13} parent=31 // pred_check_branch
          %288 = sbr.rel (%p286) target = $region40
        $region39: #{decoder_layer.13} parent=31 // pred_region
          %vm289 = vcmask 261120
          %290 = vst.msk [vmem:[#allocation2] sm:$0xff] %vm289, 0.0
          %291 = vst.msk [vmem:[#allocation2 + $0x8] sm:$0xff] %vm289, 0.0
        $region40: #{decoder_layer.13} parent=31 // pred_fallthru
          _
        %v292 = vld [vmem:[#allocation2] sm:$0xff]
        %v293 = vld [vmem:[#allocation2 + $0x8] sm:$0xff]
        %v294 = vld [vmem:[%s262] sm:$0xff]
        %v295 = vld [vmem:[%s262 + $0x8] sm:$0xff]
        %v296 = vpack.c.bf16 %v295, %v294
        %v297 = vld [vmem:[%s272] sm:$0xf]
        %v298 = vld [vmem:[%s272 + $0x4] sm:$0xf]
        %v299 = vld [vmem:[%s272 + $0x8] sm:$0xf]
        %v300 = vld [vmem:[%s272 + $0xc] sm:$0xf]
        %v305 = vunpack.c.l.b16 %v297
        %v306 = vunpack.c.l.b16 %v298
        %v307 = vunpack.c.l.b16 %v299
        %v308 = vunpack.c.l.b16 %v300
        %v309 = vpack.c.b16 %v306, %v305
        %v310 = vpack.c.b16 %v308, %v307
        %vm313 = vcmask 261120
        %v315 = vsel %vm313, %v296, 0
        %317 = vmatprep.subr.bf16.mxu0 0
        %318 = vmatpush1.bf16.msra.mxu0 %v309
        %319 = vmatprep.subr.bf16.mxu0 0
        %320 = vmatpush1.bf16.msra.mxu0 %v310
        %321 = vmatprep.subr.bf16.mxu0 0
        %322 = vmatpush1.bf16.msra.mxu0 0
        %323 = vmatprep.subr.bf16.mxu0 0
        %324 = vmatpush1.bf16.msra.mxu0 0
        %325 = vmatprep.subr.bf16.mxu0 0
        %326 = vmatpush1.bf16.msra.mxu0 0
        %327 = vmatprep.subr.bf16.mxu0 0
        %328 = vmatpush1.bf16.msra.mxu0 0
        %329 = vmatprep.subr.bf16.mxu0 0
        %330 = vmatpush1.bf16.msra.mxu0 0
        %331 = vmatprep.subr.bf16.mxu0 0
        %332 = vmatpush1.bf16.msra.mxu0 0
        %333 = vmatprep.subr.bf16.mxu0 0
        %334 = vmatpush1.bf16.msra.mxu0 0
        %335 = vmatprep.subr.bf16.mxu0 0
        %336 = vmatpush1.bf16.msra.mxu0 0
        %337 = vmatprep.subr.bf16.mxu0 0
        %338 = vmatpush1.bf16.msra.mxu0 0
        %339 = vmatprep.subr.bf16.mxu0 0
        %340 = vmatpush1.bf16.msra.mxu0 0
        %341 = vmatprep.subr.bf16.mxu0 0
        %342 = vmatpush1.bf16.msra.mxu0 0
        %343 = vmatprep.subr.bf16.mxu0 0
        %344 = vmatpush1.bf16.msra.mxu0 0
        %345 = vmatprep.subr.bf16.mxu0 0
        %346 = vmatpush1.bf16.msra.mxu0 0
        %347 = vmatprep.subr.bf16.mxu0 0
        %348 = vmatpush1.bf16.msra.mxu0 0
        %349 = vmatprep.mubr.bf16.mxu0 0
        %350 = vmatmul.mubr.bf16.gmra.mrb[0].mxu0 %v315
        %v351 = vpop.f32.mrb[0].mxu0
        %v352 = vadd.f32 0.0, %v351
        %v353 = vpop.f32.mrb[0].mxu0
        %v354 = vpop.f32.mrb[0].mxu0
        %v355 = vadd.f32 0.0, %v354
        %v356 = vpop.f32.mrb[0].mxu0
        %357 = vdwg.mxu0
        %v358 = vadd.f32 %v292, %v352
        %v359 = vadd.f32 %v293, %v355
        %360 = vst.msk [vmem:[#allocation2] sm:$0xff] %vm313, %v358
        %361 = vst.msk [vmem:[#allocation2 + $0x8] sm:$0xff] %vm313, %v359
        // Predicated region
        $region41: #{decoder_layer.13} parent=31 // pred_check
          %p362 = pneg %p285
        $region42: #{decoder_layer.13} parent=31 // pred_check_branch
          %364 = sbr.rel (%p362) target = $region44
        $region43: #{decoder_layer.13} parent=31 // pred_region
          %v365 = vld [vmem:[#allocation2] sm:$0xff]
          %v366 = vld [vmem:[#allocation2 + $0x8] sm:$0xff]
          %v367 = vld [vmem:[%s212] sm:$0x1]
          %v369 = vlaneseq
          %v370 = vshrl.u32 %v369, 7
          %v371 = vsub.s32 0, %v370
          %v372 = vrot.slane %v367, %v371
          %v374 = vadd.f32 %v365, %v372
          %v375 = vadd.f32 %v366, %v372
          %v376 = vpack.c.bf16 %v375, %v374
          %v378 = vunpack.c.l.b16 %v376
          %v379 = vunpack.c.h.b16 %v376
          %v380 = vpack.c.b16 %v378, %v378
          %v381 = vpack.c.b16 %v379, %v379
          %vm384 = vcmask 257024
          %385 = vst.msk [vmem:[%s282] sm:$0xf] %vm384, %v380
          %386 = vst.msk [vmem:[%s282 + $0x4] sm:$0xf] %vm384, %v381
        $region44: #{decoder_layer.13} parent=31 // pred_fallthru
          _
        %s387 = smul.u32 2, %s22
        %p388 = scmp.lt.s32.totalorder %s23, 1
        %s389 = scalar_select %p388, %s23, 1
        %p390 = scmp.lt.s32.totalorder %s387, 1
        %s391 = scalar_select %p390, %s387, 1
        %s392 = smul.addr %s389, 2
        %s393 = sadd.s32 %s391, %s392
        %s394 = smul.addr %s393, 4
        %s395 = scalar_lea.vmem %s3, %s394
        // Predicated region
        $region45: #{decoder_layer.13} parent=31 // pred_check
          %p396 = pneg %p138
        $region46: #{decoder_layer.13} parent=31 // pred_check_branch
          %398 = sbr.rel (%p396) target = $region48
        $region47: #{decoder_layer.13} parent=31 // pred_region
          %s399 = smul.u32 2, %s22
        $region48: #{decoder_layer.13} parent=31 // pred_fallthru
          _
      $region32: #{decoder_layer.13} parent=5 // pred_fallthru
        _
      %p400 = scmp.le.s32.totalorder 2, %s12
      // Predicated region
      $region49: #{decoder_layer.13} parent=5 // pred_check
        %p401 = pneg %p400
      $region50: #{decoder_layer.13} parent=5 // pred_check_branch
        %403 = sbr.rel (%p401) target = $region52
      $region51: #{decoder_layer.13} parent=5 // pred_region
        %s404 = ssub.s32 %s12, 2
        // Predicated region
        $region53: #{decoder_layer.13} parent=51 // pred_check
          %p405 = pneg %p144
        $region54: #{decoder_layer.13} parent=51 // pred_check_branch
          %407 = sbr.rel (%p405) target = $region56
        $region55: #{decoder_layer.13} parent=51 // pred_region
          %s408 = smul.u32 2, %s25
          %p409 = scmp.lt.s32.totalorder %s26, 1
          %s410 = scalar_select %p409, %s26, 1
          %p411 = scmp.lt.s32.totalorder %s408, 1
          %s412 = scalar_select %p411, %s408, 1
          %s413 = smul.addr %s410, 2
          %s414 = sadd.s32 %s412, %s413
          %s415 = smul.addr %s414, 4
          %s416 = scalar_lea.vmem %s3, %s415
        $region56: #{decoder_layer.13} parent=51 // pred_fallthru
          _
      $region52: #{decoder_layer.13} parent=5 // pred_fallthru
        _
    $region6: #{decoder_layer.13} parent=1 // loop_footer
      %s16 = sadd.s32 1, %s12
    $region7: #{decoder_layer.13} parent=1 // loop_footer_branch
      %11 = sbr.rel target = $region3
    $region8: #{decoder_layer.13} parent=1 // loop_exit
      _
    %417 = vsyncpa [#allocation4], 1
    %s418 = scalar_lea.sflag [#allocation4], 1
    %419 = vsyncpa %s418, 1

// kernel: decoder_layer.11
$region0: #{decoder_layer.11}
  #allocation0 [shape = 'u32[]', space=smem, size = 0x4, offset = 0x4, fixed_abs, tag = 'smem constant byte address 0x4 - core index']
  #allocation1 [shape = 'u32[144,128]{1,0:T(1,128)}', space=vmem, size = 0x12000, scoped, tag = 'internal scratch']
  #allocation2 [shape = 'f32[16,32]{1,0:T(8,128)}', space=vmem, size = 0x2000, scoped, tag = 'scratch operand']
  %s0 = inlined_call_operand.vmem [shape: bf16[16,32], index: 0, kind: input, shape index: {}]
  %s1 = inlined_call_operand.vmem [shape: bf16[32,32], index: 1, kind: input, shape index: {}]
  %s2 = inlined_call_operand.vmem [shape: f32[1,32], index: 2, kind: input, shape index: {}]
  %s3 = inlined_call_operand.vmem [shape: f32[16,32], index: 3, kind: input, shape index: {}]
  %s4 = inlined_call_operand.vmem [shape: f32[1,32], index: 4, kind: input, shape index: {}]
  %s5 = inlined_call_operand.vmem [shape: f32[1,32], index: 5, kind: input, shape index: {}]
  %s6 = inlined_call_operand.vmem [shape: f32[16,32], index: 6, kind: output, shape index: {}]
  %s7 = sld [smem:[#allocation0]]
  $region42: #{decoder_layer.11} parent=0
    _
  %s9 = ssub.s32 1, %s7
  %s10 = scalar_select 0, %s9, %s7
  // Predicated region
  $region2: #{decoder_layer.11} parent=0 // pred_check
    _
  $region3: #{decoder_layer.11} parent=0 // pred_check_branch
    %12 = sbr.rel (0) target = $region5
  $region4: #{decoder_layer.11} parent=0 // pred_region
    _
  $region5: #{decoder_layer.11} parent=0 // pred_fallthru
    _
  // Predicated region
  $region6: #{decoder_layer.11} parent=0 // pred_check
    _
  $region7: #{decoder_layer.11} parent=0 // pred_check_branch
    %14 = sbr.rel (0) target = $region9
  $region8: #{decoder_layer.11} parent=0 // pred_region
    _
  $region9: #{decoder_layer.11} parent=0 // pred_fallthru
    _
  // Predicated region
  $region10: #{decoder_layer.11} parent=0 // pred_check
    _
  $region11: #{decoder_layer.11} parent=0 // pred_check_branch
    %16 = sbr.rel (0) target = $region13
  $region12: #{decoder_layer.11} parent=0 // pred_region
    _
  $region13: #{decoder_layer.11} parent=0 // pred_fallthru
    _
  // Predicated region
  $region14: #{decoder_layer.11} parent=0 // pred_check
    _
  $region15: #{decoder_layer.11} parent=0 // pred_check_branch
    %18 = sbr.rel (0) target = $region17
  $region16: #{decoder_layer.11} parent=0 // pred_region
    _
  $region17: #{decoder_layer.11} parent=0 // pred_fallthru
    _
  // Predicated region
  $region18: #{decoder_layer.11} parent=0 // pred_check
    _
  $region19: #{decoder_layer.11} parent=0 // pred_check_branch
    %20 = sbr.rel (0) target = $region21
  $region20: #{decoder_layer.11} parent=0 // pred_region
    _
  $region21: #{decoder_layer.11} parent=0 // pred_fallthru
    _
  // Predicated region
  $region22: #{decoder_layer.11} parent=0 // pred_check
    _
  $region23: #{decoder_layer.11} parent=0 // pred_check_branch
    %22 = sbr.rel (0) target = $region25
  $region24: #{decoder_layer.11} parent=0 // pred_region
    _
  $region25: #{decoder_layer.11} parent=0 // pred_fallthru
    _
  %p24 = scmp.eq.s32.totalorder 0, 0
  // Predicated region
  $region26: #{decoder_layer.11} parent=0 // pred_check
    %p25 = pneg %p24
  $region27: #{decoder_layer.11} parent=0 // pred_check_branch
    %27 = sbr.rel (%p25) target = $region29
  $region28: #{decoder_layer.11} parent=0 // pred_region
    %vm28 = vcmask 261120
    %29 = vst.msk [vmem:[#allocation2] sm:$0xff] %vm28, 0.0
    %30 = vst.msk [vmem:[#allocation2 + $0x8] sm:$0xff] %vm28, 0.0
  $region29: #{decoder_layer.11} parent=0 // pred_fallthru
    _
  %v31 = vld [vmem:[#allocation2] sm:$0xff]
  %v32 = vld [vmem:[#allocation2 + $0x8] sm:$0xff]
  %v33 = vld [vmem:[%s0] sm:$0xf]
  %v34 = vld [vmem:[%s0 + $0x4] sm:$0xf]
  %v35 = vld [vmem:[%s1] sm:$0xf]
  %v36 = vld [vmem:[%s1 + $0x4] sm:$0xf]
  %v37 = vld [vmem:[%s1 + $0x8] sm:$0xf]
  %v38 = vld [vmem:[%s1 + $0xc] sm:$0xf]
  %v41 = vunpack.c.l.b16 %v33
  %v42 = vunpack.c.l.b16 %v34
  %v43 = vpack.c.b16 %v42, %v41
  %v48 = vunpack.c.l.b16 %v35
  %v49 = vunpack.c.l.b16 %v36
  %v50 = vunpack.c.l.b16 %v37
  %v51 = vunpack.c.l.b16 %v38
  %v52 = vpack.c.b16 %v49, %v48
  %v53 = vpack.c.b16 %v51, %v50
  %vm56 = vcmask 261120
  %v58 = vsel %vm56, %v43, 0
  %60 = vmatprep.subr.bf16.mxu0 0
  %61 = vmatpush1.bf16.msra.mxu0 %v52
  %62 = vmatprep.subr.bf16.mxu0 0
  %63 = vmatpush1.bf16.msra.mxu0 %v53
  %64 = vmatprep.subr.bf16.mxu0 0
  %65 = vmatpush1.bf16.msra.mxu0 0
  %66 = vmatprep.subr.bf16.mxu0 0
  %67 = vmatpush1.bf16.msra.mxu0 0
  %68 = vmatprep.subr.bf16.mxu0 0
  %69 = vmatpush1.bf16.msra.mxu0 0
  %70 = vmatprep.subr.bf16.mxu0 0
  %71 = vmatpush1.bf16.msra.mxu0 0
  %72 = vmatprep.subr.bf16.mxu0 0
  %73 = vmatpush1.bf16.msra.mxu0 0
  %74 = vmatprep.subr.bf16.mxu0 0
  %75 = vmatpush1.bf16.msra.mxu0 0
  %76 = vmatprep.subr.bf16.mxu0 0
  %77 = vmatpush1.bf16.msra.mxu0 0
  %78 = vmatprep.subr.bf16.mxu0 0
  %79 = vmatpush1.bf16.msra.mxu0 0
  %80 = vmatprep.subr.bf16.mxu0 0
  %81 = vmatpush1.bf16.msra.mxu0 0
  %82 = vmatprep.subr.bf16.mxu0 0
  %83 = vmatpush1.bf16.msra.mxu0 0
  %84 = vmatprep.subr.bf16.mxu0 0
  %85 = vmatpush1.bf16.msra.mxu0 0
  %86 = vmatprep.subr.bf16.mxu0 0
  %87 = vmatpush1.bf16.msra.mxu0 0
  %88 = vmatprep.subr.bf16.mxu0 0
  %89 = vmatpush1.bf16.msra.mxu0 0
  %90 = vmatprep.subr.bf16.mxu0 0
  %91 = vmatpush1.bf16.msra.mxu0 0
  %92 = vmatprep.mubr.bf16.mxu0 0
  %93 = vmatmul.mubr.bf16.gmra.mrb[0].mxu0 %v58
  %v94 = vpop.f32.mrb[0].mxu0
  %v95 = vadd.f32 0.0, %v94
  %v96 = vpop.f32.mrb[0].mxu0
  %v97 = vpop.f32.mrb[0].mxu0
  %v98 = vadd.f32 0.0, %v97
  %v99 = vpop.f32.mrb[0].mxu0
  %100 = vdwg.mxu0
  %v101 = vadd.f32 %v31, %v95
  %v102 = vadd.f32 %v32, %v98
  %103 = vst.msk [vmem:[#allocation2] sm:$0xff] %vm56, %v101
  %104 = vst.msk [vmem:[#allocation2 + $0x8] sm:$0xff] %vm56, %v102
  // Predicated region
  $region30: #{decoder_layer.11} parent=0 // pred_check
    %p105 = pneg %p24
  $region31: #{decoder_layer.11} parent=0 // pred_check_branch
    %107 = sbr.rel (%p105) target = $region33
  $region32: #{decoder_layer.11} parent=0 // pred_region
    %v108 = vld [vmem:[#allocation2] sm:$0xff]
    %v109 = vld [vmem:[#allocation2 + $0x8] sm:$0xff]
    %v110 = vld [vmem:[%s2] sm:$0x1]
    %v112 = vlaneseq
    %v113 = vshrl.u32 %v112, 7
    %v114 = vsub.s32 0, %v113
    %v115 = vrot.slane %v110, %v114
    %v117 = vadd.f32 %v108, %v115
    %v118 = vadd.f32 %v109, %v115
    %v119 = vld [vmem:[%s3] sm:$0xff]
    %v120 = vld [vmem:[%s3 + $0x8] sm:$0xff]
    %v121 = vadd.f32 %v117, %v119
    %v122 = vadd.f32 %v118, %v120
    %v123 = vsel %vm56, %v121, 0.0
    %124 = vadd.xlane.f32.xlu0 %v123
    %v125 = vpop.xlane.xlu0 %124
    %v126 = vsel %vm56, %v122, 0.0
    %127 = vadd.xlane.f32.xlu0 %v126
    %v128 = vpop.xlane.xlu0 %127
    %v129 = vrcp.pop 32.0
    %v130 = vmul.f32 %v125, %v129
    %v131 = vmul.f32 %v128, %v129
    %v132 = vmul.f32 %v121, %v121
    %v133 = vmul.f32 %v122, %v122
    %v134 = vsel %vm56, %v132, 0.0
    %135 = vadd.xlane.f32.xlu0 %v134
    %v136 = vpop.xlane.xlu0 %135
    %v137 = vsel %vm56, %v133, 0.0
    %138 = vadd.xlane.f32.xlu0 %v137
    %v139 = vpop.xlane.xlu0 %138
    %v140 = vmul.f32 %v136, %v129
    %v141 = vmul.f32 %v139, %v129
    %v142 = vmul.f32 %v130, %v130
    %v143 = vmul.f32 %v131, %v131
    %v144 = vsub.f32 %v140, %v142
    %v145 = vsub.f32 %v141, %v143
    %v146 = vsub.f32 %v121, %v130
    %v147 = vsub.f32 %v122, %v131
    %v148 = vadd.f32 %v144, 1e-05
    %v149 = vadd.f32 %v145, 1e-05
    %v150 = vrsqrt.pop %v148
    %v151 = vrsqrt.pop %v149
    %v152 = vmul.f32 %v146, %v150
    %v153 = vmul.f32 %v147, %v151
    %v154 = vld [vmem:[%s4] sm:$0x1]
    %v156 = vlaneseq
    %v157 = vshrl.u32 %v156, 7
    %v158 = vsub.s32 0, %v157
    %v159 = vrot.slane %v154, %v158
    %v161 = vmul.f32 %v152, %v159
    %v162 = vmul.f32 %v153, %v159
    %v163 = vld [vmem:[%s5] sm:$0x1]
    %v165 = vlaneseq
    %v166 = vshrl.u32 %v165, 7
    %v167 = vsub.s32 0, %v166
    %v168 = vrot.slane %v163, %v167
    %v170 = vadd.f32 %v161, %v168
    %v171 = vadd.f32 %v162, %v168
    %172 = vst.msk [vmem:[%s6] sm:$0xff] %vm56, %v170
    %173 = vst.msk [vmem:[%s6 + $0x8] sm:$0xff] %vm56, %v171
  $region33: #{decoder_layer.11} parent=0 // pred_fallthru
    _
  // Predicated region
  $region34: #{decoder_layer.11} parent=0 // pred_check
    _
  $region35: #{decoder_layer.11} parent=0 // pred_check_branch
    %175 = sbr.rel (0) target = $region37
  $region36: #{decoder_layer.11} parent=0 // pred_region
    _
  $region37: #{decoder_layer.11} parent=0 // pred_fallthru
    _
  // Predicated region
  $region38: #{decoder_layer.11} parent=0 // pred_check
    _
  $region39: #{decoder_layer.11} parent=0 // pred_check_branch
    %177 = sbr.rel (0) target = $region41
  $region40: #{decoder_layer.11} parent=0 // pred_region
    _
  $region41: #{decoder_layer.11} parent=0 // pred_fallthru
    _

// kernel: decoder_layer.10
$region0: #{decoder_layer.10}
  #allocation0 [shape = 'u32[]', space=smem, size = 0x4, offset = 0x4, fixed_abs, tag = 'smem constant byte address 0x4 - core index']
  #allocation1 [shape = 'u32[144,128]{1,0:T(1,128)}', space=vmem, size = 0x12000, scoped, tag = 'internal scratch']
  #allocation2 [shape = 'f32[8,32]{1,0:T(8,128)}', space=vmem, size = 0x1000, scoped, tag = 'scratch operand']
  %s0 = inlined_call_operand.vmem [shape: bf16[3,2,8,32], index: 0, kind: input, shape index: {}, may-alias: {0,1,2}]
  %s1 = inlined_call_operand.vmem [shape: bf16[3,2,8,32], index: 1, kind: input, shape index: {}, may-alias: {0,1,2}]
  %s2 = inlined_call_operand.vmem [shape: bf16[3,2,8,32], index: 2, kind: input, shape index: {}, may-alias: {0,1,2}]
  %s3 = inlined_call_operand.vmem [shape: bf16[2,8,32], index: 3, kind: output, shape index: {}]
  %s4 = sld [smem:[#allocation0]]
  $region45: #{decoder_layer.10} parent=0
    _
  %s6 = ssub.s32 1, %s4
  %s7 = scalar_select 0, %s6, %s4
  loop: start=0, step=1, limit=4
  $region2: #{decoder_layer.10} parent=0 // loop_pre_header
    _
  $region3: #{decoder_layer.10} parent=0 // loop_header
    %s9 = sphi 0, %s13
    %p10 = scmp.ge.s32.totalorder %s9, 4
    %s16 = sphi 0, %s28
    %s17 = sphi 0, %s24
    %s18 = sphi 0, %s16
    %s19 = sphi 0, %s17
    %s20 = sphi 0, %s18
    %s21 = sphi 0, %s19
    %s33 = sphi 0, %s35
    %s36 = sphi 0, %s33
    %s37 = sphi 0, %s36
    %s53 = sphi 0, %s37
    %s59 = sphi 0, %s61
    %s62 = sphi 0, %s59
    %s63 = sphi 0, %s62
    %s79 = sphi 0, %s63
    %s85 = sphi 0, %s87
    %s88 = sphi 0, %s85
    %s89 = sphi 0, %s88
    %s105 = sphi 0, %s89
    %s113 = sphi 0, %s115
    %s116 = sphi 0, %s113
    %s117 = sphi 0, %s116
    %s133 = sphi 0, %s117
  $region4: #{decoder_layer.10} parent=0 // loop_header_branch
    %12 = sbr.rel (%p10) target = $region8
  $region5: #{decoder_layer.10} parent=0 // loop_body
    %s14 = ssub.s32 %s9, 1
    %s15 = ssub.s32 %s9, 2
    %s22 = sadd.s32 1, %s17
    %p23 = scmp.ge.s32.totalorder %s22, 1
    %s24 = scalar_select %p23, 0, %s22
    %s25 = sadd.s32 1, %s16
    %s26 = scalar_select %p23, %s25, %s16
    %p27 = scmp.ge.s32.totalorder %s26, 2
    %s28 = scalar_select %p27, 0, %s26
    %s29 = ssub.s32 %s16, %s28
    %s30 = ssub.s32 %s17, %s24
    %s31 = sor.u32 %s29, %s30
    %p32 = scmp.eq.s32.totalorder %s31, 0
    %s34 = sadd.s32 %s33, 1
    %s35 = scalar_select %p32, %s33, %s34
    %p38 = pneg %p32
    %p39 = scmp.eq.s32.totalorder %s9, 1
    %p40 = por %p38, %p39
    %p41 = scmp.ne.s32.totalorder %s33, %s36
    %p42 = scmp.eq.s32.totalorder %s9, 0
    %p43 = por %p41, %p42
    %p44 = scmp.ne.s32.totalorder %s33, %s36
    %p45 = scmp.eq.s32.totalorder %s14, 1
    %p46 = por %p44, %p45
    %p47 = scmp.ne.s32.totalorder %s36, %s37
    %p48 = scmp.eq.s32.totalorder %s14, 0
    %p49 = por %p47, %p48
    %p50 = scmp.ne.s32.totalorder %s36, %s37
    %p51 = scmp.eq.s32.totalorder %s15, 1
    %p52 = por %p50, %p51
    %p54 = scmp.ne.s32.totalorder %s37, %s53
    %p55 = scmp.eq.s32.totalorder %s15, 0
    %p56 = por %p54, %p55
    %s57 = ssub.s32 %s16, %s28
    %p58 = scmp.eq.s32.totalorder %s57, 0
    %s60 = sadd.s32 %s59, 1
    %s61 = scalar_select %p58, %s59, %s60
    %p64 = pneg %p58
    %p65 = scmp.eq.s32.totalorder %s9, 1
    %p66 = por %p64, %p65
    %p67 = scmp.ne.s32.totalorder %s59, %s62
    %p68 = scmp.eq.s32.totalorder %s9, 0
    %p69 = por %p67, %p68
    %p70 = scmp.ne.s32.totalorder %s59, %s62
    %p71 = scmp.eq.s32.totalorder %s14, 1
    %p72 = por %p70, %p71
    %p73 = scmp.ne.s32.totalorder %s62, %s63
    %p74 = scmp.eq.s32.totalorder %s14, 0
    %p75 = por %p73, %p74
    %p76 = scmp.ne.s32.totalorder %s62, %s63
    %p77 = scmp.eq.s32.totalorder %s15, 1
    %p78 = por %p76, %p77
    %p80 = scmp.ne.s32.totalorder %s63, %s79
    %p81 = scmp.eq.s32.totalorder %s15, 0
    %p82 = por %p80, %p81
    %s83 = ssub.s32 %s16, %s28
    %p84 = scmp.eq.s32.totalorder %s83, 0
    %s86 = sadd.s32 %s85, 1
    %s87 = scalar_select %p84, %s85, %s86
    %p90 = pneg %p84
    %p91 = scmp.eq.s32.totalorder %s9, 1
    %p92 = por %p90, %p91
    %p93 = scmp.ne.s32.totalorder %s85, %s88
    %p94 = scmp.eq.s32.totalorder %s9, 0
    %p95 = por %p93, %p94
    %p96 = scmp.ne.s32.totalorder %s85, %s88
    %p97 = scmp.eq.s32.totalorder %s14, 1
    %p98 = por %p96, %p97
    %p99 = scmp.ne.s32.totalorder %s88, %s89
    %p100 = scmp.eq.s32.totalorder %s14, 0
    %p101 = por %p99, %p100
    %p102 = scmp.ne.s32.totalorder %s88, %s89
    %p103 = scmp.eq.s32.totalorder %s15, 1
    %p104 = por %p102, %p103
    %p106 = scmp.ne.s32.totalorder %s89, %s105
    %p107 = scmp.eq.s32.totalorder %s15, 0
    %p108 = por %p106, %p107
    %s109 = ssub.s32 %s16, %s28
    %s110 = ssub.s32 %s17, %s24
    %s111 = sor.u32 %s109, %s110
    %p112 = scmp.eq.s32.totalorder %s111, 0
    %s114 = sadd.s32 %s113, 1
    %s115 = scalar_select %p112, %s113, %s114
    %p118 = pneg %p112
    %p119 = scmp.eq.s32.totalorder %s9, 1
    %p120 = por %p118, %p119
    %p121 = scmp.ne.s32.totalorder %s113, %s116
    %p122 = scmp.eq.s32.totalorder %s9, 0
    %p123 = por %p121, %p122
    %p124 = scmp.ne.s32.totalorder %s113, %s116
    %p125 = scmp.eq.s32.totalorder %s14, 1
    %p126 = por %p124, %p125
    %p127 = scmp.ne.s32.totalorder %s116, %s117
    %p128 = scmp.eq.s32.totalorder %s14, 0
    %p129 = por %p127, %p128
    %p130 = scmp.ne.s32.totalorder %s116, %s117
    %p131 = scmp.eq.s32.totalorder %s15, 1
    %p132 = por %p130, %p131
    %p134 = scmp.ne.s32.totalorder %s117, %s133
    %p135 = scmp.eq.s32.totalorder %s15, 0
    %p136 = por %p134, %p135
    %p137 = scmp.le.s32.totalorder 1, %s9
    %p138 = scmp.lt.s32.totalorder %s9, 3
    %p139 = pnand %p137, %p138
    %p140 = pneg %p139
    // Predicated region
    $region9: #{decoder_layer.10} parent=5 // pred_check
      _
    $region10: #{decoder_layer.10} parent=5 // pred_check_branch
      %142 = sbr.rel (%p139) target = $region12
    $region11: #{decoder_layer.10} parent=5 // pred_region
      %s143 = ssub.s32 %s9, 1
    $region12: #{decoder_layer.10} parent=5 // pred_fallthru
      _
    %p144 = scmp.lt.s32.totalorder %s9, 2
    // Predicated region
    $region13: #{decoder_layer.10} parent=5 // pred_check
      %p145 = pneg %p144
    $region14: #{decoder_layer.10} parent=5 // pred_check_branch
      %147 = sbr.rel (%p145) target = $region16
    $region15: #{decoder_layer.10} parent=5 // pred_region
      // Predicated region
      $region17: #{decoder_layer.10} parent=15 // pred_check
        %p148 = pneg %p43
      $region18: #{decoder_layer.10} parent=15 // pred_check_branch
        %150 = sbr.rel (%p148) target = $region20
      $region19: #{decoder_layer.10} parent=15 // pred_region
        %p151 = scmp.lt.s32.totalorder %s16, 1
        %s152 = scalar_select %p151, %s16, 1
        %p153 = scmp.lt.s32.totalorder %s17, 0
        %s154 = scalar_select %p153, %s17, 0
        %s155 = sadd.s32 %s154, %s152
        %s156 = smul.addr %s155, 4
        %s157 = scalar_lea.vmem %s0, %s156
      $region20: #{decoder_layer.10} parent=15 // pred_fallthru
        _
      // Predicated region
      $region21: #{decoder_layer.10} parent=15 // pred_check
        %p158 = pneg %p69
      $region22: #{decoder_layer.10} parent=15 // pred_check_branch
        %160 = sbr.rel (%p158) target = $region24
      $region23: #{decoder_layer.10} parent=15 // pred_region
        %p161 = scmp.lt.s32.totalorder %s16, 1
        %s162 = scalar_select %p161, %s16, 1
        %s163 = sadd.s32 %s162, 2
        %s164 = smul.addr %s163, 4
        %s165 = scalar_lea.vmem %s1, %s164
      $region24: #{decoder_layer.10} parent=15 // pred_fallthru
        _
      // Predicated region
      $region25: #{decoder_layer.10} parent=15 // pred_check
        %p166 = pneg %p95
      $region26: #{decoder_layer.10} parent=15 // pred_check_branch
        %168 = sbr.rel (%p166) target = $region28
      $region27: #{decoder_layer.10} parent=15 // pred_region
        %p169 = scmp.lt.s32.totalorder %s16, 1
        %s170 = scalar_select %p169, %s16, 1
        %s171 = sadd.s32 %s170, 4
        %s172 = smul.addr %s171, 4
        %s173 = scalar_lea.vmem %s2, %s172
      $region28: #{decoder_layer.10} parent=15 // pred_fallthru
        _
    $region16: #{decoder_layer.10} parent=5 // pred_fallthru
      _
    %p174 = scmp.le.s32.totalorder 1, %s9
    %p175 = scmp.lt.s32.totalorder %s9, 3
    %p176 = pnand %p174, %p175
    %p177 = pneg %p176
    // Predicated region
    $region29: #{decoder_layer.10} parent=5 // pred_check
      _
    $region30: #{decoder_layer.10} parent=5 // pred_check_branch
      %179 = sbr.rel (%p176) target = $region32
    $region31: #{decoder_layer.10} parent=5 // pred_region
      %s180 = ssub.s32 %s9, 1
      %p181 = scmp.lt.s32.totalorder %s18, 1
      %s182 = scalar_select %p181, %s18, 1
      %p183 = scmp.lt.s32.totalorder %s19, 0
      %s184 = scalar_select %p183, %s19, 0
      %s185 = sadd.s32 %s184, %s182
      %s186 = smul.addr %s185, 4
      %s187 = scalar_lea.vmem %s0, %s186
      %p188 = pneg %p49
      %p189 = pneg %p46
      %p190 = scmp.lt.s32.totalorder %s18, 1
      %s191 = scalar_select %p190, %s18, 1
      %s192 = sadd.s32 %s191, 2
      %s193 = smul.addr %s192, 4
      %s194 = scalar_lea.vmem %s1, %s193
      %p195 = pneg %p75
      %p196 = pneg %p72
      %p197 = scmp.lt.s32.totalorder %s18, 1
      %s198 = scalar_select %p197, %s18, 1
      %s199 = sadd.s32 %s198, 4
      %s200 = smul.addr %s199, 4
      %s201 = scalar_lea.vmem %s2, %s200
      %p202 = pneg %p101
      %p203 = pneg %p98
      %p204 = pneg %p129
      %p205 = pneg %p126
      %p206 = scmp.lt.s32.totalorder %s18, 1
      %s207 = scalar_select %p206, %s18, 1
      %p208 = scmp.lt.s32.totalorder %s19, 0
      %s209 = scalar_select %p208, %s19, 0
      %s210 = sadd.s32 %s209, %s207
      %s211 = smul.addr %s210, 4
      %s212 = scalar_lea.vmem %s3, %s211
      %p213 = scmp.lt.s32.totalorder %s18, 1
      %s214 = scalar_select %p213, %s18, 1
      %p215 = scmp.lt.s32.totalorder %s19, 0
      %s216 = scalar_select %p215, %s19, 0
      %s217 = sadd.s32 %s216, %s214
      %s218 = smul.addr %s217, 4
      %s219 = scalar_lea.vmem %s0, %s218
      %p220 = scmp.lt.s32.totalorder %s18, 1
      %s221 = scalar_select %p220, %s18, 1
      %s222 = sadd.s32 %s221, 2
      %s223 = smul.addr %s222, 4
      %s224 = scalar_lea.vmem %s1, %s223
      %p225 = scmp.lt.s32.totalorder %s18, 1
      %s226 = scalar_select %p225, %s18, 1
      %s227 = sadd.s32 %s226, 4
      %s228 = smul.addr %s227, 4
      %s229 = scalar_lea.vmem %s2, %s228
      %p230 = scmp.lt.s32.totalorder %s18, 1
      %s231 = scalar_select %p230, %s18, 1
      %p232 = scmp.lt.s32.totalorder %s19, 0
      %s233 = scalar_select %p232, %s19, 0
      %s234 = sadd.s32 %s233, %s231
      %s235 = smul.addr %s234, 4
      %s236 = scalar_lea.vmem %s3, %s235
      %v239 = vld [vmem:[%s219] sm:$0xf]
      %v240 = vld [vmem:[%s224] sm:$0xf]
      %v241 = vld [vmem:[%s229] sm:$0xf]
      %v242 = vmul.bf16 %v239, 1052065461
      %vm243 = vcmask 64512
      %v245 = vsel %vm243, %v242, 0
      %v248 = vsel %vm243, %v240, 0
      %250 = vmatprep.subr.bf16.mxu0 0
      %251 = vmatpush1.bf16.xpose.msra.mxu0 %v248
      %252 = vmatprep.subr.bf16.mxu0 0
      %253 = vmatpush1.bf16.xpose.msra.mxu0 0
      %254 = vmatprep.subr.bf16.mxu0 0
      %255 = vmatpush1.bf16.xpose.msra.mxu0 0
      %256 = vmatprep.subr.bf16.mxu0 0
      %257 = vmatpush1.bf16.xpose.msra.mxu0 0
      %258 = vmatprep.subr.bf16.mxu0 0
      %259 = vmatpush1.bf16.xpose.msra.mxu0 0
      %260 = vmatprep.subr.bf16.mxu0 0
      %261 = vmatpush1.bf16.xpose.msra.mxu0 0
      %262 = vmatprep.subr.bf16.mxu0 0
      %263 = vmatpush1.bf16.xpose.msra.mxu0 0
      %264 = vmatprep.subr.bf16.mxu0 0
      %265 = vmatpush1.bf16.xpose.msra.mxu0 0
      %266 = vmatprep.subr.bf16.mxu0 0
      %267 = vmatpush1.bf16.xpose.msra.mxu0 0
      %268 = vmatprep.subr.bf16.mxu0 0
      %269 = vmatpush1.bf16.xpose.msra.mxu0 0
      %270 = vmatprep.subr.bf16.mxu0 0
      %271 = vmatpush1.bf16.xpose.msra.mxu0 0
      %272 = vmatprep.subr.bf16.mxu0 0
      %273 = vmatpush1.bf16.xpose.msra.mxu0 0
      %274 = vmatprep.subr.bf16.mxu0 0
      %275 = vmatpush1.bf16.xpose.msra.mxu0 0
      %276 = vmatprep.subr.bf16.mxu0 0
      %277 = vmatpush1.bf16.xpose.msra.mxu0 0
      %278 = vmatprep.subr.bf16.mxu0 0
      %279 = vmatpush1.bf16.xpose.msra.mxu0 0
      %280 = vmatprep.subr.bf16.mxu0 0
      %281 = vmatpush1.bf16.xpose.msra.mxu0 0
      %282 = vmatprep.mubr.bf16.mxu0 0
      %283 = vmatmul.mubr.bf16.gmra.mrb[0].mxu0 %v245
      %v284 = vpop.f32.mrb[0].mxu0
      %v285 = vadd.f32 0.0, %v284
      %v286 = vpop.f32.mrb[0].mxu0
      %v287 = vpop.f32.mrb[0].mxu0
      %v288 = vpop.f32.mrb[0].mxu0
      %289 = vdwg.mxu0
      %v290 = vsel %vm243, %v285, -inf
      %291 = vmax.xlane.f32.xlu0 %v290
      %v292 = vpop.xlane.xlu0 %291
      %v293 = vsub.f32 %v285, %v292
      %v294 = vmul.f32 %v293, 1.442695
      %v295 = vpow.pop %v294
      %v296 = vsel %vm243, %v295, 0.0
      %297 = vadd.xlane.f32.xlu0 %v296
      %v298 = vpop.xlane.xlu0 %297
      %v299 = vrcp.pop %v298
      %v300 = vmul.f32 %v295, %v299
      %v301 = vpack.c.bf16 %v300, %v300
      %v303 = vsel %vm243, %v301, 0
      %vm305 = vcmask 1043456
      %v307 = vsel %vm305, %v241, 0
      %309 = vmatprep.subr.bf16.mxu0 0
      %310 = vmatpush1.bf16.msra.mxu0 %v307
      %311 = vmatprep.subr.bf16.mxu0 0
      %312 = vmatpush1.bf16.msra.mxu0 0
      %313 = vmatprep.subr.bf16.mxu0 0
      %314 = vmatpush1.bf16.msra.mxu0 0
      %315 = vmatprep.subr.bf16.mxu0 0
      %316 = vmatpush1.bf16.msra.mxu0 0
      %317 = vmatprep.subr.bf16.mxu0 0
      %318 = vmatpush1.bf16.msra.mxu0 0
      %319 = vmatprep.subr.bf16.mxu0 0
      %320 = vmatpush1.bf16.msra.mxu0 0
      %321 = vmatprep.subr.bf16.mxu0 0
      %322 = vmatpush1.bf16.msra.mxu0 0
      %323 = vmatprep.subr.bf16.mxu0 0
      %324 = vmatpush1.bf16.msra.mxu0 0
      %325 = vmatprep.subr.bf16.mxu0 0
      %326 = vmatpush1.bf16.msra.mxu0 0
      %327 = vmatprep.subr.bf16.mxu0 0
      %328 = vmatpush1.bf16.msra.mxu0 0
      %329 = vmatprep.subr.bf16.mxu0 0
      %330 = vmatpush1.bf16.msra.mxu0 0
      %331 = vmatprep.subr.bf16.mxu0 0
      %332 = vmatpush1.bf16.msra.mxu0 0
      %333 = vmatprep.subr.bf16.mxu0 0
      %334 = vmatpush1.bf16.msra.mxu0 0
      %335 = vmatprep.subr.bf16.mxu0 0
      %336 = vmatpush1.bf16.msra.mxu0 0
      %337 = vmatprep.subr.bf16.mxu0 0
      %338 = vmatpush1.bf16.msra.mxu0 0
      %339 = vmatprep.subr.bf16.mxu0 0
      %340 = vmatpush1.bf16.msra.mxu0 0
      %341 = vmatprep.mubr.bf16.mxu0 0
      %342 = vmatmul.mubr.bf16.gmra.mrb[0].mxu0 %v303
      %v343 = vpop.f32.mrb[0].mxu0
      %v344 = vadd.f32 0.0, %v343
      %v345 = vpop.f32.mrb[0].mxu0
      %v346 = vpop.f32.mrb[0].mxu0
      %v347 = vpop.f32.mrb[0].mxu0
      %348 = vdwg.mxu0
      %349 = vst.msk [vmem:[#allocation2] sm:$0xff] %vm243, %v344
      %v351 = vunpack.c.l.b16 %v242
      %v352 = vpack.c.b16 %v351, %v351
      %353 = vrot.lane.b32.xlu0 %v352, 120
      %v354 = vpop.permute.xlu0 %353
      %v356 = vunpack.c.l.b16 %v240
      %v357 = vpack.c.b16 %v356, %v356
      %358 = vrot.lane.b32.xlu0 %v357, 120
      %v359 = vpop.permute.xlu0 %358
      %v361 = vsel %vm243, %v354, 0
      %v364 = vsel %vm243, %v359, 0
      %366 = vmatprep.subr.bf16.mxu0 0
      %367 = vmatpush1.bf16.xpose.msra.mxu0 %v364
      %368 = vmatprep.subr.bf16.mxu0 0
      %369 = vmatpush1.bf16.xpose.msra.mxu0 0
      %370 = vmatprep.subr.bf16.mxu0 0
      %371 = vmatpush1.bf16.xpose.msra.mxu0 0
      %372 = vmatprep.subr.bf16.mxu0 0
      %373 = vmatpush1.bf16.xpose.msra.mxu0 0
      %374 = vmatprep.subr.bf16.mxu0 0
      %375 = vmatpush1.bf16.xpose.msra.mxu0 0
      %376 = vmatprep.subr.bf16.mxu0 0
      %377 = vmatpush1.bf16.xpose.msra.mxu0 0
      %378 = vmatprep.subr.bf16.mxu0 0
      %379 = vmatpush1.bf16.xpose.msra.mxu0 0
      %380 = vmatprep.subr.bf16.mxu0 0
      %381 = vmatpush1.bf16.xpose.msra.mxu0 0
      %382 = vmatprep.subr.bf16.mxu0 0
      %383 = vmatpush1.bf16.xpose.msra.mxu0 0
      %384 = vmatprep.subr.bf16.mxu0 0
      %385 = vmatpush1.bf16.xpose.msra.mxu0 0
      %386 = vmatprep.subr.bf16.mxu0 0
      %387 = vmatpush1.bf16.xpose.msra.mxu0 0
      %388 = vmatprep.subr.bf16.mxu0 0
      %389 = vmatpush1.bf16.xpose.msra.mxu0 0
      %390 = vmatprep.subr.bf16.mxu0 0
      %391 = vmatpush1.bf16.xpose.msra.mxu0 0
      %392 = vmatprep.subr.bf16.mxu0 0
      %393 = vmatpush1.bf16.xpose.msra.mxu0 0
      %394 = vmatprep.subr.bf16.mxu0 0
      %395 = vmatpush1.bf16.xpose.msra.mxu0 0
      %396 = vmatprep.subr.bf16.mxu0 0
      %397 = vmatpush1.bf16.xpose.msra.mxu0 0
      %398 = vmatprep.mubr.bf16.mxu0 0
      %399 = vmatmul.mubr.bf16.gmra.mrb[0].mxu0 %v361
      %v400 = vpop.f32.mrb[0].mxu0
      %v401 = vadd.f32 0.0, %v400
      %v402 = vpop.f32.mrb[0].mxu0
      %v403 = vpop.f32.mrb[0].mxu0
      %v404 = vpop.f32.mrb[0].mxu0
      %405 = vdwg.mxu0
      %v406 = vsel %vm243, %v401, -inf
      %407 = vmax.xlane.f32.xlu0 %v406
      %v408 = vpop.xlane.xlu0 %407
      %v409 = vsub.f32 %v401, %v408
      %v410 = vmul.f32 %v409, 1.442695
      %v411 = vpow.pop %v410
      %v412 = vsel %vm243, %v411, 0.0
      %413 = vadd.xlane.f32.xlu0 %v412
      %v414 = vpop.xlane.xlu0 %413
      %v415 = vrcp.pop %v414
      %v416 = vmul.f32 %v411, %v415
      %v417 = vpack.c.bf16 %v416, %v416
      %v419 = vunpack.c.l.b16 %v241
      %v420 = vpack.c.b16 %v419, %v419
      %421 = vrot.lane.b32.xlu0 %v420, 120
      %v422 = vpop.permute.xlu0 %421
      %v424 = vsel %vm243, %v417, 0
      %v427 = vsel %vm305, %v422, 0
      %429 = vmatprep.subr.bf16.mxu0 0
      %430 = vmatpush1.bf16.msra.mxu0 %v427
      %431 = vmatprep.subr.bf16.mxu0 0
      %432 = vmatpush1.bf16.msra.mxu0 0
      %433 = vmatprep.subr.bf16.mxu0 0
      %434 = vmatpush1.bf16.msra.mxu0 0
      %435 = vmatprep.subr.bf16.mxu0 0
      %436 = vmatpush1.bf16.msra.mxu0 0
      %437 = vmatprep.subr.bf16.mxu0 0
      %438 = vmatpush1.bf16.msra.mxu0 0
      %439 = vmatprep.subr.bf16.mxu0 0
      %440 = vmatpush1.bf16.msra.mxu0 0
      %441 = vmatprep.subr.bf16.mxu0 0
      %442 = vmatpush1.bf16.msra.mxu0 0
      %443 = vmatprep.subr.bf16.mxu0 0
      %444 = vmatpush1.bf16.msra.mxu0 0
      %445 = vmatprep.subr.bf16.mxu0 0
      %446 = vmatpush1.bf16.msra.mxu0 0
      %447 = vmatprep.subr.bf16.mxu0 0
      %448 = vmatpush1.bf16.msra.mxu0 0
      %449 = vmatprep.subr.bf16.mxu0 0
      %450 = vmatpush1.bf16.msra.mxu0 0
      %451 = vmatprep.subr.bf16.mxu0 0
      %452 = vmatpush1.bf16.msra.mxu0 0
      %453 = vmatprep.subr.bf16.mxu0 0
      %454 = vmatpush1.bf16.msra.mxu0 0
      %455 = vmatprep.subr.bf16.mxu0 0
      %456 = vmatpush1.bf16.msra.mxu0 0
      %457 = vmatprep.subr.bf16.mxu0 0
      %458 = vmatpush1.bf16.msra.mxu0 0
      %459 = vmatprep.subr.bf16.mxu0 0
      %460 = vmatpush1.bf16.msra.mxu0 0
      %461 = vmatprep.mubr.bf16.mxu0 0
      %462 = vmatmul.mubr.bf16.gmra.mrb[0].mxu0 %v424
      %v463 = vpop.f32.mrb[0].mxu0
      %v464 = vadd.f32 0.0, %v463
      %v465 = vpop.f32.mrb[0].mxu0
      %v466 = vpop.f32.mrb[0].mxu0
      %v467 = vpop.f32.mrb[0].mxu0
      %468 = vdwg.mxu0
      %470 = vrot.lane.b32.xlu0 %v464, 8
      %v471 = vpop.permute.xlu0 %470
      %vm473 = vcmask 130112
      %474 = vst.msk [vmem:[#allocation2] sm:$0xff] %vm473, %v471
      %475 = vrot.lane.b32.xlu0 %v352, 112
      %v476 = vpop.permute.xlu0 %475
      %477 = vrot.lane.b32.xlu0 %v357, 112
      %v478 = vpop.permute.xlu0 %477
      %v480 = vsel %vm243, %v476, 0
      %v483 = vsel %vm243, %v478, 0
      %485 = vmatprep.subr.bf16.mxu0 0
      %486 = vmatpush1.bf16.xpose.msra.mxu0 %v483
      %487 = vmatprep.subr.bf16.mxu0 0
      %488 = vmatpush1.bf16.xpose.msra.mxu0 0
      %489 = vmatprep.subr.bf16.mxu0 0
      %490 = vmatpush1.bf16.xpose.msra.mxu0 0
      %491 = vmatprep.subr.bf16.mxu0 0
      %492 = vmatpush1.bf16.xpose.msra.mxu0 0
      %493 = vmatprep.subr.bf16.mxu0 0
      %494 = vmatpush1.bf16.xpose.msra.mxu0 0
      %495 = vmatprep.subr.bf16.mxu0 0
      %496 = vmatpush1.bf16.xpose.msra.mxu0 0
      %497 = vmatprep.subr.bf16.mxu0 0
      %498 = vmatpush1.bf16.xpose.msra.mxu0 0
      %499 = vmatprep.subr.bf16.mxu0 0
      %500 = vmatpush1.bf16.xpose.msra.mxu0 0
      %501 = vmatprep.subr.bf16.mxu0 0
      %502 = vmatpush1.bf16.xpose.msra.mxu0 0
      %503 = vmatprep.subr.bf16.mxu0 0
      %504 = vmatpush1.bf16.xpose.msra.mxu0 0
      %505 = vmatprep.subr.bf16.mxu0 0
      %506 = vmatpush1.bf16.xpose.msra.mxu0 0
      %507 = vmatprep.subr.bf16.mxu0 0
      %508 = vmatpush1.bf16.xpose.msra.mxu0 0
      %509 = vmatprep.subr.bf16.mxu0 0
      %510 = vmatpush1.bf16.xpose.msra.mxu0 0
      %511 = vmatprep.subr.bf16.mxu0 0
      %512 = vmatpush1.bf16.xpose.msra.mxu0 0
      %513 = vmatprep.subr.bf16.mxu0 0
      %514 = vmatpush1.bf16.xpose.msra.mxu0 0
      %515 = vmatprep.subr.bf16.mxu0 0
      %516 = vmatpush1.bf16.xpose.msra.mxu0 0
      %517 = vmatprep.mubr.bf16.mxu0 0
      %518 = vmatmul.mubr.bf16.gmra.mrb[0].mxu0 %v480
      %v519 = vpop.f32.mrb[0].mxu0
      %v520 = vadd.f32 0.0, %v519
      %v521 = vpop.f32.mrb[0].mxu0
      %v522 = vpop.f32.mrb[0].mxu0
      %v523 = vpop.f32.mrb[0].mxu0
      %524 = vdwg.mxu0
      %v525 = vsel %vm243, %v520, -inf
      %526 = vmax.xlane.f32.xlu0 %v525
      %v527 = vpop.xlane.xlu0 %526
      %v528 = vsub.f32 %v520, %v527
      %v529 = vmul.f32 %v528, 1.442695
      %v530 = vpow.pop %v529
      %v531 = vsel %vm243, %v530, 0.0
      %532 = vadd.xlane.f32.xlu0 %v531
      %v533 = vpop.xlane.xlu0 %532
      %v534 = vrcp.pop %v533
      %v535 = vmul.f32 %v530, %v534
      %v536 = vpack.c.bf16 %v535, %v535
      %537 = vrot.lane.b32.xlu0 %v420, 112
      %v538 = vpop.permute.xlu0 %537
      %v540 = vsel %vm243, %v536, 0
      %v543 = vsel %vm305, %v538, 0
      %545 = vmatprep.subr.bf16.mxu0 0
      %546 = vmatpush1.bf16.msra.mxu0 %v543
      %547 = vmatprep.subr.bf16.mxu0 0
      %548 = vmatpush1.bf16.msra.mxu0 0
      %549 = vmatprep.subr.bf16.mxu0 0
      %550 = vmatpush1.bf16.msra.mxu0 0
      %551 = vmatprep.subr.bf16.mxu0 0
      %552 = vmatpush1.bf16.msra.mxu0 0
      %553 = vmatprep.subr.bf16.mxu0 0
      %554 = vmatpush1.bf16.msra.mxu0 0
      %555 = vmatprep.subr.bf16.mxu0 0
      %556 = vmatpush1.bf16.msra.mxu0 0
      %557 = vmatprep.subr.bf16.mxu0 0
      %558 = vmatpush1.bf16.msra.mxu0 0
      %559 = vmatprep.subr.bf16.mxu0 0
      %560 = vmatpush1.bf16.msra.mxu0 0
      %561 = vmatprep.subr.bf16.mxu0 0
      %562 = vmatpush1.bf16.msra.mxu0 0
      %563 = vmatprep.subr.bf16.mxu0 0
      %564 = vmatpush1.bf16.msra.mxu0 0
      %565 = vmatprep.subr.bf16.mxu0 0
      %566 = vmatpush1.bf16.msra.mxu0 0
      %567 = vmatprep.subr.bf16.mxu0 0
      %568 = vmatpush1.bf16.msra.mxu0 0
      %569 = vmatprep.subr.bf16.mxu0 0
      %570 = vmatpush1.bf16.msra.mxu0 0
      %571 = vmatprep.subr.bf16.mxu0 0
      %572 = vmatpush1.bf16.msra.mxu0 0
      %573 = vmatprep.subr.bf16.mxu0 0
      %574 = vmatpush1.bf16.msra.mxu0 0
      %575 = vmatprep.subr.bf16.mxu0 0
      %576 = vmatpush1.bf16.msra.mxu0 0
      %577 = vmatprep.mubr.bf16.mxu0 0
      %578 = vmatmul.mubr.bf16.gmra.mrb[0].mxu0 %v540
      %v579 = vpop.f32.mrb[0].mxu0
      %v580 = vadd.f32 0.0, %v579
      %v581 = vpop.f32.mrb[0].mxu0
      %v582 = vpop.f32.mrb[0].mxu0
      %v583 = vpop.f32.mrb[0].mxu0
      %584 = vdwg.mxu0
      %586 = vrot.lane.b32.xlu0 %v580, 16
      %v587 = vpop.permute.xlu0 %586
      %vm589 = vcmask 195712
      %590 = vst.msk [vmem:[#allocation2] sm:$0xff] %vm589, %v587
      %591 = vrot.lane.b32.xlu0 %v352, 104
      %v592 = vpop.permute.xlu0 %591
      %593 = vrot.lane.b32.xlu0 %v357, 104
      %v594 = vpop.permute.xlu0 %593
      %v596 = vsel %vm243, %v592, 0
      %v599 = vsel %vm243, %v594, 0
      %601 = vmatprep.subr.bf16.mxu0 0
      %602 = vmatpush1.bf16.xpose.msra.mxu0 %v599
      %603 = vmatprep.subr.bf16.mxu0 0
      %604 = vmatpush1.bf16.xpose.msra.mxu0 0
      %605 = vmatprep.subr.bf16.mxu0 0
      %606 = vmatpush1.bf16.xpose.msra.mxu0 0
      %607 = vmatprep.subr.bf16.mxu0 0
      %608 = vmatpush1.bf16.xpose.msra.mxu0 0
      %609 = vmatprep.subr.bf16.mxu0 0
      %610 = vmatpush1.bf16.xpose.msra.mxu0 0
      %611 = vmatprep.subr.bf16.mxu0 0
      %612 = vmatpush1.bf16.xpose.msra.mxu0 0
      %613 = vmatprep.subr.bf16.mxu0 0
      %614 = vmatpush1.bf16.xpose.msra.mxu0 0
      %615 = vmatprep.subr.bf16.mxu0 0
      %616 = vmatpush1.bf16.xpose.msra.mxu0 0
      %617 = vmatprep.subr.bf16.mxu0 0
      %618 = vmatpush1.bf16.xpose.msra.mxu0 0
      %619 = vmatprep.subr.bf16.mxu0 0
      %620 = vmatpush1.bf16.xpose.msra.mxu0 0
      %621 = vmatprep.subr.bf16.mxu0 0
      %622 = vmatpush1.bf16.xpose.msra.mxu0 0
      %623 = vmatprep.subr.bf16.mxu0 0
      %624 = vmatpush1.bf16.xpose.msra.mxu0 0
      %625 = vmatprep.subr.bf16.mxu0 0
      %626 = vmatpush1.bf16.xpose.msra.mxu0 0
      %627 = vmatprep.subr.bf16.mxu0 0
      %628 = vmatpush1.bf16.xpose.msra.mxu0 0
      %629 = vmatprep.subr.bf16.mxu0 0
      %630 = vmatpush1.bf16.xpose.msra.mxu0 0
      %631 = vmatprep.subr.bf16.mxu0 0
      %632 = vmatpush1.bf16.xpose.msra.mxu0 0
      %633 = vmatprep.mubr.bf16.mxu0 0
      %634 = vmatmul.mubr.bf16.gmra.mrb[0].mxu0 %v596
      %v635 = vpop.f32.mrb[0].mxu0
      %v636 = vadd.f32 0.0, %v635
      %v637 = vpop.f32.mrb[0].mxu0
      %v638 = vpop.f32.mrb[0].mxu0
      %v639 = vpop.f32.mrb[0].mxu0
      %640 = vdwg.mxu0
      %v641 = vsel %vm243, %v636, -inf
      %642 = vmax.xlane.f32.xlu0 %v641
      %v643 = vpop.xlane.xlu0 %642
      %v644 = vsub.f32 %v636, %v643
      %v645 = vmul.f32 %v644, 1.442695
      %v646 = vpow.pop %v645
      %v647 = vsel %vm243, %v646, 0.0
      %648 = vadd.xlane.f32.xlu0 %v647
      %v649 = vpop.xlane.xlu0 %648
      %v650 = vrcp.pop %v649
      %v651 = vmul.f32 %v646, %v650
      %v652 = vpack.c.bf16 %v651, %v651
      %653 = vrot.lane.b32.xlu0 %v420, 104
      %v654 = vpop.permute.xlu0 %653
      %v656 = vsel %vm243, %v652, 0
      %v659 = vsel %vm305, %v654, 0
      %661 = vmatprep.subr.bf16.mxu0 0
      %662 = vmatpush1.bf16.msra.mxu0 %v659
      %663 = vmatprep.subr.bf16.mxu0 0
      %664 = vmatpush1.bf16.msra.mxu0 0
      %665 = vmatprep.subr.bf16.mxu0 0
      %666 = vmatpush1.bf16.msra.mxu0 0
      %667 = vmatprep.subr.bf16.mxu0 0
      %668 = vmatpush1.bf16.msra.mxu0 0
      %669 = vmatprep.subr.bf16.mxu0 0
      %670 = vmatpush1.bf16.msra.mxu0 0
      %671 = vmatprep.subr.bf16.mxu0 0
      %672 = vmatpush1.bf16.msra.mxu0 0
      %673 = vmatprep.subr.bf16.mxu0 0
      %674 = vmatpush1.bf16.msra.mxu0 0
      %675 = vmatprep.subr.bf16.mxu0 0
      %676 = vmatpush1.bf16.msra.mxu0 0
      %677 = vmatprep.subr.bf16.mxu0 0
      %678 = vmatpush1.bf16.msra.mxu0 0
      %679 = vmatprep.subr.bf16.mxu0 0
      %680 = vmatpush1.bf16.msra.mxu0 0
      %681 = vmatprep.subr.bf16.mxu0 0
      %682 = vmatpush1.bf16.msra.mxu0 0
      %683 = vmatprep.subr.bf16.mxu0 0
      %684 = vmatpush1.bf16.msra.mxu0 0
      %685 = vmatprep.subr.bf16.mxu0 0
      %686 = vmatpush1.bf16.msra.mxu0 0
      %687 = vmatprep.subr.bf16.mxu0 0
      %688 = vmatpush1.bf16.msra.mxu0 0
      %689 = vmatprep.subr.bf16.mxu0 0
      %690 = vmatpush1.bf16.msra.mxu0 0
      %691 = vmatprep.subr.bf16.mxu0 0
      %692 = vmatpush1.bf16.msra.mxu0 0
      %693 = vmatprep.mubr.bf16.mxu0 0
      %694 = vmatmul.mubr.bf16.gmra.mrb[0].mxu0 %v656
      %v695 = vpop.f32.mrb[0].mxu0
      %v696 = vadd.f32 0.0, %v695
      %v697 = vpop.f32.mrb[0].mxu0
      %v698 = vpop.f32.mrb[0].mxu0
      %v699 = vpop.f32.mrb[0].mxu0
      %700 = vdwg.mxu0
      %702 = vrot.lane.b32.xlu0 %v696, 24
      %v703 = vpop.permute.xlu0 %702
      %vm705 = vcmask 261312
      %706 = vst.msk [vmem:[#allocation2] sm:$0xff] %vm705, %v703
      %v707 = vld [vmem:[#allocation2] sm:$0xff]
      %v708 = vpack.c.bf16 %v707, %v707
      %vm709 = vcmask 257024
      %710 = vst.msk [vmem:[%s236] sm:$0xf] %vm709, %v708
      %p711 = scmp.lt.s32.totalorder %s18, 1
      %s712 = scalar_select %p711, %s18, 1
      %p713 = scmp.lt.s32.totalorder %s19, 0
      %s714 = scalar_select %p713, %s19, 0
      %s715 = sadd.s32 %s714, %s712
      %s716 = smul.addr %s715, 4
      %s717 = scalar_lea.vmem %s3, %s716
      // Predicated region
      $region33: #{decoder_layer.10} parent=31 // pred_check
        %p718 = pneg %p126
      $region34: #{decoder_layer.10} parent=31 // pred_check_branch
        %720 = sbr.rel (%p718) target = $region36
      $region35: #{decoder_layer.10} parent=31 // pred_region
        _
      $region36: #{decoder_layer.10} parent=31 // pred_fallthru
        _
    $region32: #{decoder_layer.10} parent=5 // pred_fallthru
      _
    %p721 = scmp.le.s32.totalorder 2, %s9
    // Predicated region
    $region37: #{decoder_layer.10} parent=5 // pred_check
      %p722 = pneg %p721
    $region38: #{decoder_layer.10} parent=5 // pred_check_branch
      %724 = sbr.rel (%p722) target = $region40
    $region39: #{decoder_layer.10} parent=5 // pred_region
      %s725 = ssub.s32 %s9, 2
      // Predicated region
      $region41: #{decoder_layer.10} parent=39 // pred_check
        %p726 = pneg %p132
      $region42: #{decoder_layer.10} parent=39 // pred_check_branch
        %728 = sbr.rel (%p726) target = $region44
      $region43: #{decoder_layer.10} parent=39 // pred_region
        %p729 = scmp.lt.s32.totalorder %s20, 1
        %s730 = scalar_select %p729, %s20, 1
        %p731 = scmp.lt.s32.totalorder %s21, 0
        %s732 = scalar_select %p731, %s21, 0
        %s733 = sadd.s32 %s732, %s730
        %s734 = smul.addr %s733, 4
        %s735 = scalar_lea.vmem %s3, %s734
      $region44: #{decoder_layer.10} parent=39 // pred_fallthru
        _
    $region40: #{decoder_layer.10} parent=5 // pred_fallthru
      _
  $region6: #{decoder_layer.10} parent=0 // loop_footer
    %s13 = sadd.s32 1, %s9
  $region7: #{decoder_layer.10} parent=0 // loop_footer_branch
    %8 = sbr.rel target = $region3
  $region8: #{decoder_layer.10} parent=0 // loop_exit
    _

// kernel: decoder_layer.16
$region0: #{decoder_layer.16}
  #allocation0 [shape = 'u32[]', space=smem, size = 0x4, offset = 0x4, fixed_abs, tag = 'smem constant byte address 0x4 - core index']
  #allocation1 [shape = 'u32[144,128]{1,0:T(1,128)}', space=vmem, size = 0x12000, scoped, tag = 'internal scratch']
  #allocation2 [shape = 'f32[16,64]{1,0:T(8,128)}', space=vmem, size = 0x2000, scoped, tag = 'scratch operand']
  %s0 = inlined_call_operand.vmem [shape: f32[16,32], index: 0, kind: input, shape index: {}]
  %s1 = inlined_call_operand.vmem [shape: bf16[32,64], index: 1, kind: input, shape index: {}]
  %s2 = inlined_call_operand.vmem [shape: f32[1,64], index: 2, kind: input, shape index: {}]
  %s3 = inlined_call_operand.vmem [shape: bf16[16,64], index: 3, kind: output, shape index: {}]
  %s4 = sld [smem:[#allocation0]]
  $region30: #{decoder_layer.16} parent=0
    _
  %s6 = ssub.s32 1, %s4
  %s7 = scalar_select 0, %s6, %s4
  // Predicated region
  $region2: #{decoder_layer.16} parent=0 // pred_check
    _
  $region3: #{decoder_layer.16} parent=0 // pred_check_branch
    %9 = sbr.rel (0) target = $region5
  $region4: #{decoder_layer.16} parent=0 // pred_region
    _
  $region5: #{decoder_layer.16} parent=0 // pred_fallthru
    _
  // Predicated region
  $region6: #{decoder_layer.16} parent=0 // pred_check
    _
  $region7: #{decoder_layer.16} parent=0 // pred_check_branch
    %11 = sbr.rel (0) target = $region9
  $region8: #{decoder_layer.16} parent=0 // pred_region
    _
  $region9: #{decoder_layer.16} parent=0 // pred_fallthru
    _
  // Predicated region
  $region10: #{decoder_layer.16} parent=0 // pred_check
    _
  $region11: #{decoder_layer.16} parent=0 // pred_check_branch
    %13 = sbr.rel (0) target = $region13
  $region12: #{decoder_layer.16} parent=0 // pred_region
    _
  $region13: #{decoder_layer.16} parent=0 // pred_fallthru
    _
  %p15 = scmp.eq.s32.totalorder 0, 0
  // Predicated region
  $region14: #{decoder_layer.16} parent=0 // pred_check
    %p16 = pneg %p15
  $region15: #{decoder_layer.16} parent=0 // pred_check_branch
    %18 = sbr.rel (%p16) target = $region17
  $region16: #{decoder_layer.16} parent=0 // pred_region
    %vm19 = vcmask 523264
    %20 = vst.msk [vmem:[#allocation2] sm:$0xff] %vm19, 0.0
    %21 = vst.msk [vmem:[#allocation2 + $0x8] sm:$0xff] %vm19, 0.0
  $region17: #{decoder_layer.16} parent=0 // pred_fallthru
    _
  %v22 = vld [vmem:[#allocation2] sm:$0xff]
  %v23 = vld [vmem:[#allocation2 + $0x8] sm:$0xff]
  %v24 = vld [vmem:[%s0] sm:$0xff]
  %v25 = vld [vmem:[%s0 + $0x8] sm:$0xff]
  %v26 = vpack.c.bf16 %v25, %v24
  %v27 = vld [vmem:[%s1] sm:$0xf]
  %v28 = vld [vmem:[%s1 + $0x4] sm:$0xf]
  %v29 = vld [vmem:[%s1 + $0x8] sm:$0xf]
  %v30 = vld [vmem:[%s1 + $0xc] sm:$0xf]
  %v35 = vunpack.c.l.b16 %v27
  %v36 = vunpack.c.l.b16 %v28
  %v37 = vunpack.c.l.b16 %v29
  %v38 = vunpack.c.l.b16 %v30
  %v39 = vpack.c.b16 %v36, %v35
  %v40 = vpack.c.b16 %v38, %v37
  %vm43 = vcmask 261120
  %v45 = vsel %vm43, %v26, 0
  %47 = vmatprep.subr.bf16.mxu0 0
  %48 = vmatpush1.bf16.msra.mxu0 %v39
  %49 = vmatprep.subr.bf16.mxu0 0
  %50 = vmatpush1.bf16.msra.mxu0 %v40
  %51 = vmatprep.subr.bf16.mxu0 0
  %52 = vmatpush1.bf16.msra.mxu0 0
  %53 = vmatprep.subr.bf16.mxu0 0
  %54 = vmatpush1.bf16.msra.mxu0 0
  %55 = vmatprep.subr.bf16.mxu0 0
  %56 = vmatpush1.bf16.msra.mxu0 0
  %57 = vmatprep.subr.bf16.mxu0 0
  %58 = vmatpush1.bf16.msra.mxu0 0
  %59 = vmatprep.subr.bf16.mxu0 0
  %60 = vmatpush1.bf16.msra.mxu0 0
  %61 = vmatprep.subr.bf16.mxu0 0
  %62 = vmatpush1.bf16.msra.mxu0 0
  %63 = vmatprep.subr.bf16.mxu0 0
  %64 = vmatpush1.bf16.msra.mxu0 0
  %65 = vmatprep.subr.bf16.mxu0 0
  %66 = vmatpush1.bf16.msra.mxu0 0
  %67 = vmatprep.subr.bf16.mxu0 0
  %68 = vmatpush1.bf16.msra.mxu0 0
  %69 = vmatprep.subr.bf16.mxu0 0
  %70 = vmatpush1.bf16.msra.mxu0 0
  %71 = vmatprep.subr.bf16.mxu0 0
  %72 = vmatpush1.bf16.msra.mxu0 0
  %73 = vmatprep.subr.bf16.mxu0 0
  %74 = vmatpush1.bf16.msra.mxu0 0
  %75 = vmatprep.subr.bf16.mxu0 0
  %76 = vmatpush1.bf16.msra.mxu0 0
  %77 = vmatprep.subr.bf16.mxu0 0
  %78 = vmatpush1.bf16.msra.mxu0 0
  %79 = vmatprep.mubr.bf16.mxu0 0
  %80 = vmatmul.mubr.bf16.gmra.mrb[0].mxu0 %v45
  %v81 = vpop.f32.mrb[0].mxu0
  %v82 = vadd.f32 0.0, %v81
  %v83 = vpop.f32.mrb[0].mxu0
  %v84 = vpop.f32.mrb[0].mxu0
  %v85 = vadd.f32 0.0, %v84
  %v86 = vpop.f32.mrb[0].mxu0
  %87 = vdwg.mxu0
  %v88 = vadd.f32 %v22, %v82
  %v89 = vadd.f32 %v23, %v85
  %vm90 = vcmask 523264
  %91 = vst.msk [vmem:[#allocation2] sm:$0xff] %vm90, %v88
  %92 = vst.msk [vmem:[#allocation2 + $0x8] sm:$0xff] %vm90, %v89
  // Predicated region
  $region18: #{decoder_layer.16} parent=0 // pred_check
    %p93 = pneg %p15
  $region19: #{decoder_layer.16} parent=0 // pred_check_branch
    %95 = sbr.rel (%p93) target = $region21
  $region20: #{decoder_layer.16} parent=0 // pred_region
    %v96 = vld [vmem:[#allocation2] sm:$0xff]
    %v97 = vld [vmem:[#allocation2 + $0x8] sm:$0xff]
    %v98 = vld [vmem:[%s2] sm:$0x1]
    %v100 = vlaneseq
    %v101 = vshrl.u32 %v100, 7
    %v102 = vsub.s32 0, %v101
    %v103 = vrot.slane %v98, %v102
    %v105 = vadd.f32 %v96, %v103
    %v106 = vadd.f32 %v97, %v103
    %v107 = vmax.f32 %v105, 0.0
    %v108 = vmax.f32 %v106, 0.0
    %v109 = vpack.c.bf16 %v108, %v107
    %v111 = vunpack.c.l.b16 %v109
    %v112 = vunpack.c.h.b16 %v109
    %v113 = vpack.c.b16 %v111, %v111
    %v114 = vpack.c.b16 %v112, %v112
    %vm117 = vcmask 519168
    %118 = vst.msk [vmem:[%s3] sm:$0xf] %vm117, %v113
    %119 = vst.msk [vmem:[%s3 + $0x4] sm:$0xf] %vm117, %v114
  $region21: #{decoder_layer.16} parent=0 // pred_fallthru
    _
  // Predicated region
  $region22: #{decoder_layer.16} parent=0 // pred_check
    _
  $region23: #{decoder_layer.16} parent=0 // pred_check_branch
    %121 = sbr.rel (0) target = $region25
  $region24: #{decoder_layer.16} parent=0 // pred_region
    _
  $region25: #{decoder_layer.16} parent=0 // pred_fallthru
    _
  // Predicated region
  $region26: #{decoder_layer.16} parent=0 // pred_check
    _
  $region27: #{decoder_layer.16} parent=0 // pred_check_branch
    %123 = sbr.rel (0) target = $region29
  $region28: #{decoder_layer.16} parent=0 // pred_region
    _
  $region29: #{decoder_layer.16} parent=0 // pred_fallthru
    _

// kernel: decoder_layer.12
$region0: #{decoder_layer.12}
  #allocation0 [shape = 'u32[]', space=smem, size = 0x4, offset = 0x4, fixed_abs, tag = 'smem constant byte address 0x4 - core index']
  #allocation1 [shape = 'u32[144,128]{1,0:T(1,128)}', space=vmem, size = 0x12000, scoped, tag = 'internal scratch']
  #allocation2 [shape = 'f32[16,32]{1,0:T(8,128)}', space=vmem, size = 0x2000, scoped, tag = 'scratch operand']
  %s0 = inlined_call_operand.vmem [shape: f32[16,32], index: 0, kind: input, shape index: {}]
  %s1 = inlined_call_operand.vmem [shape: bf16[32,32], index: 1, kind: input, shape index: {}]
  %s2 = inlined_call_operand.vmem [shape: f32[1,32], index: 2, kind: input, shape index: {}]
  %s3 = inlined_call_operand.vmem [shape: bf16[16,32], index: 3, kind: output, shape index: {}]
  %s4 = sld [smem:[#allocation0]]
  $region30: #{decoder_layer.12} parent=0
    _
  %s6 = ssub.s32 1, %s4
  %s7 = scalar_select 0, %s6, %s4
  // Predicated region
  $region2: #{decoder_layer.12} parent=0 // pred_check
    _
  $region3: #{decoder_layer.12} parent=0 // pred_check_branch
    %9 = sbr.rel (0) target = $region5
  $region4: #{decoder_layer.12} parent=0 // pred_region
    _
  $region5: #{decoder_layer.12} parent=0 // pred_fallthru
    _
  // Predicated region
  $region6: #{decoder_layer.12} parent=0 // pred_check
    _
  $region7: #{decoder_layer.12} parent=0 // pred_check_branch
    %11 = sbr.rel (0) target = $region9
  $region8: #{decoder_layer.12} parent=0 // pred_region
    _
  $region9: #{decoder_layer.12} parent=0 // pred_fallthru
    _
  // Predicated region
  $region10: #{decoder_layer.12} parent=0 // pred_check
    _
  $region11: #{decoder_layer.12} parent=0 // pred_check_branch
    %13 = sbr.rel (0) target = $region13
  $region12: #{decoder_layer.12} parent=0 // pred_region
    _
  $region13: #{decoder_layer.12} parent=0 // pred_fallthru
    _
  %p15 = scmp.eq.s32.totalorder 0, 0
  // Predicated region
  $region14: #{decoder_layer.12} parent=0 // pred_check
    %p16 = pneg %p15
  $region15: #{decoder_layer.12} parent=0 // pred_check_branch
    %18 = sbr.rel (%p16) target = $region17
  $region16: #{decoder_layer.12} parent=0 // pred_region
    %vm19 = vcmask 261120
    %20 = vst.msk [vmem:[#allocation2] sm:$0xff] %vm19, 0.0
    %21 = vst.msk [vmem:[#allocation2 + $0x8] sm:$0xff] %vm19, 0.0
  $region17: #{decoder_layer.12} parent=0 // pred_fallthru
    _
  %v22 = vld [vmem:[#allocation2] sm:$0xff]
  %v23 = vld [vmem:[#allocation2 + $0x8] sm:$0xff]
  %v24 = vld [vmem:[%s0] sm:$0xff]
  %v25 = vld [vmem:[%s0 + $0x8] sm:$0xff]
  %v26 = vpack.c.bf16 %v25, %v24
  %v27 = vld [vmem:[%s1] sm:$0xf]
  %v28 = vld [vmem:[%s1 + $0x4] sm:$0xf]
  %v29 = vld [vmem:[%s1 + $0x8] sm:$0xf]
  %v30 = vld [vmem:[%s1 + $0xc] sm:$0xf]
  %v35 = vunpack.c.l.b16 %v27
  %v36 = vunpack.c.l.b16 %v28
  %v37 = vunpack.c.l.b16 %v29
  %v38 = vunpack.c.l.b16 %v30
  %v39 = vpack.c.b16 %v36, %v35
  %v40 = vpack.c.b16 %v38, %v37
  %vm43 = vcmask 261120
  %v45 = vsel %vm43, %v26, 0
  %47 = vmatprep.subr.bf16.mxu0 0
  %48 = vmatpush1.bf16.msra.mxu0 %v39
  %49 = vmatprep.subr.bf16.mxu0 0
  %50 = vmatpush1.bf16.msra.mxu0 %v40
  %51 = vmatprep.subr.bf16.mxu0 0
  %52 = vmatpush1.bf16.msra.mxu0 0
  %53 = vmatprep.subr.bf16.mxu0 0
  %54 = vmatpush1.bf16.msra.mxu0 0
  %55 = vmatprep.subr.bf16.mxu0 0
  %56 = vmatpush1.bf16.msra.mxu0 0
  %57 = vmatprep.subr.bf16.mxu0 0
  %58 = vmatpush1.bf16.msra.mxu0 0
  %59 = vmatprep.subr.bf16.mxu0 0
  %60 = vmatpush1.bf16.msra.mxu0 0
  %61 = vmatprep.subr.bf16.mxu0 0
  %62 = vmatpush1.bf16.msra.mxu0 0
  %63 = vmatprep.subr.bf16.mxu0 0
  %64 = vmatpush1.bf16.msra.mxu0 0
  %65 = vmatprep.subr.bf16.mxu0 0
  %66 = vmatpush1.bf16.msra.mxu0 0
  %67 = vmatprep.subr.bf16.mxu0 0
  %68 = vmatpush1.bf16.msra.mxu0 0
  %69 = vmatprep.subr.bf16.mxu0 0
  %70 = vmatpush1.bf16.msra.mxu0 0
  %71 = vmatprep.subr.bf16.mxu0 0
  %72 = vmatpush1.bf16.msra.mxu0 0
  %73 = vmatprep.subr.bf16.mxu0 0
  %74 = vmatpush1.bf16.msra.mxu0 0
  %75 = vmatprep.subr.bf16.mxu0 0
  %76 = vmatpush1.bf16.msra.mxu0 0
  %77 = vmatprep.subr.bf16.mxu0 0
  %78 = vmatpush1.bf16.msra.mxu0 0
  %79 = vmatprep.mubr.bf16.mxu0 0
  %80 = vmatmul.mubr.bf16.gmra.mrb[0].mxu0 %v45
  %v81 = vpop.f32.mrb[0].mxu0
  %v82 = vadd.f32 0.0, %v81
  %v83 = vpop.f32.mrb[0].mxu0
  %v84 = vpop.f32.mrb[0].mxu0
  %v85 = vadd.f32 0.0, %v84
  %v86 = vpop.f32.mrb[0].mxu0
  %87 = vdwg.mxu0
  %v88 = vadd.f32 %v22, %v82
  %v89 = vadd.f32 %v23, %v85
  %90 = vst.msk [vmem:[#allocation2] sm:$0xff] %vm43, %v88
  %91 = vst.msk [vmem:[#allocation2 + $0x8] sm:$0xff] %vm43, %v89
  // Predicated region
  $region18: #{decoder_layer.12} parent=0 // pred_check
    %p92 = pneg %p15
  $region19: #{decoder_layer.12} parent=0 // pred_check_branch
    %94 = sbr.rel (%p92) target = $region21
  $region20: #{decoder_layer.12} parent=0 // pred_region
    %v95 = vld [vmem:[#allocation2] sm:$0xff]
    %v96 = vld [vmem:[#allocation2 + $0x8] sm:$0xff]
    %v97 = vld [vmem:[%s2] sm:$0x1]
    %v99 = vlaneseq
    %v100 = vshrl.u32 %v99, 7
    %v101 = vsub.s32 0, %v100
    %v102 = vrot.slane %v97, %v101
    %v104 = vadd.f32 %v95, %v102
    %v105 = vadd.f32 %v96, %v102
    %v106 = vpack.c.bf16 %v105, %v104
    %v108 = vunpack.c.l.b16 %v106
    %v109 = vunpack.c.h.b16 %v106
    %v110 = vpack.c.b16 %v108, %v108
    %v111 = vpack.c.b16 %v109, %v109
    %vm114 = vcmask 257024
    %115 = vst.msk [vmem:[%s3] sm:$0xf] %vm114, %v110
    %116 = vst.msk [vmem:[%s3 + $0x4] sm:$0xf] %vm114, %v111
  $region21: #{decoder_layer.12} parent=0 // pred_fallthru
    _
  // Predicated region
  $region22: #{decoder_layer.12} parent=0 // pred_check
    _
  $region23: #{decoder_layer.12} parent=0 // pred_check_branch
    %118 = sbr.rel (0) target = $region25
  $region24: #{decoder_layer.12} parent=0 // pred_region
    _
  $region25: #{decoder_layer.12} parent=0 // pred_fallthru
    _
  // Predicated region
  $region26: #{decoder_layer.12} parent=0 // pred_check
    _
  $region27: #{decoder_layer.12} parent=0 // pred_check_branch
    %120 = sbr.rel (0) target = $region29
  $region28: #{decoder_layer.12} parent=0 // pred_region
    _
  $region29: #{decoder_layer.12} parent=0 // pred_fallthru
    _

// kernel: decoder_layer.17
$region0: #{decoder_layer.17}
  #allocation0 [shape = 'u32[]', space=smem, size = 0x4, offset = 0x4, fixed_abs, tag = 'smem constant byte address 0x4 - core index']
  #allocation1 [shape = 'u32[144,128]{1,0:T(1,128)}', space=vmem, size = 0x12000, scoped, tag = 'internal scratch']
  #allocation2 [shape = 'f32[16,32]{1,0:T(8,128)}', space=vmem, size = 0x2000, scoped, tag = 'scratch operand']
  %s0 = inlined_call_operand.vmem [shape: bf16[16,64], index: 0, kind: input, shape index: {}]
  %s1 = inlined_call_operand.vmem [shape: bf16[64,32], index: 1, kind: input, shape index: {}]
  %s2 = inlined_call_operand.vmem [shape: f32[1,32], index: 2, kind: input, shape index: {}]
  %s3 = inlined_call_operand.vmem [shape: f32[16,32], index: 3, kind: input, shape index: {}]
  %s4 = inlined_call_operand.vmem [shape: f32[1,32], index: 4, kind: input, shape index: {}]
  %s5 = inlined_call_operand.vmem [shape: f32[1,32], index: 5, kind: input, shape index: {}]
  %s6 = inlined_call_operand.hbm [shape: f32[16,32], index: 6, kind: output, shape index: {}]
  %s7 = sld [smem:[#allocation0]]
  $region42: #{decoder_layer.17} parent=0
    _
  %s9 = ssub.s32 1, %s7
  %s10 = scalar_select 0, %s9, %s7
  $region1: #{decoder_layer.17} parent=0
    #allocation3 [shape = 'u8[8192]{0}', space=vmem, size = 0x2000, scoped, tag = 'output window, operand 0, single buffered']
    #allocation4 [shape = 's32[1]{0}', space=sflag, size = 0x4, scoped, tag = 'scoped memory for decoder_layer.17']
    %11 = vsyncpa [#allocation4], 0
    // Predicated region
    $region2: #{decoder_layer.17} parent=1 // pred_check
      _
    $region3: #{decoder_layer.17} parent=1 // pred_check_branch
      %13 = sbr.rel (0) target = $region5
    $region4: #{decoder_layer.17} parent=1 // pred_region
      _
    $region5: #{decoder_layer.17} parent=1 // pred_fallthru
      _
    // Predicated region
    $region6: #{decoder_layer.17} parent=1 // pred_check
      _
    $region7: #{decoder_layer.17} parent=1 // pred_check_branch
      %15 = sbr.rel (0) target = $region9
    $region8: #{decoder_layer.17} parent=1 // pred_region
      _
    $region9: #{decoder_layer.17} parent=1 // pred_fallthru
      _
    // Predicated region
    $region10: #{decoder_layer.17} parent=1 // pred_check
      _
    $region11: #{decoder_layer.17} parent=1 // pred_check_branch
      %17 = sbr.rel (0) target = $region13
    $region12: #{decoder_layer.17} parent=1 // pred_region
      _
    $region13: #{decoder_layer.17} parent=1 // pred_fallthru
      _
    // Predicated region
    $region14: #{decoder_layer.17} parent=1 // pred_check
      _
    $region15: #{decoder_layer.17} parent=1 // pred_check_branch
      %19 = sbr.rel (0) target = $region17
    $region16: #{decoder_layer.17} parent=1 // pred_region
      _
    $region17: #{decoder_layer.17} parent=1 // pred_fallthru
      _
    // Predicated region
    $region18: #{decoder_layer.17} parent=1 // pred_check
      _
    $region19: #{decoder_layer.17} parent=1 // pred_check_branch
      %21 = sbr.rel (0) target = $region21
    $region20: #{decoder_layer.17} parent=1 // pred_region
      _
    $region21: #{decoder_layer.17} parent=1 // pred_fallthru
      _
    // Predicated region
    $region22: #{decoder_layer.17} parent=1 // pred_check
      _
    $region23: #{decoder_layer.17} parent=1 // pred_check_branch
      %23 = sbr.rel (0) target = $region25
    $region24: #{decoder_layer.17} parent=1 // pred_region
      _
    $region25: #{decoder_layer.17} parent=1 // pred_fallthru
      _
    %p25 = scmp.eq.s32.totalorder 0, 0
    // Predicated region
    $region26: #{decoder_layer.17} parent=1 // pred_check
      %p26 = pneg %p25
    $region27: #{decoder_layer.17} parent=1 // pred_check_branch
      %28 = sbr.rel (%p26) target = $region29
    $region28: #{decoder_layer.17} parent=1 // pred_region
      %vm29 = vcmask 261120
      %30 = vst.msk [vmem:[#allocation2] sm:$0xff] %vm29, 0.0
      %31 = vst.msk [vmem:[#allocation2 + $0x8] sm:$0xff] %vm29, 0.0
    $region29: #{decoder_layer.17} parent=1 // pred_fallthru
      _
    %v32 = vld [vmem:[#allocation2] sm:$0xff]
    %v33 = vld [vmem:[#allocation2 + $0x8] sm:$0xff]
    %v34 = vld [vmem:[%s0] sm:$0xf]
    %v35 = vld [vmem:[%s0 + $0x4] sm:$0xf]
    %v36 = vld [vmem:[%s1] sm:$0xf]
    %v37 = vld [vmem:[%s1 + $0x4] sm:$0xf]
    %v38 = vld [vmem:[%s1 + $0x8] sm:$0xf]
    %v39 = vld [vmem:[%s1 + $0xc] sm:$0xf]
    %v40 = vld [vmem:[%s1 + $0x10] sm:$0xf]
    %v41 = vld [vmem:[%s1 + $0x14] sm:$0xf]
    %v42 = vld [vmem:[%s1 + $0x18] sm:$0xf]
    %v43 = vld [vmem:[%s1 + $0x1c] sm:$0xf]
    %v46 = vunpack.c.l.b16 %v34
    %v47 = vunpack.c.l.b16 %v35
    %v48 = vpack.c.b16 %v47, %v46
    %v57 = vunpack.c.l.b16 %v36
    %v58 = vunpack.c.l.b16 %v37
    %v59 = vunpack.c.l.b16 %v38
    %v60 = vunpack.c.l.b16 %v39
    %v61 = vunpack.c.l.b16 %v40
    %v62 = vunpack.c.l.b16 %v41
    %v63 = vunpack.c.l.b16 %v42
    %v64 = vunpack.c.l.b16 %v43
    %v65 = vpack.c.b16 %v58, %v57
    %v66 = vpack.c.b16 %v60, %v59
    %v67 = vpack.c.b16 %v62, %v61
    %v68 = vpack.c.b16 %v64, %v63
    %vm73 = vcmask 523264
    %v75 = vsel %vm73, %v48, 0
    %77 = vmatprep.subr.bf16.mxu0 0
    %78 = vmatpush1.bf16.msra.mxu0 %v65
    %79 = vmatprep.subr.bf16.mxu0 0
    %80 = vmatpush1.bf16.msra.mxu0 %v66
    %81 = vmatprep.subr.bf16.mxu0 0
    %82 = vmatpush1.bf16.msra.mxu0 %v67
    %83 = vmatprep.subr.bf16.mxu0 0
    %84 = vmatpush1.bf16.msra.mxu0 %v68
    %85 = vmatprep.subr.bf16.mxu0 0
    %86 = vmatpush1.bf16.msra.mxu0 0
    %87 = vmatprep.subr.bf16.mxu0 0
    %88 = vmatpush1.bf16.msra.mxu0 0
    %89 = vmatprep.subr.bf16.mxu0 0
    %90 = vmatpush1.bf16.msra.mxu0 0
    %91 = vmatprep.subr.bf16.mxu0 0
    %92 = vmatpush1.bf16.msra.mxu0 0
    %93 = vmatprep.subr.bf16.mxu0 0
    %94 = vmatpush1.bf16.msra.mxu0 0
    %95 = vmatprep.subr.bf16.mxu0 0
    %96 = vmatpush1.bf16.msra.mxu0 0
    %97 = vmatprep.subr.bf16.mxu0 0
    %98 = vmatpush1.bf16.msra.mxu0 0
    %99 = vmatprep.subr.bf16.mxu0 0
    %100 = vmatpush1.bf16.msra.mxu0 0
    %101 = vmatprep.subr.bf16.mxu0 0
    %102 = vmatpush1.bf16.msra.mxu0 0
    %103 = vmatprep.subr.bf16.mxu0 0
    %104 = vmatpush1.bf16.msra.mxu0 0
    %105 = vmatprep.subr.bf16.mxu0 0
    %106 = vmatpush1.bf16.msra.mxu0 0
    %107 = vmatprep.subr.bf16.mxu0 0
    %108 = vmatpush1.bf16.msra.mxu0 0
    %109 = vmatprep.mubr.bf16.mxu0 0
    %110 = vmatmul.mubr.bf16.gmra.mrb[0].mxu0 %v75
    %v111 = vpop.f32.mrb[0].mxu0
    %v112 = vadd.f32 0.0, %v111
    %v113 = vpop.f32.mrb[0].mxu0
    %v114 = vpop.f32.mrb[0].mxu0
    %v115 = vadd.f32 0.0, %v114
    %v116 = vpop.f32.mrb[0].mxu0
    %117 = vdwg.mxu0
    %v118 = vadd.f32 %v32, %v112
    %v119 = vadd.f32 %v33, %v115
    %vm120 = vcmask 261120
    %121 = vst.msk [vmem:[#allocation2] sm:$0xff] %vm120, %v118
    %122 = vst.msk [vmem:[#allocation2 + $0x8] sm:$0xff] %vm120, %v119
    // Predicated region
    $region30: #{decoder_layer.17} parent=1 // pred_check
      %p123 = pneg %p25
    $region31: #{decoder_layer.17} parent=1 // pred_check_branch
      %125 = sbr.rel (%p123) target = $region33
    $region32: #{decoder_layer.17} parent=1 // pred_region
      %v126 = vld [vmem:[#allocation2] sm:$0xff]
      %v127 = vld [vmem:[#allocation2 + $0x8] sm:$0xff]
      %v128 = vld [vmem:[%s2] sm:$0x1]
      %v130 = vlaneseq
      %v131 = vshrl.u32 %v130, 7
      %v132 = vsub.s32 0, %v131
      %v133 = vrot.slane %v128, %v132
      %v135 = vadd.f32 %v126, %v133
      %v136 = vadd.f32 %v127, %v133
      %v137 = vld [vmem:[%s3] sm:$0xff]
      %v138 = vld [vmem:[%s3 + $0x8] sm:$0xff]
      %v139 = vadd.f32 %v135, %v137
      %v140 = vadd.f32 %v136, %v138
      %v141 = vsel %vm120, %v139, 0.0
      %142 = vadd.xlane.f32.xlu0 %v141
      %v143 = vpop.xlane.xlu0 %142
      %v144 = vsel %vm120, %v140, 0.0
      %145 = vadd.xlane.f32.xlu0 %v144
      %v146 = vpop.xlane.xlu0 %145
      %v147 = vrcp.pop 32.0
      %v148 = vmul.f32 %v143, %v147
      %v149 = vmul.f32 %v146, %v147
      %v150 = vmul.f32 %v139, %v139
      %v151 = vmul.f32 %v140, %v140
      %v152 = vsel %vm120, %v150, 0.0
      %153 = vadd.xlane.f32.xlu0 %v152
      %v154 = vpop.xlane.xlu0 %153
      %v155 = vsel %vm120, %v151, 0.0
      %156 = vadd.xlane.f32.xlu0 %v155
      %v157 = vpop.xlane.xlu0 %156
      %v158 = vmul.f32 %v154, %v147
      %v159 = vmul.f32 %v157, %v147
      %v160 = vmul.f32 %v148, %v148
      %v161 = vmul.f32 %v149, %v149
      %v162 = vsub.f32 %v158, %v160
      %v163 = vsub.f32 %v159, %v161
      %v164 = vsub.f32 %v139, %v148
      %v165 = vsub.f32 %v140, %v149
      %v166 = vadd.f32 %v162, 1e-05
      %v167 = vadd.f32 %v163, 1e-05
      %v168 = vrsqrt.pop %v166
      %v169 = vrsqrt.pop %v167
      %v170 = vmul.f32 %v164, %v168
      %v171 = vmul.f32 %v165, %v169
      %v172 = vld [vmem:[%s4] sm:$0x1]
      %v174 = vlaneseq
      %v175 = vshrl.u32 %v174, 7
      %v176 = vsub.s32 0, %v175
      %v177 = vrot.slane %v172, %v176
      %v179 = vmul.f32 %v170, %v177
      %v180 = vmul.f32 %v171, %v177
      %v181 = vld [vmem:[%s5] sm:$0x1]
      %v183 = vlaneseq
      %v184 = vshrl.u32 %v183, 7
      %v185 = vsub.s32 0, %v184
      %v186 = vrot.slane %v181, %v185
      %v188 = vadd.f32 %v179, %v186
      %v189 = vadd.f32 %v180, %v186
      %190 = vst.msk [vmem:[#allocation3] sm:$0xff] %vm120, %v188
      %191 = vst.msk [vmem:[#allocation3 + $0x8] sm:$0xff] %vm120, %v189
    $region33: #{decoder_layer.17} parent=1 // pred_fallthru
      _
    // Predicated region
    $region34: #{decoder_layer.17} parent=1 // pred_check
      _
    $region35: #{decoder_layer.17} parent=1 // pred_check_branch
      %193 = sbr.rel (0) target = $region37
    $region36: #{decoder_layer.17} parent=1 // pred_region
      %s195 = ssub.s32 256, 256
      %196 = vsyncadd [#allocation4], %s195
      %s197 = sshll.u32 [#allocation3], 4
      %s198 = int_to_ptr.vmem [resolvable:$true] %s197
      %203 = dma.vmem_to_hbm [thread:$0]  %s198, 256, %s6, [#allocation4], 128, 128, 8
    $region37: #{decoder_layer.17} parent=1 // pred_fallthru
      _
    // Predicated region
    $region38: #{decoder_layer.17} parent=1 // pred_check
      _
    $region39: #{decoder_layer.17} parent=1 // pred_check_branch
      %205 = sbr.rel (0) target = $region41
    $region40: #{decoder_layer.17} parent=1 // pred_region
      %206 = dma.done [#allocation4], 256
    $region41: #{decoder_layer.17} parent=1 // pred_fallthru
      _
    %207 = vsyncpa [#allocation4], 1

// kernel: decoder_layer.14
$region0: #{decoder_layer.14}
  #allocation0 [shape = 'u32[]', space=smem, size = 0x4, offset = 0x4, fixed_abs, tag = 'smem constant byte address 0x4 - core index']
  #allocation1 [shape = 'u32[144,128]{1,0:T(1,128)}', space=vmem, size = 0x12000, scoped, tag = 'internal scratch']
  #allocation2 [shape = 'f32[8,32]{1,0:T(8,128)}', space=vmem, size = 0x1000, scoped, tag = 'scratch operand']
  %s0 = inlined_call_operand.vmem [shape: bf16[1,2,8,32], index: 0, kind: input, shape index: {}]
  %s1 = inlined_call_operand.vmem [shape: bf16[2,2,8,32], index: 1, kind: input, shape index: {}, may-alias: {1,2}]
  %s2 = inlined_call_operand.vmem [shape: bf16[2,2,8,32], index: 2, kind: input, shape index: {}, may-alias: {1,2}]
  %s3 = inlined_call_operand.vmem [shape: bf16[2,8,32], index: 3, kind: output, shape index: {}]
  %s4 = sld [smem:[#allocation0]]
  $region45: #{decoder_layer.14} parent=0
    _
  %s6 = ssub.s32 1, %s4
  %s7 = scalar_select 0, %s6, %s4
  loop: start=0, step=1, limit=4
  $region2: #{decoder_layer.14} parent=0 // loop_pre_header
    _
  $region3: #{decoder_layer.14} parent=0 // loop_header
    %s9 = sphi 0, %s13
    %p10 = scmp.ge.s32.totalorder %s9, 4
    %s16 = sphi 0, %s28
    %s17 = sphi 0, %s24
    %s18 = sphi 0, %s16
    %s19 = sphi 0, %s17
    %s20 = sphi 0, %s18
    %s21 = sphi 0, %s19
    %s33 = sphi 0, %s35
    %s36 = sphi 0, %s33
    %s37 = sphi 0, %s36
    %s53 = sphi 0, %s37
    %s59 = sphi 0, %s61
    %s62 = sphi 0, %s59
    %s63 = sphi 0, %s62
    %s79 = sphi 0, %s63
    %s85 = sphi 0, %s87
    %s88 = sphi 0, %s85
    %s89 = sphi 0, %s88
    %s105 = sphi 0, %s89
    %s113 = sphi 0, %s115
    %s116 = sphi 0, %s113
    %s117 = sphi 0, %s116
    %s133 = sphi 0, %s117
  $region4: #{decoder_layer.14} parent=0 // loop_header_branch
    %12 = sbr.rel (%p10) target = $region8
  $region5: #{decoder_layer.14} parent=0 // loop_body
    %s14 = ssub.s32 %s9, 1
    %s15 = ssub.s32 %s9, 2
    %s22 = sadd.s32 1, %s17
    %p23 = scmp.ge.s32.totalorder %s22, 1
    %s24 = scalar_select %p23, 0, %s22
    %s25 = sadd.s32 1, %s16
    %s26 = scalar_select %p23, %s25, %s16
    %p27 = scmp.ge.s32.totalorder %s26, 2
    %s28 = scalar_select %p27, 0, %s26
    %s29 = ssub.s32 %s16, %s28
    %s30 = ssub.s32 %s17, %s24
    %s31 = sor.u32 %s29, %s30
    %p32 = scmp.eq.s32.totalorder %s31, 0
    %s34 = sadd.s32 %s33, 1
    %s35 = scalar_select %p32, %s33, %s34
    %p38 = pneg %p32
    %p39 = scmp.eq.s32.totalorder %s9, 1
    %p40 = por %p38, %p39
    %p41 = scmp.ne.s32.totalorder %s33, %s36
    %p42 = scmp.eq.s32.totalorder %s9, 0
    %p43 = por %p41, %p42
    %p44 = scmp.ne.s32.totalorder %s33, %s36
    %p45 = scmp.eq.s32.totalorder %s14, 1
    %p46 = por %p44, %p45
    %p47 = scmp.ne.s32.totalorder %s36, %s37
    %p48 = scmp.eq.s32.totalorder %s14, 0
    %p49 = por %p47, %p48
    %p50 = scmp.ne.s32.totalorder %s36, %s37
    %p51 = scmp.eq.s32.totalorder %s15, 1
    %p52 = por %p50, %p51
    %p54 = scmp.ne.s32.totalorder %s37, %s53
    %p55 = scmp.eq.s32.totalorder %s15, 0
    %p56 = por %p54, %p55
    %s57 = ssub.s32 %s16, %s28
    %p58 = scmp.eq.s32.totalorder %s57, 0
    %s60 = sadd.s32 %s59, 1
    %s61 = scalar_select %p58, %s59, %s60
    %p64 = pneg %p58
    %p65 = scmp.eq.s32.totalorder %s9, 1
    %p66 = por %p64, %p65
    %p67 = scmp.ne.s32.totalorder %s59, %s62
    %p68 = scmp.eq.s32.totalorder %s9, 0
    %p69 = por %p67, %p68
    %p70 = scmp.ne.s32.totalorder %s59, %s62
    %p71 = scmp.eq.s32.totalorder %s14, 1
    %p72 = por %p70, %p71
    %p73 = scmp.ne.s32.totalorder %s62, %s63
    %p74 = scmp.eq.s32.totalorder %s14, 0
    %p75 = por %p73, %p74
    %p76 = scmp.ne.s32.totalorder %s62, %s63
    %p77 = scmp.eq.s32.totalorder %s15, 1
    %p78 = por %p76, %p77
    %p80 = scmp.ne.s32.totalorder %s63, %s79
    %p81 = scmp.eq.s32.totalorder %s15, 0
    %p82 = por %p80, %p81
    %s83 = ssub.s32 %s16, %s28
    %p84 = scmp.eq.s32.totalorder %s83, 0
    %s86 = sadd.s32 %s85, 1
    %s87 = scalar_select %p84, %s85, %s86
    %p90 = pneg %p84
    %p91 = scmp.eq.s32.totalorder %s9, 1
    %p92 = por %p90, %p91
    %p93 = scmp.ne.s32.totalorder %s85, %s88
    %p94 = scmp.eq.s32.totalorder %s9, 0
    %p95 = por %p93, %p94
    %p96 = scmp.ne.s32.totalorder %s85, %s88
    %p97 = scmp.eq.s32.totalorder %s14, 1
    %p98 = por %p96, %p97
    %p99 = scmp.ne.s32.totalorder %s88, %s89
    %p100 = scmp.eq.s32.totalorder %s14, 0
    %p101 = por %p99, %p100
    %p102 = scmp.ne.s32.totalorder %s88, %s89
    %p103 = scmp.eq.s32.totalorder %s15, 1
    %p104 = por %p102, %p103
    %p106 = scmp.ne.s32.totalorder %s89, %s105
    %p107 = scmp.eq.s32.totalorder %s15, 0
    %p108 = por %p106, %p107
    %s109 = ssub.s32 %s16, %s28
    %s110 = ssub.s32 %s17, %s24
    %s111 = sor.u32 %s109, %s110
    %p112 = scmp.eq.s32.totalorder %s111, 0
    %s114 = sadd.s32 %s113, 1
    %s115 = scalar_select %p112, %s113, %s114
    %p118 = pneg %p112
    %p119 = scmp.eq.s32.totalorder %s9, 1
    %p120 = por %p118, %p119
    %p121 = scmp.ne.s32.totalorder %s113, %s116
    %p122 = scmp.eq.s32.totalorder %s9, 0
    %p123 = por %p121, %p122
    %p124 = scmp.ne.s32.totalorder %s113, %s116
    %p125 = scmp.eq.s32.totalorder %s14, 1
    %p126 = por %p124, %p125
    %p127 = scmp.ne.s32.totalorder %s116, %s117
    %p128 = scmp.eq.s32.totalorder %s14, 0
    %p129 = por %p127, %p128
    %p130 = scmp.ne.s32.totalorder %s116, %s117
    %p131 = scmp.eq.s32.totalorder %s15, 1
    %p132 = por %p130, %p131
    %p134 = scmp.ne.s32.totalorder %s117, %s133
    %p135 = scmp.eq.s32.totalorder %s15, 0
    %p136 = por %p134, %p135
    %p137 = scmp.le.s32.totalorder 1, %s9
    %p138 = scmp.lt.s32.totalorder %s9, 3
    %p139 = pnand %p137, %p138
    %p140 = pneg %p139
    // Predicated region
    $region9: #{decoder_layer.14} parent=5 // pred_check
      _
    $region10: #{decoder_layer.14} parent=5 // pred_check_branch
      %142 = sbr.rel (%p139) target = $region12
    $region11: #{decoder_layer.14} parent=5 // pred_region
      %s143 = ssub.s32 %s9, 1
    $region12: #{decoder_layer.14} parent=5 // pred_fallthru
      _
    %p144 = scmp.lt.s32.totalorder %s9, 2
    // Predicated region
    $region13: #{decoder_layer.14} parent=5 // pred_check
      %p145 = pneg %p144
    $region14: #{decoder_layer.14} parent=5 // pred_check_branch
      %147 = sbr.rel (%p145) target = $region16
    $region15: #{decoder_layer.14} parent=5 // pred_region
      // Predicated region
      $region17: #{decoder_layer.14} parent=15 // pred_check
        %p148 = pneg %p43
      $region18: #{decoder_layer.14} parent=15 // pred_check_branch
        %150 = sbr.rel (%p148) target = $region20
      $region19: #{decoder_layer.14} parent=15 // pred_region
        %p151 = scmp.lt.s32.totalorder %s16, 1
        %s152 = scalar_select %p151, %s16, 1
        %p153 = scmp.lt.s32.totalorder %s17, 0
        %s154 = scalar_select %p153, %s17, 0
        %s155 = sadd.s32 %s154, %s152
        %s156 = smul.addr %s155, 4
        %s157 = scalar_lea.vmem %s0, %s156
      $region20: #{decoder_layer.14} parent=15 // pred_fallthru
        _
      // Predicated region
      $region21: #{decoder_layer.14} parent=15 // pred_check
        %p158 = pneg %p69
      $region22: #{decoder_layer.14} parent=15 // pred_check_branch
        %160 = sbr.rel (%p158) target = $region24
      $region23: #{decoder_layer.14} parent=15 // pred_region
        %p161 = scmp.lt.s32.totalorder %s16, 1
        %s162 = scalar_select %p161, %s16, 1
        %s163 = smul.addr %s162, 4
        %s164 = scalar_lea.vmem %s1, %s163
      $region24: #{decoder_layer.14} parent=15 // pred_fallthru
        _
      // Predicated region
      $region25: #{decoder_layer.14} parent=15 // pred_check
        %p165 = pneg %p95
      $region26: #{decoder_layer.14} parent=15 // pred_check_branch
        %167 = sbr.rel (%p165) target = $region28
      $region27: #{decoder_layer.14} parent=15 // pred_region
        %p168 = scmp.lt.s32.totalorder %s16, 1
        %s169 = scalar_select %p168, %s16, 1
        %s170 = sadd.s32 %s169, 2
        %s171 = smul.addr %s170, 4
        %s172 = scalar_lea.vmem %s2, %s171
      $region28: #{decoder_layer.14} parent=15 // pred_fallthru
        _
    $region16: #{decoder_layer.14} parent=5 // pred_fallthru
      _
    %p173 = scmp.le.s32.totalorder 1, %s9
    %p174 = scmp.lt.s32.totalorder %s9, 3
    %p175 = pnand %p173, %p174
    %p176 = pneg %p175
    // Predicated region
    $region29: #{decoder_layer.14} parent=5 // pred_check
      _
    $region30: #{decoder_layer.14} parent=5 // pred_check_branch
      %178 = sbr.rel (%p175) target = $region32
    $region31: #{decoder_layer.14} parent=5 // pred_region
      %s179 = ssub.s32 %s9, 1
      %p180 = scmp.lt.s32.totalorder %s18, 1
      %s181 = scalar_select %p180, %s18, 1
      %p182 = scmp.lt.s32.totalorder %s19, 0
      %s183 = scalar_select %p182, %s19, 0
      %s184 = sadd.s32 %s183, %s181
      %s185 = smul.addr %s184, 4
      %s186 = scalar_lea.vmem %s0, %s185
      %p187 = pneg %p49
      %p188 = pneg %p46
      %p189 = scmp.lt.s32.totalorder %s18, 1
      %s190 = scalar_select %p189, %s18, 1
      %s191 = smul.addr %s190, 4
      %s192 = scalar_lea.vmem %s1, %s191
      %p193 = pneg %p75
      %p194 = pneg %p72
      %p195 = scmp.lt.s32.totalorder %s18, 1
      %s196 = scalar_select %p195, %s18, 1
      %s197 = sadd.s32 %s196, 2
      %s198 = smul.addr %s197, 4
      %s199 = scalar_lea.vmem %s2, %s198
      %p200 = pneg %p101
      %p201 = pneg %p98
      %p202 = pneg %p129
      %p203 = pneg %p126
      %p204 = scmp.lt.s32.totalorder %s18, 1
      %s205 = scalar_select %p204, %s18, 1
      %p206 = scmp.lt.s32.totalorder %s19, 0
      %s207 = scalar_select %p206, %s19, 0
      %s208 = sadd.s32 %s207, %s205
      %s209 = smul.addr %s208, 4
      %s210 = scalar_lea.vmem %s3, %s209
      %p211 = scmp.lt.s32.totalorder %s18, 1
      %s212 = scalar_select %p211, %s18, 1
      %p213 = scmp.lt.s32.totalorder %s19, 0
      %s214 = scalar_select %p213, %s19, 0
      %s215 = sadd.s32 %s214, %s212
      %s216 = smul.addr %s215, 4
      %s217 = scalar_lea.vmem %s0, %s216
      %p218 = scmp.lt.s32.totalorder %s18, 1
      %s219 = scalar_select %p218, %s18, 1
      %s220 = smul.addr %s219, 4
      %s221 = scalar_lea.vmem %s1, %s220
      %p222 = scmp.lt.s32.totalorder %s18, 1
      %s223 = scalar_select %p222, %s18, 1
      %s224 = sadd.s32 %s223, 2
      %s225 = smul.addr %s224, 4
      %s226 = scalar_lea.vmem %s2, %s225
      %p227 = scmp.lt.s32.totalorder %s18, 1
      %s228 = scalar_select %p227, %s18, 1
      %p229 = scmp.lt.s32.totalorder %s19, 0
      %s230 = scalar_select %p229, %s19, 0
      %s231 = sadd.s32 %s230, %s228
      %s232 = smul.addr %s231, 4
      %s233 = scalar_lea.vmem %s3, %s232
      %v236 = vld [vmem:[%s217] sm:$0xf]
      %v237 = vld [vmem:[%s221] sm:$0xf]
      %v238 = vld [vmem:[%s226] sm:$0xf]
      %v239 = vmul.bf16 %v236, 1052065461
      %vm240 = vcmask 64512
      %v242 = vsel %vm240, %v239, 0
      %v245 = vsel %vm240, %v237, 0
      %247 = vmatprep.subr.bf16.mxu0 0
      %248 = vmatpush1.bf16.xpose.msra.mxu0 %v245
      %249 = vmatprep.subr.bf16.mxu0 0
      %250 = vmatpush1.bf16.xpose.msra.mxu0 0
      %251 = vmatprep.subr.bf16.mxu0 0
      %252 = vmatpush1.bf16.xpose.msra.mxu0 0
      %253 = vmatprep.subr.bf16.mxu0 0
      %254 = vmatpush1.bf16.xpose.msra.mxu0 0
      %255 = vmatprep.subr.bf16.mxu0 0
      %256 = vmatpush1.bf16.xpose.msra.mxu0 0
      %257 = vmatprep.subr.bf16.mxu0 0
      %258 = vmatpush1.bf16.xpose.msra.mxu0 0
      %259 = vmatprep.subr.bf16.mxu0 0
      %260 = vmatpush1.bf16.xpose.msra.mxu0 0
      %261 = vmatprep.subr.bf16.mxu0 0
      %262 = vmatpush1.bf16.xpose.msra.mxu0 0
      %263 = vmatprep.subr.bf16.mxu0 0
      %264 = vmatpush1.bf16.xpose.msra.mxu0 0
      %265 = vmatprep.subr.bf16.mxu0 0
      %266 = vmatpush1.bf16.xpose.msra.mxu0 0
      %267 = vmatprep.subr.bf16.mxu0 0
      %268 = vmatpush1.bf16.xpose.msra.mxu0 0
      %269 = vmatprep.subr.bf16.mxu0 0
      %270 = vmatpush1.bf16.xpose.msra.mxu0 0
      %271 = vmatprep.subr.bf16.mxu0 0
      %272 = vmatpush1.bf16.xpose.msra.mxu0 0
      %273 = vmatprep.subr.bf16.mxu0 0
      %274 = vmatpush1.bf16.xpose.msra.mxu0 0
      %275 = vmatprep.subr.bf16.mxu0 0
      %276 = vmatpush1.bf16.xpose.msra.mxu0 0
      %277 = vmatprep.subr.bf16.mxu0 0
      %278 = vmatpush1.bf16.xpose.msra.mxu0 0
      %279 = vmatprep.mubr.bf16.mxu0 0
      %280 = vmatmul.mubr.bf16.gmra.mrb[0].mxu0 %v242
      %v281 = vpop.f32.mrb[0].mxu0
      %v282 = vadd.f32 0.0, %v281
      %v283 = vpop.f32.mrb[0].mxu0
      %v284 = vpop.f32.mrb[0].mxu0
      %v285 = vpop.f32.mrb[0].mxu0
      %286 = vdwg.mxu0
      %v287 = vsel %vm240, %v282, -inf
      %288 = vmax.xlane.f32.xlu0 %v287
      %v289 = vpop.xlane.xlu0 %288
      %v290 = vsub.f32 %v282, %v289
      %v291 = vmul.f32 %v290, 1.442695
      %v292 = vpow.pop %v291
      %v293 = vsel %vm240, %v292, 0.0
      %294 = vadd.xlane.f32.xlu0 %v293
      %v295 = vpop.xlane.xlu0 %294
      %v296 = vrcp.pop %v295
      %v297 = vmul.f32 %v292, %v296
      %v298 = vpack.c.bf16 %v297, %v297
      %v300 = vsel %vm240, %v298, 0
      %vm302 = vcmask 1043456
      %v304 = vsel %vm302, %v238, 0
      %306 = vmatprep.subr.bf16.mxu0 0
      %307 = vmatpush1.bf16.msra.mxu0 %v304
      %308 = vmatprep.subr.bf16.mxu0 0
      %309 = vmatpush1.bf16.msra.mxu0 0
      %310 = vmatprep.subr.bf16.mxu0 0
      %311 = vmatpush1.bf16.msra.mxu0 0
      %312 = vmatprep.subr.bf16.mxu0 0
      %313 = vmatpush1.bf16.msra.mxu0 0
      %314 = vmatprep.subr.bf16.mxu0 0
      %315 = vmatpush1.bf16.msra.mxu0 0
      %316 = vmatprep.subr.bf16.mxu0 0
      %317 = vmatpush1.bf16.msra.mxu0 0
      %318 = vmatprep.subr.bf16.mxu0 0
      %319 = vmatpush1.bf16.msra.mxu0 0
      %320 = vmatprep.subr.bf16.mxu0 0
      %321 = vmatpush1.bf16.msra.mxu0 0
      %322 = vmatprep.subr.bf16.mxu0 0
      %323 = vmatpush1.bf16.msra.mxu0 0
      %324 = vmatprep.subr.bf16.mxu0 0
      %325 = vmatpush1.bf16.msra.mxu0 0
      %326 = vmatprep.subr.bf16.mxu0 0
      %327 = vmatpush1.bf16.msra.mxu0 0
      %328 = vmatprep.subr.bf16.mxu0 0
      %329 = vmatpush1.bf16.msra.mxu0 0
      %330 = vmatprep.subr.bf16.mxu0 0
      %331 = vmatpush1.bf16.msra.mxu0 0
      %332 = vmatprep.subr.bf16.mxu0 0
      %333 = vmatpush1.bf16.msra.mxu0 0
      %334 = vmatprep.subr.bf16.mxu0 0
      %335 = vmatpush1.bf16.msra.mxu0 0
      %336 = vmatprep.subr.bf16.mxu0 0
      %337 = vmatpush1.bf16.msra.mxu0 0
      %338 = vmatprep.mubr.bf16.mxu0 0
      %339 = vmatmul.mubr.bf16.gmra.mrb[0].mxu0 %v300
      %v340 = vpop.f32.mrb[0].mxu0
      %v341 = vadd.f32 0.0, %v340
      %v342 = vpop.f32.mrb[0].mxu0
      %v343 = vpop.f32.mrb[0].mxu0
      %v344 = vpop.f32.mrb[0].mxu0
      %345 = vdwg.mxu0
      %346 = vst.msk [vmem:[#allocation2] sm:$0xff] %vm240, %v341
      %v348 = vunpack.c.l.b16 %v239
      %v349 = vpack.c.b16 %v348, %v348
      %350 = vrot.lane.b32.xlu0 %v349, 120
      %v351 = vpop.permute.xlu0 %350
      %v353 = vunpack.c.l.b16 %v237
      %v354 = vpack.c.b16 %v353, %v353
      %355 = vrot.lane.b32.xlu0 %v354, 120
      %v356 = vpop.permute.xlu0 %355
      %v358 = vsel %vm240, %v351, 0
      %v361 = vsel %vm240, %v356, 0
      %363 = vmatprep.subr.bf16.mxu0 0
      %364 = vmatpush1.bf16.xpose.msra.mxu0 %v361
      %365 = vmatprep.subr.bf16.mxu0 0
      %366 = vmatpush1.bf16.xpose.msra.mxu0 0
      %367 = vmatprep.subr.bf16.mxu0 0
      %368 = vmatpush1.bf16.xpose.msra.mxu0 0
      %369 = vmatprep.subr.bf16.mxu0 0
      %370 = vmatpush1.bf16.xpose.msra.mxu0 0
      %371 = vmatprep.subr.bf16.mxu0 0
      %372 = vmatpush1.bf16.xpose.msra.mxu0 0
      %373 = vmatprep.subr.bf16.mxu0 0
      %374 = vmatpush1.bf16.xpose.msra.mxu0 0
      %375 = vmatprep.subr.bf16.mxu0 0
      %376 = vmatpush1.bf16.xpose.msra.mxu0 0
      %377 = vmatprep.subr.bf16.mxu0 0
      %378 = vmatpush1.bf16.xpose.msra.mxu0 0
      %379 = vmatprep.subr.bf16.mxu0 0
      %380 = vmatpush1.bf16.xpose.msra.mxu0 0
      %381 = vmatprep.subr.bf16.mxu0 0
      %382 = vmatpush1.bf16.xpose.msra.mxu0 0
      %383 = vmatprep.subr.bf16.mxu0 0
      %384 = vmatpush1.bf16.xpose.msra.mxu0 0
      %385 = vmatprep.subr.bf16.mxu0 0
      %386 = vmatpush1.bf16.xpose.msra.mxu0 0
      %387 = vmatprep.subr.bf16.mxu0 0
      %388 = vmatpush1.bf16.xpose.msra.mxu0 0
      %389 = vmatprep.subr.bf16.mxu0 0
      %390 = vmatpush1.bf16.xpose.msra.mxu0 0
      %391 = vmatprep.subr.bf16.mxu0 0
      %392 = vmatpush1.bf16.xpose.msra.mxu0 0
      %393 = vmatprep.subr.bf16.mxu0 0
      %394 = vmatpush1.bf16.xpose.msra.mxu0 0
      %395 = vmatprep.mubr.bf16.mxu0 0
      %396 = vmatmul.mubr.bf16.gmra.mrb[0].mxu0 %v358
      %v397 = vpop.f32.mrb[0].mxu0
      %v398 = vadd.f32 0.0, %v397
      %v399 = vpop.f32.mrb[0].mxu0
      %v400 = vpop.f32.mrb[0].mxu0
      %v401 = vpop.f32.mrb[0].mxu0
      %402 = vdwg.mxu0
      %v403 = vsel %vm240, %v398, -inf
      %404 = vmax.xlane.f32.xlu0 %v403
      %v405 = vpop.xlane.xlu0 %404
      %v406 = vsub.f32 %v398, %v405
      %v407 = vmul.f32 %v406, 1.442695
      %v408 = vpow.pop %v407
      %v409 = vsel %vm240, %v408, 0.0
      %410 = vadd.xlane.f32.xlu0 %v409
      %v411 = vpop.xlane.xlu0 %410
      %v412 = vrcp.pop %v411
      %v413 = vmul.f32 %v408, %v412
      %v414 = vpack.c.bf16 %v413, %v413
      %v416 = vunpack.c.l.b16 %v238
      %v417 = vpack.c.b16 %v416, %v416
      %418 = vrot.lane.b32.xlu0 %v417, 120
      %v419 = vpop.permute.xlu0 %418
      %v421 = vsel %vm240, %v414, 0
      %v424 = vsel %vm302, %v419, 0
      %426 = vmatprep.subr.bf16.mxu0 0
      %427 = vmatpush1.bf16.msra.mxu0 %v424
      %428 = vmatprep.subr.bf16.mxu0 0
      %429 = vmatpush1.bf16.msra.mxu0 0
      %430 = vmatprep.subr.bf16.mxu0 0
      %431 = vmatpush1.bf16.msra.mxu0 0
      %432 = vmatprep.subr.bf16.mxu0 0
      %433 = vmatpush1.bf16.msra.mxu0 0
      %434 = vmatprep.subr.bf16.mxu0 0
      %435 = vmatpush1.bf16.msra.mxu0 0
      %436 = vmatprep.subr.bf16.mxu0 0
      %437 = vmatpush1.bf16.msra.mxu0 0
      %438 = vmatprep.subr.bf16.mxu0 0
      %439 = vmatpush1.bf16.msra.mxu0 0
      %440 = vmatprep.subr.bf16.mxu0 0
      %441 = vmatpush1.bf16.msra.mxu0 0
      %442 = vmatprep.subr.bf16.mxu0 0
      %443 = vmatpush1.bf16.msra.mxu0 0
      %444 = vmatprep.subr.bf16.mxu0 0
      %445 = vmatpush1.bf16.msra.mxu0 0
      %446 = vmatprep.subr.bf16.mxu0 0
      %447 = vmatpush1.bf16.msra.mxu0 0
      %448 = vmatprep.subr.bf16.mxu0 0
      %449 = vmatpush1.bf16.msra.mxu0 0
      %450 = vmatprep.subr.bf16.mxu0 0
      %451 = vmatpush1.bf16.msra.mxu0 0
      %452 = vmatprep.subr.bf16.mxu0 0
      %453 = vmatpush1.bf16.msra.mxu0 0
      %454 = vmatprep.subr.bf16.mxu0 0
      %455 = vmatpush1.bf16.msra.mxu0 0
      %456 = vmatprep.subr.bf16.mxu0 0
      %457 = vmatpush1.bf16.msra.mxu0 0
      %458 = vmatprep.mubr.bf16.mxu0 0
      %459 = vmatmul.mubr.bf16.gmra.mrb[0].mxu0 %v421
      %v460 = vpop.f32.mrb[0].mxu0
      %v461 = vadd.f32 0.0, %v460
      %v462 = vpop.f32.mrb[0].mxu0
      %v463 = vpop.f32.mrb[0].mxu0
      %v464 = vpop.f32.mrb[0].mxu0
      %465 = vdwg.mxu0
      %467 = vrot.lane.b32.xlu0 %v461, 8
      %v468 = vpop.permute.xlu0 %467
      %vm470 = vcmask 130112
      %471 = vst.msk [vmem:[#allocation2] sm:$0xff] %vm470, %v468
      %472 = vrot.lane.b32.xlu0 %v349, 112
      %v473 = vpop.permute.xlu0 %472
      %474 = vrot.lane.b32.xlu0 %v354, 112
      %v475 = vpop.permute.xlu0 %474
      %v477 = vsel %vm240, %v473, 0
      %v480 = vsel %vm240, %v475, 0
      %482 = vmatprep.subr.bf16.mxu0 0
      %483 = vmatpush1.bf16.xpose.msra.mxu0 %v480
      %484 = vmatprep.subr.bf16.mxu0 0
      %485 = vmatpush1.bf16.xpose.msra.mxu0 0
      %486 = vmatprep.subr.bf16.mxu0 0
      %487 = vmatpush1.bf16.xpose.msra.mxu0 0
      %488 = vmatprep.subr.bf16.mxu0 0
      %489 = vmatpush1.bf16.xpose.msra.mxu0 0
      %490 = vmatprep.subr.bf16.mxu0 0
      %491 = vmatpush1.bf16.xpose.msra.mxu0 0
      %492 = vmatprep.subr.bf16.mxu0 0
      %493 = vmatpush1.bf16.xpose.msra.mxu0 0
      %494 = vmatprep.subr.bf16.mxu0 0
      %495 = vmatpush1.bf16.xpose.msra.mxu0 0
      %496 = vmatprep.subr.bf16.mxu0 0
      %497 = vmatpush1.bf16.xpose.msra.mxu0 0
      %498 = vmatprep.subr.bf16.mxu0 0
      %499 = vmatpush1.bf16.xpose.msra.mxu0 0
      %500 = vmatprep.subr.bf16.mxu0 0
      %501 = vmatpush1.bf16.xpose.msra.mxu0 0
      %502 = vmatprep.subr.bf16.mxu0 0
      %503 = vmatpush1.bf16.xpose.msra.mxu0 0
      %504 = vmatprep.subr.bf16.mxu0 0
      %505 = vmatpush1.bf16.xpose.msra.mxu0 0
      %506 = vmatprep.subr.bf16.mxu0 0
      %507 = vmatpush1.bf16.xpose.msra.mxu0 0
      %508 = vmatprep.subr.bf16.mxu0 0
      %509 = vmatpush1.bf16.xpose.msra.mxu0 0
      %510 = vmatprep.subr.bf16.mxu0 0
      %511 = vmatpush1.bf16.xpose.msra.mxu0 0
      %512 = vmatprep.subr.bf16.mxu0 0
      %513 = vmatpush1.bf16.xpose.msra.mxu0 0
      %514 = vmatprep.mubr.bf16.mxu0 0
      %515 = vmatmul.mubr.bf16.gmra.mrb[0].mxu0 %v477
      %v516 = vpop.f32.mrb[0].mxu0
      %v517 = vadd.f32 0.0, %v516
      %v518 = vpop.f32.mrb[0].mxu0
      %v519 = vpop.f32.mrb[0].mxu0
      %v520 = vpop.f32.mrb[0].mxu0
      %521 = vdwg.mxu0
      %v522 = vsel %vm240, %v517, -inf
      %523 = vmax.xlane.f32.xlu0 %v522
      %v524 = vpop.xlane.xlu0 %523
      %v525 = vsub.f32 %v517, %v524
      %v526 = vmul.f32 %v525, 1.442695
      %v527 = vpow.pop %v526
      %v528 = vsel %vm240, %v527, 0.0
      %529 = vadd.xlane.f32.xlu0 %v528
      %v530 = vpop.xlane.xlu0 %529
      %v531 = vrcp.pop %v530
      %v532 = vmul.f32 %v527, %v531
      %v533 = vpack.c.bf16 %v532, %v532
      %534 = vrot.lane.b32.xlu0 %v417, 112
      %v535 = vpop.permute.xlu0 %534
      %v537 = vsel %vm240, %v533, 0
      %v540 = vsel %vm302, %v535, 0
      %542 = vmatprep.subr.bf16.mxu0 0
      %543 = vmatpush1.bf16.msra.mxu0 %v540
      %544 = vmatprep.subr.bf16.mxu0 0
      %545 = vmatpush1.bf16.msra.mxu0 0
      %546 = vmatprep.subr.bf16.mxu0 0
      %547 = vmatpush1.bf16.msra.mxu0 0
      %548 = vmatprep.subr.bf16.mxu0 0
      %549 = vmatpush1.bf16.msra.mxu0 0
      %550 = vmatprep.subr.bf16.mxu0 0
      %551 = vmatpush1.bf16.msra.mxu0 0
      %552 = vmatprep.subr.bf16.mxu0 0
      %553 = vmatpush1.bf16.msra.mxu0 0
      %554 = vmatprep.subr.bf16.mxu0 0
      %555 = vmatpush1.bf16.msra.mxu0 0
      %556 = vmatprep.subr.bf16.mxu0 0
      %557 = vmatpush1.bf16.msra.mxu0 0
      %558 = vmatprep.subr.bf16.mxu0 0
      %559 = vmatpush1.bf16.msra.mxu0 0
      %560 = vmatprep.subr.bf16.mxu0 0
      %561 = vmatpush1.bf16.msra.mxu0 0
      %562 = vmatprep.subr.bf16.mxu0 0
      %563 = vmatpush1.bf16.msra.mxu0 0
      %564 = vmatprep.subr.bf16.mxu0 0
      %565 = vmatpush1.bf16.msra.mxu0 0
      %566 = vmatprep.subr.bf16.mxu0 0
      %567 = vmatpush1.bf16.msra.mxu0 0
      %568 = vmatprep.subr.bf16.mxu0 0
      %569 = vmatpush1.bf16.msra.mxu0 0
      %570 = vmatprep.subr.bf16.mxu0 0
      %571 = vmatpush1.bf16.msra.mxu0 0
      %572 = vmatprep.subr.bf16.mxu0 0
      %573 = vmatpush1.bf16.msra.mxu0 0
      %574 = vmatprep.mubr.bf16.mxu0 0
      %575 = vmatmul.mubr.bf16.gmra.mrb[0].mxu0 %v537
      %v576 = vpop.f32.mrb[0].mxu0
      %v577 = vadd.f32 0.0, %v576
      %v578 = vpop.f32.mrb[0].mxu0
      %v579 = vpop.f32.mrb[0].mxu0
      %v580 = vpop.f32.mrb[0].mxu0
      %581 = vdwg.mxu0
      %583 = vrot.lane.b32.xlu0 %v577, 16
      %v584 = vpop.permute.xlu0 %583
      %vm586 = vcmask 195712
      %587 = vst.msk [vmem:[#allocation2] sm:$0xff] %vm586, %v584
      %588 = vrot.lane.b32.xlu0 %v349, 104
      %v589 = vpop.permute.xlu0 %588
      %590 = vrot.lane.b32.xlu0 %v354, 104
      %v591 = vpop.permute.xlu0 %590
      %v593 = vsel %vm240, %v589, 0
      %v596 = vsel %vm240, %v591, 0
      %598 = vmatprep.subr.bf16.mxu0 0
      %599 = vmatpush1.bf16.xpose.msra.mxu0 %v596
      %600 = vmatprep.subr.bf16.mxu0 0
      %601 = vmatpush1.bf16.xpose.msra.mxu0 0
      %602 = vmatprep.subr.bf16.mxu0 0
      %603 = vmatpush1.bf16.xpose.msra.mxu0 0
      %604 = vmatprep.subr.bf16.mxu0 0
      %605 = vmatpush1.bf16.xpose.msra.mxu0 0
      %606 = vmatprep.subr.bf16.mxu0 0
      %607 = vmatpush1.bf16.xpose.msra.mxu0 0
      %608 = vmatprep.subr.bf16.mxu0 0
      %609 = vmatpush1.bf16.xpose.msra.mxu0 0
      %610 = vmatprep.subr.bf16.mxu0 0
      %611 = vmatpush1.bf16.xpose.msra.mxu0 0
      %612 = vmatprep.subr.bf16.mxu0 0
      %613 = vmatpush1.bf16.xpose.msra.mxu0 0
      %614 = vmatprep.subr.bf16.mxu0 0
      %615 = vmatpush1.bf16.xpose.msra.mxu0 0
      %616 = vmatprep.subr.bf16.mxu0 0
      %617 = vmatpush1.bf16.xpose.msra.mxu0 0
      %618 = vmatprep.subr.bf16.mxu0 0
      %619 = vmatpush1.bf16.xpose.msra.mxu0 0
      %620 = vmatprep.subr.bf16.mxu0 0
      %621 = vmatpush1.bf16.xpose.msra.mxu0 0
      %622 = vmatprep.subr.bf16.mxu0 0
      %623 = vmatpush1.bf16.xpose.msra.mxu0 0
      %624 = vmatprep.subr.bf16.mxu0 0
      %625 = vmatpush1.bf16.xpose.msra.mxu0 0
      %626 = vmatprep.subr.bf16.mxu0 0
      %627 = vmatpush1.bf16.xpose.msra.mxu0 0
      %628 = vmatprep.subr.bf16.mxu0 0
      %629 = vmatpush1.bf16.xpose.msra.mxu0 0
      %630 = vmatprep.mubr.bf16.mxu0 0
      %631 = vmatmul.mubr.bf16.gmra.mrb[0].mxu0 %v593
      %v632 = vpop.f32.mrb[0].mxu0
      %v633 = vadd.f32 0.0, %v632
      %v634 = vpop.f32.mrb[0].mxu0
      %v635 = vpop.f32.mrb[0].mxu0
      %v636 = vpop.f32.mrb[0].mxu0
      %637 = vdwg.mxu0
      %v638 = vsel %vm240, %v633, -inf
      %639 = vmax.xlane.f32.xlu0 %v638
      %v640 = vpop.xlane.xlu0 %639
      %v641 = vsub.f32 %v633, %v640
      %v642 = vmul.f32 %v641, 1.442695
      %v643 = vpow.pop %v642
      %v644 = vsel %vm240, %v643, 0.0
      %645 = vadd.xlane.f32.xlu0 %v644
      %v646 = vpop.xlane.xlu0 %645
      %v647 = vrcp.pop %v646
      %v648 = vmul.f32 %v643, %v647
      %v649 = vpack.c.bf16 %v648, %v648
      %650 = vrot.lane.b32.xlu0 %v417, 104
      %v651 = vpop.permute.xlu0 %650
      %v653 = vsel %vm240, %v649, 0
      %v656 = vsel %vm302, %v651, 0
      %658 = vmatprep.subr.bf16.mxu0 0
      %659 = vmatpush1.bf16.msra.mxu0 %v656
      %660 = vmatprep.subr.bf16.mxu0 0
      %661 = vmatpush1.bf16.msra.mxu0 0
      %662 = vmatprep.subr.bf16.mxu0 0
      %663 = vmatpush1.bf16.msra.mxu0 0
      %664 = vmatprep.subr.bf16.mxu0 0
      %665 = vmatpush1.bf16.msra.mxu0 0
      %666 = vmatprep.subr.bf16.mxu0 0
      %667 = vmatpush1.bf16.msra.mxu0 0
      %668 = vmatprep.subr.bf16.mxu0 0
      %669 = vmatpush1.bf16.msra.mxu0 0
      %670 = vmatprep.subr.bf16.mxu0 0
      %671 = vmatpush1.bf16.msra.mxu0 0
      %672 = vmatprep.subr.bf16.mxu0 0
      %673 = vmatpush1.bf16.msra.mxu0 0
      %674 = vmatprep.subr.bf16.mxu0 0
      %675 = vmatpush1.bf16.msra.mxu0 0
      %676 = vmatprep.subr.bf16.mxu0 0
      %677 = vmatpush1.bf16.msra.mxu0 0
      %678 = vmatprep.subr.bf16.mxu0 0
      %679 = vmatpush1.bf16.msra.mxu0 0
      %680 = vmatprep.subr.bf16.mxu0 0
      %681 = vmatpush1.bf16.msra.mxu0 0
      %682 = vmatprep.subr.bf16.mxu0 0
      %683 = vmatpush1.bf16.msra.mxu0 0
      %684 = vmatprep.subr.bf16.mxu0 0
      %685 = vmatpush1.bf16.msra.mxu0 0
      %686 = vmatprep.subr.bf16.mxu0 0
      %687 = vmatpush1.bf16.msra.mxu0 0
      %688 = vmatprep.subr.bf16.mxu0 0
      %689 = vmatpush1.bf16.msra.mxu0 0
      %690 = vmatprep.mubr.bf16.mxu0 0
      %691 = vmatmul.mubr.bf16.gmra.mrb[0].mxu0 %v653
      %v692 = vpop.f32.mrb[0].mxu0
      %v693 = vadd.f32 0.0, %v692
      %v694 = vpop.f32.mrb[0].mxu0
      %v695 = vpop.f32.mrb[0].mxu0
      %v696 = vpop.f32.mrb[0].mxu0
      %697 = vdwg.mxu0
      %699 = vrot.lane.b32.xlu0 %v693, 24
      %v700 = vpop.permute.xlu0 %699
      %vm702 = vcmask 261312
      %703 = vst.msk [vmem:[#allocation2] sm:$0xff] %vm702, %v700
      %v704 = vld [vmem:[#allocation2] sm:$0xff]
      %v705 = vpack.c.bf16 %v704, %v704
      %vm706 = vcmask 257024
      %707 = vst.msk [vmem:[%s233] sm:$0xf] %vm706, %v705
      %p708 = scmp.lt.s32.totalorder %s18, 1
      %s709 = scalar_select %p708, %s18, 1
      %p710 = scmp.lt.s32.totalorder %s19, 0
      %s711 = scalar_select %p710, %s19, 0
      %s712 = sadd.s32 %s711, %s709
      %s713 = smul.addr %s712, 4
      %s714 = scalar_lea.vmem %s3, %s713
      // Predicated region
      $region33: #{decoder_layer.14} parent=31 // pred_check
        %p715 = pneg %p126
      $region34: #{decoder_layer.14} parent=31 // pred_check_branch
        %717 = sbr.rel (%p715) target = $region36
      $region35: #{decoder_layer.14} parent=31 // pred_region
        _
      $region36: #{decoder_layer.14} parent=31 // pred_fallthru
        _
    $region32: #{decoder_layer.14} parent=5 // pred_fallthru
      _
    %p718 = scmp.le.s32.totalorder 2, %s9
    // Predicated region
    $region37: #{decoder_layer.14} parent=5 // pred_check
      %p719 = pneg %p718
    $region38: #{decoder_layer.14} parent=5 // pred_check_branch
      %721 = sbr.rel (%p719) target = $region40
    $region39: #{decoder_layer.14} parent=5 // pred_region
      %s722 = ssub.s32 %s9, 2
      // Predicated region
      $region41: #{decoder_layer.14} parent=39 // pred_check
        %p723 = pneg %p132
      $region42: #{decoder_layer.14} parent=39 // pred_check_branch
        %725 = sbr.rel (%p723) target = $region44
      $region43: #{decoder_layer.14} parent=39 // pred_region
        %p726 = scmp.lt.s32.totalorder %s20, 1
        %s727 = scalar_select %p726, %s20, 1
        %p728 = scmp.lt.s32.totalorder %s21, 0
        %s729 = scalar_select %p728, %s21, 0
        %s730 = sadd.s32 %s729, %s727
        %s731 = smul.addr %s730, 4
        %s732 = scalar_lea.vmem %s3, %s731
      $region44: #{decoder_layer.14} parent=39 // pred_fallthru
        _
    $region40: #{decoder_layer.14} parent=5 // pred_fallthru
      _
  $region6: #{decoder_layer.14} parent=0 // loop_footer
    %s13 = sadd.s32 1, %s9
  $region7: #{decoder_layer.14} parent=0 // loop_footer_branch
    %8 = sbr.rel target = $region3
  $region8: #{decoder_layer.14} parent=0 // loop_exit
    _

</llo_original>
